<compile_context>
chip_gen: v5e
topology: v5e:2x2
jax: 0.10.0
libtpu: 0.0.40
codegen_flags: <defaults>
</compile_context>

<pallas_src>
import jax
import jax.numpy as jnp
from jax import lax
from jax.experimental import pallas as pl
from jax.experimental.pallas import tpu as pltpu

EPS = 1e-5

# MXU operand dtype: bf16 is the native fast MXU path on v5e/v6e/v7x and
# halves operand traffic.  Accumulation is kept in f32.
MXU_DTYPE = jnp.bfloat16
# Inter-stage activation storage dtype (h1 HBM writeback + readback).
H1_DTYPE = jnp.bfloat16


def _vmem_limit_bytes():
    """Generation-aware scoped-VMEM budget: ~75% of physical, <= 100 MiB."""
    phys = 128 * 1024 * 1024
    try:
        phys = int(getattr(pltpu.get_tpu_info(), "vmem_capacity_bytes", phys))
    except Exception:
        pass  # fall back to the conservative 128 MiB assumption
    return min(100 * 1024 * 1024, (phys * 3) // 4)


# --------------------------------------------------------------------------
# BN folding (training-mode batch stats): BN(x) = x*s + t, so
#   conv(BN(x), W) + b = conv(x, W*s) + (b + sum_taps W*t)
# --------------------------------------------------------------------------
def _fold_bn_into_conv(w, b, gamma, beta, mean, var):
    """Folds BN (with given batch stats) into the following 3x3 conv.

    Returns the folded weight flattened to (9*Ci, Co) in (kh, kw, ci) order —
    matching the in-kernel im2col packing — and the bias as (1, Co), both f32.
    """
    s = gamma * lax.rsqrt(var + EPS)          # (Ci,)
    t = beta - mean * s                       # (Ci,)
    w_f = w * s[None, None, :, None]          # (3,3,Ci,Co)
    b_f = b + jnp.einsum("hwio,i->o", w, t)   # (Co,)
    ci, co = w.shape[2], w.shape[3]
    return w_f.reshape(9 * ci, co), b_f.reshape(1, co)


# --------------------------------------------------------------------------
# Per-grid-step working-set estimate and batch-tile chooser
# --------------------------------------------------------------------------
def _step_bytes(nb, H, W, Cin, Cout):
    Ho, Wo = H - 2, W - 2
    Ho2, Wo2 = Ho - 2, Wo - 2
    Hp, Wp = Ho2 // 2, Wo2 // 2
    s1 = (2 * nb * H * W * Cin * 4            # x tile (double-buffered, f32)
          + 2 * nb * Ho * Wo * Cout * 2       # h1 tile (double-buffered, bf16)
          + nb * Ho * Wo * 9 * Cin * 6        # im2col patches (f32+bf16 temps)
          + 2 * nb * Ho * Wo * Cout * 4       # f32 accumulator / ReLU temps
          + 2 * (9 * Cin * Cout * 2 + 3 * Cout * 4))
    s2 = (2 * nb * Ho * Wo * Cout * 2         # h1 tile in (bf16)
          + 2 * nb * Hp * Wp * Cout * 4       # pooled output tile out
          + nb * Ho * Wo * Cout * 4           # upcast full h tile
          + nb * Ho2 * Wo2 * 9 * Cout * 6     # im2col patches
          + 2 * nb * Ho2 * Wo2 * Cout * 4     # f32 accumulator / pool temps
          + 2 * (9 * Cout * Cout * 2 + Cout * 4))
    return max(s1, s2)


def _choose_batch_tile(N, H, W, Cin, Cout, limit):
    """Largest Nb dividing N whose per-step working set fits comfortably in
    the scoped-VMEM budget, while keeping >= 2 grid steps when N >= 2 so the
    'parallel' batch axis can be sharded across both v7x TensorCores."""
    budget = (limit * 3) // 5
    nb = 1
    for cand in range(1, N + 1):
        if N % cand:
            continue
        if cand > 1 and N >= 2 and N // cand < 2:
            continue
        if _step_bytes(cand, H, W, Cin, Cout) <= budget:
            nb = cand
    return nb


# --------------------------------------------------------------------------
# Stage 1: (BN1-folded) conv3x3 valid -> ReLU, plus BN2 partial batch stats.
# --------------------------------------------------------------------------
def _conv1_kernel(x_ref, w_ref, b_ref, h_ref, stats_ref):
    Nb, Ho, Wo, Cout = h_ref.shape
    # im2col: gather the 9 taps (f32 windowed loads, proven slicing path),
    # pack them on the lane axis, then cast the packed operand to bf16 once.
    taps = [x_ref[:, kh:kh + Ho, kw:kw + Wo, :]
            for kh in range(3) for kw in range(3)]
    patches = jnp.concatenate(taps, axis=-1).astype(MXU_DTYPE)  # (Nb,Ho,Wo,9Ci)
    # One MXU matmul with K = 9*Cin; f32 accumulation stays in vregs.
    acc = jnp.einsum("nhwk,kf->nhwf", patches, w_ref[...],
                     preferred_element_type=jnp.float32)
    h = jnp.maximum(acc + b_ref[...].reshape(1, 1, 1, Cout), 0.0)
    h_ref[...] = h.astype(h_ref.dtype)                          # single store
    # Packed per-tile partial sums for training-mode BN2 batch statistics
    # (row 0 = sum, row 1 = sum of squares); reduced across the grid in the
    # wrapper so the batch-stat reduction never blocks batch tiling.
    stats_ref[:, 0, :] = jnp.sum(h, axis=(1, 2))
    stats_ref[:, 1, :] = jnp.sum(h * h, axis=(1, 2))


# --------------------------------------------------------------------------
# Stage 2: (BN2-folded) conv3x3 valid -> ReLU -> MaxPool 2x2 stride 2.
# --------------------------------------------------------------------------
def _conv2_pool_kernel(h_ref, w_ref, b_ref, o_ref):
    Nb, Hp, Wp, Cout = o_ref.shape
    Ho2, Wo2 = 2 * Hp, 2 * Wp
    # Load the bf16 tile once and upcast, so the unaligned sublane windows and
    # the lane-axis packing stay on the well-supported f32 path.
    hfull = h_ref[...].astype(jnp.float32)                      # (Nb,Ho,Wo,C)
    taps = [hfull[:, kh:kh + Ho2, kw:kw + Wo2, :]
            for kh in range(3) for kw in range(3)]
    patches = jnp.concatenate(taps, axis=-1).astype(MXU_DTYPE)  # (Nb,Ho2,Wo2,9C)
    acc = jnp.einsum("nhwk,kf->nhwf", patches, w_ref[...],
                     preferred_element_type=jnp.float32)
    y = jnp.maximum(acc + b_ref[...].reshape(1, 1, 1, Cout), 0.0)
    # MaxPool 2x2 / stride 2:
    #  - H (major dim): reshape into contiguous halves + pairwise max.
    y = jnp.max(y.reshape(Nb, Hp, 2, Wo2, Cout), axis=2)        # (Nb,Hp,Wo2,C)
    #  - W (sublane dim): pairwise max of the two column parities (kept as
    #    strided slices; a (Wo2,C)->(Wp,2,C) reshape would force a sublane
    #    relayout).
    y = jnp.maximum(y[:, :, 0::2, :], y[:, :, 1::2, :])         # (Nb,Hp,Wp,C)
    o_ref[...] = y.astype(o_ref.dtype)                          # single store


# --------------------------------------------------------------------------
# Wrappers
# --------------------------------------------------------------------------
def vgg_block_nhwc(x, params):
    """x: (N, H, W, Cin) f32 -> (N, Hp, Wp, Cout) f32 (training-mode BN)."""
    g1, bt1, w1, b1, g2, bt2, w2, b2 = params
    N, H, W, Cin = x.shape
    Cout = w1.shape[-1]
    Ho, Wo = H - 2, W - 2           # after conv1
    Ho2, Wo2 = Ho - 2, Wo - 2       # after conv2
    assert Ho2 % 2 == 0 and Wo2 % 2 == 0, "even pre-pool dims expected"
    Hp, Wp = Ho2 // 2, Wo2 // 2     # after maxpool

    x = x.astype(jnp.float32)
    limit = _vmem_limit_bytes()
    if _step_bytes(1, H, W, Cin, Cout) > limit:
        # TODO(synk): H-row halo tiling (2-row overlapping input windows) so a
        # single large image fits the per-step budget on v7x's 64 MiB VMEM.
        raise ValueError(
            "per-image working set exceeds the scoped-VMEM budget "
            f"({limit / 2**20:.0f} MiB); H-row halo tiling is required")
    nb = _choose_batch_tile(N, H, W, Cin, Cout, limit)

    compiler_params = pltpu.CompilerParams(
        dimension_semantics=("parallel",),     # megacore-shardable batch axis
        vmem_limit_bytes=limit,
    )

    # ---- BN1 (training-mode batch stats): cheap whole-batch reduction over
    # x, folded into conv1 so the kernel tiles over N without per-tile-stat
    # bugs.  Folding is done in f32; weights are cast to bf16 once, here.
    mean1 = jnp.mean(x, axis=(0, 1, 2))
    var1 = jnp.mean(jnp.square(x - mean1), axis=(0, 1, 2))
    w1m, b1m = _fold_bn_into_conv(w1, b1, g1, bt1, mean1, var1)
    w1m = w1m.astype(MXU_DTYPE)

    # ---- Stage 1: conv1 + ReLU (+ BN2 partial stats), pipelined over batch.
    h1, stats = pl.pallas_call(
        _conv1_kernel,
        grid=(N // nb,),
        in_specs=[
            pl.BlockSpec((nb, H, W, Cin), lambda i: (i, 0, 0, 0)),
            # TODO(synk): pipeline_mode=pl.Buffered(1) for the grid-invariant
            # weight/bias to save their second VMEM buffer.
            pl.BlockSpec((9 * Cin, Cout), lambda i: (0, 0)),
            pl.BlockSpec((1, Cout), lambda i: (0, 0)),
        ],
        out_specs=[
            pl.BlockSpec((nb, Ho, Wo, Cout), lambda i: (i, 0, 0, 0)),
            pl.BlockSpec((nb, 2, Cout), lambda i: (i, 0, 0)),
        ],
        out_shape=[
            jax.ShapeDtypeStruct((N, Ho, Wo, Cout), H1_DTYPE),
            jax.ShapeDtypeStruct((N, 2, Cout), jnp.float32),
        ],
        compiler_params=compiler_params,
    )(x, w1m, b1m)

    # ---- BN2: reduce the tiny (N, 2, Cout) partial sums, fold into conv2.
    cnt = jnp.float32(N * Ho * Wo)
    mean2 = jnp.sum(stats[:, 0, :], axis=0) / cnt
    # E[h^2] - E[h]^2 with a clamp; adequate at these activation scales.
    # TODO(synk): shifted / two-pass variance if cancellation ever matters.
    var2 = jnp.maximum(jnp.sum(stats[:, 1, :], axis=0) / cnt - mean2 * mean2, 0.0)
    w2m, b2m = _fold_bn_into_conv(w2, b2, g2, bt2, mean2, var2)
    w2m = w2m.astype(MXU_DTYPE)

    # ---- Stage 2: conv2 + ReLU + maxpool, pipelined over batch.
    out = pl.pallas_call(
        _conv2_pool_kernel,
        grid=(N // nb,),
        in_specs=[
            pl.BlockSpec((nb, Ho, Wo, Cout), lambda i: (i, 0, 0, 0)),
            pl.BlockSpec((9 * Cout, Cout), lambda i: (0, 0)),
            pl.BlockSpec((1, Cout), lambda i: (0, 0)),
        ],
        out_specs=pl.BlockSpec((nb, Hp, Wp, Cout), lambda i: (i, 0, 0, 0)),
        out_shape=jax.ShapeDtypeStruct((N, Hp, Wp, Cout), jnp.float32),
        compiler_params=compiler_params,
    )(h1, w2m, b2m)

    return out


def vgg_block(x_nchw, params):
    """PyTorch-layout entry: (N, Cin, H, W) f32 -> (N, Cout, Hp, Wp) f32.

    NOTE: the NCHW<->NHWC transposes are extra HBM passes outside the Pallas
    pipeline; callers that can produce/consume NHWC should call
    vgg_block_nhwc directly.
    """
    out = vgg_block_nhwc(jnp.transpose(x_nchw, (0, 2, 3, 1)), params)
    return jnp.transpose(out, (0, 3, 1, 2))


# ----------------------- plain-JAX reference (sanity check) ----------------
def vgg_block_ref(x_nchw, params):
    g1, bt1, w1, b1, g2, bt2, w2, b2 = params
    x = jnp.transpose(x_nchw, (0, 2, 3, 1)).astype(jnp.float32)

    def bn(v, g, b):
        m = jnp.mean(v, axis=(0, 1, 2), keepdims=True)
        s = jnp.mean((v - m) ** 2, axis=(0, 1, 2), keepdims=True)
        return (v - m) * lax.rsqrt(s + EPS) * g.reshape(1, 1, 1, -1) + b.reshape(1, 1, 1, -1)

    def conv(v, w, b):
        y = lax.conv_general_dilated(v, w, (1, 1), "VALID",
                                     dimension_numbers=("NHWC", "HWIO", "NHWC"))
        return y + b.reshape(1, 1, 1, -1)

    h = jnp.maximum(conv(bn(x, g1, bt1), w1, b1), 0.0)
    h = jnp.maximum(conv(bn(h, g2, bt2), w2, b2), 0.0)
    h = lax.reduce_window(h, -jnp.inf, lax.max, (1, 2, 2, 1), (1, 2, 2, 1), "VALID")
    return jnp.transpose(h, (0, 3, 1, 2))


def init_params(key, in_channels, out_channels):
    ks = jax.random.split(key, 8)
    g1 = 1.0 + 0.1 * jax.random.normal(ks[0], (in_channels,), jnp.float32)
    bt1 = 0.1 * jax.random.normal(ks[1], (in_channels,), jnp.float32)
    w1 = jax.random.normal(ks[2], (3, 3, in_channels, out_channels), jnp.float32) \
         * (1.0 / (3.0 * 3.0 * in_channels) ** 0.5)
    b1 = 0.1 * jax.random.normal(ks[3], (out_channels,), jnp.float32)
    g2 = 1.0 + 0.1 * jax.random.normal(ks[4], (out_channels,), jnp.float32)
    bt2 = 0.1 * jax.random.normal(ks[5], (out_channels,), jnp.float32)
    w2 = jax.random.normal(ks[6], (3, 3, out_channels, out_channels), jnp.float32) \
         * (1.0 / (3.0 * 3.0 * out_channels) ** 0.5)
    b2 = 0.1 * jax.random.normal(ks[7], (out_channels,), jnp.float32)
    return (g1, bt1, w1, b1, g2, bt2, w2, b2)


if __name__ == "__main__":
    key = jax.random.PRNGKey(0)
    k_x, k_p = jax.random.split(key)

    N, Cin, Cout, H, W = 2, 4, 8, 16, 16
    x = jax.random.normal(k_x, (N, Cin, H, W), jnp.float32)
    params = init_params(k_p, Cin, Cout)

    y = jax.block_until_ready(vgg_block(x, params))
    y_ref = jax.block_until_ready(vgg_block_ref(x, params))

    assert y.shape == (N, Cout, 6, 6), y.shape
    max_err = float(jnp.max(jnp.abs(y - y_ref)))
    # bf16 MXU operands + bf16 h1 storage -> looser tolerance than the f32 path.
    assert jnp.allclose(y, y_ref, atol=5e-2, rtol=5e-2), max_err

    print("KERNEL_OK")
</pallas_src>

<mosaic_0001>
module attributes {stable_mosaic.version = 11 : i64} {
  func.func @_conv1_kernel(%arg0: i32, %arg1: memref<1x16x16x4xf32, #tpu.memory_space<vmem>>, %arg2: memref<36x8xbf16, #tpu.memory_space<vmem>>, %arg3: memref<1x8xf32, #tpu.memory_space<vmem>>, %arg4: memref<1x14x14x8xbf16, #tpu.memory_space<vmem>>, %arg5: memref<1x2x8xf32, #tpu.memory_space<vmem>>) attributes {dimension_semantics = [#tpu.dimension_semantics<parallel>], iteration_bounds = array<i64: 2>, scalar_prefetch = 0 : i64, scratch_operands = 0 : i64, tpu.core_type = #tpu.core_type<tc>, window_params = [{transform_indices = @transform_0, window_bounds = array<i64: 1, 16, 16, 4>}, {pipeline_mode = #tpu.pipeline_mode<synchronous>, transform_indices = @transform_1, window_bounds = array<i64: 36, 8>}, {pipeline_mode = #tpu.pipeline_mode<synchronous>, transform_indices = @transform_2, window_bounds = array<i64: 1, 8>}, {transform_indices = @transform_3, window_bounds = array<i64: 1, 14, 14, 8>}, {transform_indices = @transform_4, window_bounds = array<i64: 1, 2, 8>}]} {
    %c0 = arith.constant 0 : index
    %c0_0 = arith.constant 0 : index
    %c0_1 = arith.constant 0 : index
    %c0_2 = arith.constant 0 : index
    %0 = vector.load %arg1[%c0, %c0_0, %c0_1, %c0_2] : memref<1x16x16x4xf32, #tpu.memory_space<vmem>>, vector<1x14x14x4xf32>
    %c0_3 = arith.constant 0 : index
    %c0_4 = arith.constant 0 : index
    %c1 = arith.constant 1 : index
    %c0_5 = arith.constant 0 : index
    %1 = vector.load %arg1[%c0_3, %c0_4, %c1, %c0_5] : memref<1x16x16x4xf32, #tpu.memory_space<vmem>>, vector<1x14x14x4xf32>
    %c0_6 = arith.constant 0 : index
    %c0_7 = arith.constant 0 : index
    %c2 = arith.constant 2 : index
    %c0_8 = arith.constant 0 : index
    %2 = vector.load %arg1[%c0_6, %c0_7, %c2, %c0_8] : memref<1x16x16x4xf32, #tpu.memory_space<vmem>>, vector<1x14x14x4xf32>
    %c0_9 = arith.constant 0 : index
    %c1_10 = arith.constant 1 : index
    %c0_11 = arith.constant 0 : index
    %c0_12 = arith.constant 0 : index
    %3 = vector.load %arg1[%c0_9, %c1_10, %c0_11, %c0_12] : memref<1x16x16x4xf32, #tpu.memory_space<vmem>>, vector<1x14x14x4xf32>
    %c0_13 = arith.constant 0 : index
    %c1_14 = arith.constant 1 : index
    %c1_15 = arith.constant 1 : index
    %c0_16 = arith.constant 0 : index
    %4 = vector.load %arg1[%c0_13, %c1_14, %c1_15, %c0_16] : memref<1x16x16x4xf32, #tpu.memory_space<vmem>>, vector<1x14x14x4xf32>
    %c0_17 = arith.constant 0 : index
    %c1_18 = arith.constant 1 : index
    %c2_19 = arith.constant 2 : index
    %c0_20 = arith.constant 0 : index
    %5 = vector.load %arg1[%c0_17, %c1_18, %c2_19, %c0_20] : memref<1x16x16x4xf32, #tpu.memory_space<vmem>>, vector<1x14x14x4xf32>
    %c0_21 = arith.constant 0 : index
    %c2_22 = arith.constant 2 : index
    %c0_23 = arith.constant 0 : index
    %c0_24 = arith.constant 0 : index
    %6 = vector.load %arg1[%c0_21, %c2_22, %c0_23, %c0_24] : memref<1x16x16x4xf32, #tpu.memory_space<vmem>>, vector<1x14x14x4xf32>
    %c0_25 = arith.constant 0 : index
    %c2_26 = arith.constant 2 : index
    %c1_27 = arith.constant 1 : index
    %c0_28 = arith.constant 0 : index
    %7 = vector.load %arg1[%c0_25, %c2_26, %c1_27, %c0_28] : memref<1x16x16x4xf32, #tpu.memory_space<vmem>>, vector<1x14x14x4xf32>
    %c0_29 = arith.constant 0 : index
    %c2_30 = arith.constant 2 : index
    %c2_31 = arith.constant 2 : index
    %c0_32 = arith.constant 0 : index
    %8 = vector.load %arg1[%c0_29, %c2_30, %c2_31, %c0_32] : memref<1x16x16x4xf32, #tpu.memory_space<vmem>>, vector<1x14x14x4xf32>
    %9 = tpu.concatenate %0, %1, %2, %3, %4, %5, %6, %7, %8 in 3 : vector<1x14x14x4xf32>, vector<1x14x14x4xf32>, vector<1x14x14x4xf32>, vector<1x14x14x4xf32>, vector<1x14x14x4xf32>, vector<1x14x14x4xf32>, vector<1x14x14x4xf32>, vector<1x14x14x4xf32>, vector<1x14x14x4xf32> -> vector<1x14x14x36xf32>
    %10 = arith.truncf %9 : vector<1x14x14x36xf32> to vector<1x14x14x36xbf16>
    %c0_33 = arith.constant 0 : index
    %c0_34 = arith.constant 0 : index
    %11 = vector.load %arg2[%c0_33, %c0_34] : memref<36x8xbf16, #tpu.memory_space<vmem>>, vector<36x8xbf16>
    "tpu.trace_start"() <{level = 10 : i32, message = "nhwk,kf->nhwf"}> : () -> ()
    %cst = arith.constant dense<0.000000e+00> : vector<1x14x14x8xf32>
    %12 = tpu.matmul %10, %11, %cst {dimension_numbers = #tpu.dot_dimension_numbers<[3], [0], [0, 1, 2], [1], [0, 0, 0, 1, 0, 2, 1, 1], [], []>} : vector<1x14x14x36xbf16>, vector<36x8xbf16>, vector<1x14x14x8xf32> -> vector<1x14x14x8xf32>
    "tpu.trace_stop"() : () -> ()
    %c0_35 = arith.constant 0 : index
    %c0_36 = arith.constant 0 : index
    %13 = vector.load %arg3[%c0_35, %c0_36] : memref<1x8xf32, #tpu.memory_space<vmem>>, vector<1x8xf32>
    %14 = vector.shape_cast %13 : vector<1x8xf32> to vector<1x1x1x8xf32>
    %15 = vector.broadcast %14 : vector<1x1x1x8xf32> to vector<1x14x14x8xf32>
    %16 = arith.addf %12, %15 : vector<1x14x14x8xf32>
    %cst_37 = arith.constant 0.000000e+00 : f32
    %17 = vector.broadcast %cst_37 : f32 to vector<1x14x14x8xf32>
    %18 = arith.maximumf %16, %17 : vector<1x14x14x8xf32>
    %19 = arith.truncf %18 : vector<1x14x14x8xf32> to vector<1x14x14x8xbf16>
    %c0_38 = arith.constant 0 : index
    %c0_39 = arith.constant 0 : index
    %c0_40 = arith.constant 0 : index
    %c0_41 = arith.constant 0 : index
    %20 = vector.load %arg4[%c0_38, %c0_39, %c0_40, %c0_41] : memref<1x14x14x8xbf16, #tpu.memory_space<vmem>>, vector<1x14x14x8xbf16>
    tpu.vector_store %arg4[%c0_38, %c0_39, %c0_40, %c0_41], %19 {strides = array<i32>} : memref<1x14x14x8xbf16, #tpu.memory_space<vmem>>, vector<1x14x14x8xbf16>,
    %cst_42 = arith.constant dense<0.000000e+00> : vector<1x8xf32>
    %21 = vector.multi_reduction <add>, %18, %cst_42 [1, 2] : vector<1x14x14x8xf32> to vector<1x8xf32>
    %c0_43 = arith.constant 0 : index
    %c0_44 = arith.constant 0 : index
    %c0_45 = arith.constant 0 : index
    %22 = vector.load %arg5[%c0_43, %c0_44, %c0_45] : memref<1x2x8xf32, #tpu.memory_space<vmem>>, vector<1x1x8xf32>
    %23 = vector.shape_cast %22 : vector<1x1x8xf32> to vector<1x8xf32>
    %24 = vector.shape_cast %21 : vector<1x8xf32> to vector<1x1x8xf32>
    tpu.vector_store %arg5[%c0_43, %c0_44, %c0_45], %24 {strides = array<i32>} : memref<1x2x8xf32, #tpu.memory_space<vmem>>, vector<1x1x8xf32>,
    %25 = arith.mulf %18, %18 : vector<1x14x14x8xf32>
    %cst_46 = arith.constant dense<0.000000e+00> : vector<1x8xf32>
    %26 = vector.multi_reduction <add>, %25, %cst_46 [1, 2] : vector<1x14x14x8xf32> to vector<1x8xf32>
    %c0_47 = arith.constant 0 : index
    %c1_48 = arith.constant 1 : index
    %c0_49 = arith.constant 0 : index
    %27 = vector.load %arg5[%c0_47, %c1_48, %c0_49] : memref<1x2x8xf32, #tpu.memory_space<vmem>>, vector<1x1x8xf32>
    %28 = vector.shape_cast %27 : vector<1x1x8xf32> to vector<1x8xf32>
    %29 = vector.shape_cast %26 : vector<1x8xf32> to vector<1x1x8xf32>
    tpu.vector_store %arg5[%c0_47, %c1_48, %c0_49], %29 {strides = array<i32>} : memref<1x2x8xf32, #tpu.memory_space<vmem>>, vector<1x1x8xf32>,
    return
  }
  func.func @transform_0(%arg0: i32) -> (i32, i32, i32, i32) {
    %c0_i32 = arith.constant 0 : i32
    %c0_i32_0 = arith.constant 0 : i32
    %c0_i32_1 = arith.constant 0 : i32
    %c0_i32_2 = arith.constant 0 : i32
    return %arg0, %c0_i32, %c0_i32_0, %c0_i32_1 : i32, i32, i32, i32
  }
  func.func @transform_1(%arg0: i32) -> (i32, i32) {
    %c0_i32 = arith.constant 0 : i32
    %c0_i32_0 = arith.constant 0 : i32
    %c0_i32_1 = arith.constant 0 : i32
    return %c0_i32, %c0_i32_0 : i32, i32
  }
  func.func @transform_2(%arg0: i32) -> (i32, i32) {
    %c0_i32 = arith.constant 0 : i32
    %c0_i32_0 = arith.constant 0 : i32
    %c0_i32_1 = arith.constant 0 : i32
    return %c0_i32, %c0_i32_0 : i32, i32
  }
  func.func @transform_3(%arg0: i32) -> (i32, i32, i32, i32) {
    %c0_i32 = arith.constant 0 : i32
    %c0_i32_0 = arith.constant 0 : i32
    %c0_i32_1 = arith.constant 0 : i32
    %c0_i32_2 = arith.constant 0 : i32
    return %arg0, %c0_i32, %c0_i32_0, %c0_i32_1 : i32, i32, i32, i32
  }
  func.func @transform_4(%arg0: i32) -> (i32, i32, i32) {
    %c0_i32 = arith.constant 0 : i32
    %c0_i32_0 = arith.constant 0 : i32
    %c0_i32_1 = arith.constant 0 : i32
    return %arg0, %c0_i32, %c0_i32_0 : i32, i32, i32
  }
}

</mosaic_0001>

<llo_original>
// kernel: tpu_custom_call.1
$region0: #{tpu_custom_call.1}
  #allocation0 [shape = 'u32[]', space=smem, size = 0x4, offset = 0x4, fixed_abs, tag = 'smem constant byte address 0x4 - core index']
  #allocation1 [shape = 'u32[72,128]{1,0:T(1,128)}', space=vmem, size = 0x9000, scoped, tag = 'internal scratch']
  %s0 = inlined_call_operand.vmem [shape: f32[2,16,16,4], index: 0, kind: input, shape index: {}]
  %s1 = inlined_call_operand.vmem [shape: bf16[36,8], index: 1, kind: input, shape index: {}]
  %s2 = inlined_call_operand.vmem [shape: f32[1,8], index: 2, kind: input, shape index: {}]
  %s3 = inlined_call_operand.vmem [shape: bf16[2,14,14,8], index: 3, kind: output, shape index: {0}]
  %s4 = inlined_call_operand.hbm [shape: f32[2,2,8], index: 4, kind: output, shape index: {1}]
  %5 = xla_tuple %s3, %s4
  %s6 = sld [smem:[#allocation0]]
  $region53: #{tpu_custom_call.1} parent=0
    _
  %s8 = ssub.s32 1, %s6
  %s9 = scalar_select 0, %s8, %s6
  $region1: #{tpu_custom_call.1} parent=0
    #allocation2 [shape = 'u8[2048]{0}', space=vmem, size = 0x800, scoped, tag = 'output window, operand 1']
    #allocation3 [shape = 's32[2]{0}', space=sflag, size = 0x8, scoped, tag = 'scoped memory for tpu_custom_call.1']
    %10 = vsyncpa [#allocation3], 0
    %s11 = scalar_lea.sflag [#allocation3], 1
    %12 = vsyncpa %s11, 0
    loop: start=0, step=1, limit=4
    $region2: #{tpu_custom_call.1} parent=1 // loop_pre_header
      _
    $region3: #{tpu_custom_call.1} parent=1 // loop_header
      %s14 = sphi 0, %s18
      %p15 = scmp.ge.s32.totalorder %s14, 4
      %s24 = sphi 0, %s26
      %s27 = sphi 0, %s24
      %s28 = sphi 0, %s27
      %s44 = sphi 0, %s28
      %s48 = sphi 0, %s48
      %s50 = sphi 0, %s48
      %s51 = sphi 0, %s50
      %s65 = sphi 0, %s51
      %s69 = sphi 0, %s69
      %s71 = sphi 0, %s69
      %s72 = sphi 0, %s71
      %s86 = sphi 0, %s72
      %s92 = sphi 0, %s94
      %s95 = sphi 0, %s92
      %s96 = sphi 0, %s95
      %s112 = sphi 0, %s96
      %s118 = sphi 0, %s120
      %s121 = sphi 0, %s118
      %s122 = sphi 0, %s121
      %s138 = sphi 0, %s122
    $region4: #{tpu_custom_call.1} parent=1 // loop_header_branch
      %17 = sbr.rel (%p15) target = $region8
    $region5: #{tpu_custom_call.1} parent=1 // loop_body
      %s19 = ssub.s32 %s14, 1
      %s20 = ssub.s32 %s14, 2
      %s21 = sadd.s32 %s14, 1
      %s22 = ssub.s32 %s14, %s21
      %p23 = scmp.eq.s32.totalorder %s22, 0
      %s25 = sadd.s32 %s24, 1
      %s26 = scalar_select %p23, %s24, %s25
      %p29 = pneg %p23
      %p30 = scmp.eq.s32.totalorder %s14, 1
      %p31 = por %p29, %p30
      %p32 = scmp.ne.s32.totalorder %s24, %s27
      %p33 = scmp.eq.s32.totalorder %s14, 0
      %p34 = por %p32, %p33
      %p35 = scmp.ne.s32.totalorder %s24, %s27
      %p36 = scmp.eq.s32.totalorder %s19, 1
      %p37 = por %p35, %p36
      %p38 = scmp.ne.s32.totalorder %s27, %s28
      %p39 = scmp.eq.s32.totalorder %s19, 0
      %p40 = por %p38, %p39
      %p41 = scmp.ne.s32.totalorder %s27, %s28
      %p42 = scmp.eq.s32.totalorder %s20, 1
      %p43 = por %p41, %p42
      %p45 = scmp.ne.s32.totalorder %s28, %s44
      %p46 = scmp.eq.s32.totalorder %s20, 0
      %p47 = por %p45, %p46
      %s49 = sadd.s32 %s48, 1
      %p52 = scmp.eq.s32.totalorder %s14, 1
      %p53 = scmp.ne.s32.totalorder %s48, %s50
      %p54 = scmp.eq.s32.totalorder %s14, 0
      %p55 = por %p53, %p54
      %p56 = scmp.ne.s32.totalorder %s48, %s50
      %p57 = scmp.eq.s32.totalorder %s19, 1
      %p58 = por %p56, %p57
      %p59 = scmp.ne.s32.totalorder %s50, %s51
      %p60 = scmp.eq.s32.totalorder %s19, 0
      %p61 = por %p59, %p60
      %p62 = scmp.ne.s32.totalorder %s50, %s51
      %p63 = scmp.eq.s32.totalorder %s20, 1
      %p64 = por %p62, %p63
      %p66 = scmp.ne.s32.totalorder %s51, %s65
      %p67 = scmp.eq.s32.totalorder %s20, 0
      %p68 = por %p66, %p67
      %s70 = sadd.s32 %s69, 1
      %p73 = scmp.eq.s32.totalorder %s14, 1
      %p74 = scmp.ne.s32.totalorder %s69, %s71
      %p75 = scmp.eq.s32.totalorder %s14, 0
      %p76 = por %p74, %p75
      %p77 = scmp.ne.s32.totalorder %s69, %s71
      %p78 = scmp.eq.s32.totalorder %s19, 1
      %p79 = por %p77, %p78
      %p80 = scmp.ne.s32.totalorder %s71, %s72
      %p81 = scmp.eq.s32.totalorder %s19, 0
      %p82 = por %p80, %p81
      %p83 = scmp.ne.s32.totalorder %s71, %s72
      %p84 = scmp.eq.s32.totalorder %s20, 1
      %p85 = por %p83, %p84
      %p87 = scmp.ne.s32.totalorder %s72, %s86
      %p88 = scmp.eq.s32.totalorder %s20, 0
      %p89 = por %p87, %p88
      %s90 = ssub.s32 %s14, %s21
      %p91 = scmp.eq.s32.totalorder %s90, 0
      %s93 = sadd.s32 %s92, 1
      %s94 = scalar_select %p91, %s92, %s93
      %p97 = pneg %p91
      %p98 = scmp.eq.s32.totalorder %s14, 1
      %p99 = por %p97, %p98
      %p100 = scmp.ne.s32.totalorder %s92, %s95
      %p101 = scmp.eq.s32.totalorder %s14, 0
      %p102 = por %p100, %p101
      %p103 = scmp.ne.s32.totalorder %s92, %s95
      %p104 = scmp.eq.s32.totalorder %s19, 1
      %p105 = por %p103, %p104
      %p106 = scmp.ne.s32.totalorder %s95, %s96
      %p107 = scmp.eq.s32.totalorder %s19, 0
      %p108 = por %p106, %p107
      %p109 = scmp.ne.s32.totalorder %s95, %s96
      %p110 = scmp.eq.s32.totalorder %s20, 1
      %p111 = por %p109, %p110
      %p113 = scmp.ne.s32.totalorder %s96, %s112
      %p114 = scmp.eq.s32.totalorder %s20, 0
      %p115 = por %p113, %p114
      %s116 = ssub.s32 %s14, %s21
      %p117 = scmp.eq.s32.totalorder %s116, 0
      %s119 = sadd.s32 %s118, 1
      %s120 = scalar_select %p117, %s118, %s119
      %p123 = pneg %p117
      %p124 = scmp.eq.s32.totalorder %s14, 1
      %p125 = por %p123, %p124
      %p126 = scmp.ne.s32.totalorder %s118, %s121
      %p127 = scmp.eq.s32.totalorder %s14, 0
      %p128 = por %p126, %p127
      %p129 = scmp.ne.s32.totalorder %s118, %s121
      %p130 = scmp.eq.s32.totalorder %s19, 1
      %p131 = por %p129, %p130
      %p132 = scmp.ne.s32.totalorder %s121, %s122
      %p133 = scmp.eq.s32.totalorder %s19, 0
      %p134 = por %p132, %p133
      %p135 = scmp.ne.s32.totalorder %s121, %s122
      %p136 = scmp.eq.s32.totalorder %s20, 1
      %p137 = por %p135, %p136
      %p139 = scmp.ne.s32.totalorder %s122, %s138
      %p140 = scmp.eq.s32.totalorder %s20, 0
      %p141 = por %p139, %p140
      %p142 = scmp.le.s32.totalorder 1, %s14
      %p143 = scmp.lt.s32.totalorder %s14, 3
      %p144 = pnand %p142, %p143
      %p145 = pneg %p144
      // Predicated region
      $region9: #{tpu_custom_call.1} parent=5 // pred_check
        _
      $region10: #{tpu_custom_call.1} parent=5 // pred_check_branch
        %147 = sbr.rel (%p144) target = $region12
      $region11: #{tpu_custom_call.1} parent=5 // pred_region
        %s148 = ssub.s32 %s14, 1
        // Predicated region
        $region13: #{tpu_custom_call.1} parent=11 // pred_check
          %p149 = pneg %p61
        $region14: #{tpu_custom_call.1} parent=11 // pred_check_branch
          %151 = sbr.rel (%p149) target = $region16
        $region15: #{tpu_custom_call.1} parent=11 // pred_region
          _
        $region16: #{tpu_custom_call.1} parent=11 // pred_fallthru
          _
        // Predicated region
        $region17: #{tpu_custom_call.1} parent=11 // pred_check
          %p152 = pneg %p82
        $region18: #{tpu_custom_call.1} parent=11 // pred_check_branch
          %154 = sbr.rel (%p152) target = $region20
        $region19: #{tpu_custom_call.1} parent=11 // pred_region
          _
        $region20: #{tpu_custom_call.1} parent=11 // pred_fallthru
          _
      $region12: #{tpu_custom_call.1} parent=5 // pred_fallthru
        _
      %p155 = scmp.lt.s32.totalorder %s14, 2
      // Predicated region
      $region21: #{tpu_custom_call.1} parent=5 // pred_check
        %p156 = pneg %p155
      $region22: #{tpu_custom_call.1} parent=5 // pred_check_branch
        %158 = sbr.rel (%p156) target = $region24
      $region23: #{tpu_custom_call.1} parent=5 // pred_region
        // Predicated region
        $region25: #{tpu_custom_call.1} parent=23 // pred_check
          %p159 = pneg %p34
        $region26: #{tpu_custom_call.1} parent=23 // pred_check_branch
          %161 = sbr.rel (%p159) target = $region28
        $region27: #{tpu_custom_call.1} parent=23 // pred_region
          %p162 = scmp.lt.s32.totalorder %s14, 1
          %s163 = scalar_select %p162, %s14, 1
          %s164 = smul.addr %s163, 32
          %s165 = smul.addr %s164, 8
          %s166 = scalar_lea.vmem %s0, %s165
        $region28: #{tpu_custom_call.1} parent=23 // pred_fallthru
          _
      $region24: #{tpu_custom_call.1} parent=5 // pred_fallthru
        _
      %p167 = scmp.le.s32.totalorder 1, %s14
      %p168 = scmp.lt.s32.totalorder %s14, 3
      %p169 = pnand %p167, %p168
      %p170 = pneg %p169
      // Predicated region
      $region29: #{tpu_custom_call.1} parent=5 // pred_check
        _
      $region30: #{tpu_custom_call.1} parent=5 // pred_check_branch
        %172 = sbr.rel (%p169) target = $region32
      $region31: #{tpu_custom_call.1} parent=5 // pred_region
        %s173 = ssub.s32 %s14, 1
        %p174 = scmp.lt.s32.totalorder %s19, 1
        %s175 = scalar_select %p174, %s19, 1
        %s176 = smul.addr %s175, 32
        %s177 = smul.addr %s176, 8
        %s178 = scalar_lea.vmem %s0, %s177
        %p179 = pneg %p40
        %p180 = pneg %p37
        %p181 = pneg %p61
        %p182 = pneg %p58
        %p183 = pneg %p82
        %p184 = pneg %p79
        %p185 = pneg %p108
        %p186 = pneg %p105
        %p187 = scmp.lt.s32.totalorder %s19, 1
        %s188 = scalar_select %p187, %s19, 1
        %s189 = smul.addr %s188, 28
        %s190 = smul.addr %s189, 4
        %s191 = scalar_lea.vmem %s3, %s190
        %p192 = pneg %p134
        %p193 = pneg %p131
        %s194 = sand.u32 %s121, 1
        %s195 = scalar_lea.sflag [#allocation3], %s194
        %s196 = sand.u32 %s121, 1
        %s197 = smul.addr %s196, 2
        %s198 = scalar_lea.vmem [#allocation2], %s197
        %p199 = scmp.lt.s32.totalorder %s19, 1
        %s200 = scalar_select %p199, %s19, 1
        %s201 = smul.addr %s200, 32
        %s202 = smul.addr %s201, 8
        %s203 = scalar_lea.vmem %s0, %s202
        %p204 = scmp.lt.s32.totalorder %s19, 1
        %s205 = scalar_select %p204, %s19, 1
        %s206 = smul.addr %s205, 28
        %s207 = smul.addr %s206, 4
        %s208 = scalar_lea.vmem %s3, %s207
        %v210 = vld [vmem:[%s203] sm:$0xff]
        %v211 = vld [vmem:[%s203 + $0x8] sm:$0x3f]
        %v212 = vld [vmem:[%s203 + $0x10] sm:$0xff]
        %v213 = vld [vmem:[%s203 + $0x18] sm:$0x3f]
        %v214 = vld [vmem:[%s203 + $0x20] sm:$0xff]
        %v215 = vld [vmem:[%s203 + $0x28] sm:$0x3f]
        %v216 = vld [vmem:[%s203 + $0x30] sm:$0xff]
        %v217 = vld [vmem:[%s203 + $0x38] sm:$0x3f]
        %v218 = vld [vmem:[%s203 + $0x40] sm:$0xff]
        %v219 = vld [vmem:[%s203 + $0x48] sm:$0x3f]
        %v220 = vld [vmem:[%s203 + $0x50] sm:$0xff]
        %v221 = vld [vmem:[%s203 + $0x58] sm:$0x3f]
        %v222 = vld [vmem:[%s203 + $0x60] sm:$0xff]
        %v223 = vld [vmem:[%s203 + $0x68] sm:$0x3f]
        %v224 = vld [vmem:[%s203 + $0x70] sm:$0xff]
        %v225 = vld [vmem:[%s203 + $0x78] sm:$0x3f]
        %v226 = vld [vmem:[%s203 + $0x80] sm:$0xff]
        %v227 = vld [vmem:[%s203 + $0x88] sm:$0x3f]
        %v228 = vld [vmem:[%s203 + $0x90] sm:$0xff]
        %v229 = vld [vmem:[%s203 + $0x98] sm:$0x3f]
        %v230 = vld [vmem:[%s203 + $0xa0] sm:$0xff]
        %v231 = vld [vmem:[%s203 + $0xa8] sm:$0x3f]
        %v232 = vld [vmem:[%s203 + $0xb0] sm:$0xff]
        %v233 = vld [vmem:[%s203 + $0xb8] sm:$0x3f]
        %v234 = vld [vmem:[%s203 + $0xc0] sm:$0xff]
        %v235 = vld [vmem:[%s203 + $0xc8] sm:$0x3f]
        %v236 = vld [vmem:[%s203 + $0xd0] sm:$0xff]
        %v237 = vld [vmem:[%s203 + $0xd8] sm:$0x3f]
        %v238 = vld [vmem:[%s203 + $0x1] sm:$0xff]
        %v239 = vld [vmem:[%s203 + $0x9] sm:$0x3f]
        %v240 = vld [vmem:[%s203 + $0x11] sm:$0xff]
        %v241 = vld [vmem:[%s203 + $0x19] sm:$0x3f]
        %v242 = vld [vmem:[%s203 + $0x21] sm:$0xff]
        %v243 = vld [vmem:[%s203 + $0x29] sm:$0x3f]
        %v244 = vld [vmem:[%s203 + $0x31] sm:$0xff]
        %v245 = vld [vmem:[%s203 + $0x39] sm:$0x3f]
        %v246 = vld [vmem:[%s203 + $0x41] sm:$0xff]
        %v247 = vld [vmem:[%s203 + $0x49] sm:$0x3f]
        %v248 = vld [vmem:[%s203 + $0x51] sm:$0xff]
        %v249 = vld [vmem:[%s203 + $0x59] sm:$0x3f]
        %v250 = vld [vmem:[%s203 + $0x61] sm:$0xff]
        %v251 = vld [vmem:[%s203 + $0x69] sm:$0x3f]
        %v252 = vld [vmem:[%s203 + $0x71] sm:$0xff]
        %v253 = vld [vmem:[%s203 + $0x79] sm:$0x3f]
        %v254 = vld [vmem:[%s203 + $0x81] sm:$0xff]
        %v255 = vld [vmem:[%s203 + $0x89] sm:$0x3f]
        %v256 = vld [vmem:[%s203 + $0x91] sm:$0xff]
        %v257 = vld [vmem:[%s203 + $0x99] sm:$0x3f]
        %v258 = vld [vmem:[%s203 + $0xa1] sm:$0xff]
        %v259 = vld [vmem:[%s203 + $0xa9] sm:$0x3f]
        %v260 = vld [vmem:[%s203 + $0xb1] sm:$0xff]
        %v261 = vld [vmem:[%s203 + $0xb9] sm:$0x3f]
        %v262 = vld [vmem:[%s203 + $0xc1] sm:$0xff]
        %v263 = vld [vmem:[%s203 + $0xc9] sm:$0x3f]
        %v264 = vld [vmem:[%s203 + $0xd1] sm:$0xff]
        %v265 = vld [vmem:[%s203 + $0xd9] sm:$0x3f]
        %v266 = vld [vmem:[%s203 + $0x2] sm:$0xff]
        %v267 = vld [vmem:[%s203 + $0xa] sm:$0x3f]
        %v268 = vld [vmem:[%s203 + $0x12] sm:$0xff]
        %v269 = vld [vmem:[%s203 + $0x1a] sm:$0x3f]
        %v270 = vld [vmem:[%s203 + $0x22] sm:$0xff]
        %v271 = vld [vmem:[%s203 + $0x2a] sm:$0x3f]
        %v272 = vld [vmem:[%s203 + $0x32] sm:$0xff]
        %v273 = vld [vmem:[%s203 + $0x3a] sm:$0x3f]
        %v274 = vld [vmem:[%s203 + $0x42] sm:$0xff]
        %v275 = vld [vmem:[%s203 + $0x4a] sm:$0x3f]
        %v276 = vld [vmem:[%s203 + $0x52] sm:$0xff]
        %v277 = vld [vmem:[%s203 + $0x5a] sm:$0x3f]
        %v278 = vld [vmem:[%s203 + $0x62] sm:$0xff]
        %v279 = vld [vmem:[%s203 + $0x6a] sm:$0x3f]
        %v280 = vld [vmem:[%s203 + $0x72] sm:$0xff]
        %v281 = vld [vmem:[%s203 + $0x7a] sm:$0x3f]
        %v282 = vld [vmem:[%s203 + $0x82] sm:$0xff]
        %v283 = vld [vmem:[%s203 + $0x8a] sm:$0x3f]
        %v284 = vld [vmem:[%s203 + $0x92] sm:$0xff]
        %v285 = vld [vmem:[%s203 + $0x9a] sm:$0x3f]
        %v286 = vld [vmem:[%s203 + $0xa2] sm:$0xff]
        %v287 = vld [vmem:[%s203 + $0xaa] sm:$0x3f]
        %v288 = vld [vmem:[%s203 + $0xb2] sm:$0xff]
        %v289 = vld [vmem:[%s203 + $0xba] sm:$0x3f]
        %v290 = vld [vmem:[%s203 + $0xc2] sm:$0xff]
        %v291 = vld [vmem:[%s203 + $0xca] sm:$0x3f]
        %v292 = vld [vmem:[%s203 + $0xd2] sm:$0xff]
        %v293 = vld [vmem:[%s203 + $0xda] sm:$0x3f]
        %s294 = scalar_lea.vmem %s203, 16
        %v295 = vld [vmem:[%s294] sm:$0xff]
        %v296 = vld [vmem:[%s294 + $0x8] sm:$0x3f]
        %v297 = vld [vmem:[%s294 + $0x10] sm:$0xff]
        %v298 = vld [vmem:[%s294 + $0x18] sm:$0x3f]
        %v299 = vld [vmem:[%s294 + $0x20] sm:$0xff]
        %v300 = vld [vmem:[%s294 + $0x28] sm:$0x3f]
        %v301 = vld [vmem:[%s294 + $0x30] sm:$0xff]
        %v302 = vld [vmem:[%s294 + $0x38] sm:$0x3f]
        %v303 = vld [vmem:[%s294 + $0x40] sm:$0xff]
        %v304 = vld [vmem:[%s294 + $0x48] sm:$0x3f]
        %v305 = vld [vmem:[%s294 + $0x50] sm:$0xff]
        %v306 = vld [vmem:[%s294 + $0x58] sm:$0x3f]
        %v307 = vld [vmem:[%s294 + $0x60] sm:$0xff]
        %v308 = vld [vmem:[%s294 + $0x68] sm:$0x3f]
        %v309 = vld [vmem:[%s294 + $0x70] sm:$0xff]
        %v310 = vld [vmem:[%s294 + $0x78] sm:$0x3f]
        %v311 = vld [vmem:[%s294 + $0x80] sm:$0xff]
        %v312 = vld [vmem:[%s294 + $0x88] sm:$0x3f]
        %v313 = vld [vmem:[%s294 + $0x90] sm:$0xff]
        %v314 = vld [vmem:[%s294 + $0x98] sm:$0x3f]
        %v315 = vld [vmem:[%s294 + $0xa0] sm:$0xff]
        %v316 = vld [vmem:[%s294 + $0xa8] sm:$0x3f]
        %v317 = vld [vmem:[%s294 + $0xb0] sm:$0xff]
        %v318 = vld [vmem:[%s294 + $0xb8] sm:$0x3f]
        %v319 = vld [vmem:[%s294 + $0xc0] sm:$0xff]
        %v320 = vld [vmem:[%s294 + $0xc8] sm:$0x3f]
        %v321 = vld [vmem:[%s294 + $0xd0] sm:$0xff]
        %v322 = vld [vmem:[%s294 + $0xd8] sm:$0x3f]
        %v323 = vld [vmem:[%s294 + $0x1] sm:$0xff]
        %v324 = vld [vmem:[%s294 + $0x9] sm:$0x3f]
        %v325 = vld [vmem:[%s294 + $0x11] sm:$0xff]
        %v326 = vld [vmem:[%s294 + $0x19] sm:$0x3f]
        %v327 = vld [vmem:[%s294 + $0x21] sm:$0xff]
        %v328 = vld [vmem:[%s294 + $0x29] sm:$0x3f]
        %v329 = vld [vmem:[%s294 + $0x31] sm:$0xff]
        %v330 = vld [vmem:[%s294 + $0x39] sm:$0x3f]
        %v331 = vld [vmem:[%s294 + $0x41] sm:$0xff]
        %v332 = vld [vmem:[%s294 + $0x49] sm:$0x3f]
        %v333 = vld [vmem:[%s294 + $0x51] sm:$0xff]
        %v334 = vld [vmem:[%s294 + $0x59] sm:$0x3f]
        %v335 = vld [vmem:[%s294 + $0x61] sm:$0xff]
        %v336 = vld [vmem:[%s294 + $0x69] sm:$0x3f]
        %v337 = vld [vmem:[%s294 + $0x71] sm:$0xff]
        %v338 = vld [vmem:[%s294 + $0x79] sm:$0x3f]
        %v339 = vld [vmem:[%s294 + $0x81] sm:$0xff]
        %v340 = vld [vmem:[%s294 + $0x89] sm:$0x3f]
        %v341 = vld [vmem:[%s294 + $0x91] sm:$0xff]
        %v342 = vld [vmem:[%s294 + $0x99] sm:$0x3f]
        %v343 = vld [vmem:[%s294 + $0xa1] sm:$0xff]
        %v344 = vld [vmem:[%s294 + $0xa9] sm:$0x3f]
        %v345 = vld [vmem:[%s294 + $0xb1] sm:$0xff]
        %v346 = vld [vmem:[%s294 + $0xb9] sm:$0x3f]
        %v347 = vld [vmem:[%s294 + $0xc1] sm:$0xff]
        %v348 = vld [vmem:[%s294 + $0xc9] sm:$0x3f]
        %v349 = vld [vmem:[%s294 + $0xd1] sm:$0xff]
        %v350 = vld [vmem:[%s294 + $0xd9] sm:$0x3f]
        %v351 = vld [vmem:[%s294 + $0x2] sm:$0xff]
        %v352 = vld [vmem:[%s294 + $0xa] sm:$0x3f]
        %v353 = vld [vmem:[%s294 + $0x12] sm:$0xff]
        %v354 = vld [vmem:[%s294 + $0x1a] sm:$0x3f]
        %v355 = vld [vmem:[%s294 + $0x22] sm:$0xff]
        %v356 = vld [vmem:[%s294 + $0x2a] sm:$0x3f]
        %v357 = vld [vmem:[%s294 + $0x32] sm:$0xff]
        %v358 = vld [vmem:[%s294 + $0x3a] sm:$0x3f]
        %v359 = vld [vmem:[%s294 + $0x42] sm:$0xff]
        %v360 = vld [vmem:[%s294 + $0x4a] sm:$0x3f]
        %v361 = vld [vmem:[%s294 + $0x52] sm:$0xff]
        %v362 = vld [vmem:[%s294 + $0x5a] sm:$0x3f]
        %v363 = vld [vmem:[%s294 + $0x62] sm:$0xff]
        %v364 = vld [vmem:[%s294 + $0x6a] sm:$0x3f]
        %v365 = vld [vmem:[%s294 + $0x72] sm:$0xff]
        %v366 = vld [vmem:[%s294 + $0x7a] sm:$0x3f]
        %v367 = vld [vmem:[%s294 + $0x82] sm:$0xff]
        %v368 = vld [vmem:[%s294 + $0x8a] sm:$0x3f]
        %v369 = vld [vmem:[%s294 + $0x92] sm:$0xff]
        %v370 = vld [vmem:[%s294 + $0x9a] sm:$0x3f]
        %v371 = vld [vmem:[%s294 + $0xa2] sm:$0xff]
        %v372 = vld [vmem:[%s294 + $0xaa] sm:$0x3f]
        %v373 = vld [vmem:[%s294 + $0xb2] sm:$0xff]
        %v374 = vld [vmem:[%s294 + $0xba] sm:$0x3f]
        %v375 = vld [vmem:[%s294 + $0xc2] sm:$0xff]
        %v376 = vld [vmem:[%s294 + $0xca] sm:$0x3f]
        %v377 = vld [vmem:[%s294 + $0xd2] sm:$0xff]
        %v378 = vld [vmem:[%s294 + $0xda] sm:$0x3f]
        %s379 = scalar_lea.vmem %s203, 32
        %v380 = vld [vmem:[%s379] sm:$0xff]
        %v381 = vld [vmem:[%s379 + $0x8] sm:$0x3f]
        %v382 = vld [vmem:[%s379 + $0x10] sm:$0xff]
        %v383 = vld [vmem:[%s379 + $0x18] sm:$0x3f]
        %v384 = vld [vmem:[%s379 + $0x20] sm:$0xff]
        %v385 = vld [vmem:[%s379 + $0x28] sm:$0x3f]
        %v386 = vld [vmem:[%s379 + $0x30] sm:$0xff]
        %v387 = vld [vmem:[%s379 + $0x38] sm:$0x3f]
        %v388 = vld [vmem:[%s379 + $0x40] sm:$0xff]
        %v389 = vld [vmem:[%s379 + $0x48] sm:$0x3f]
        %v390 = vld [vmem:[%s379 + $0x50] sm:$0xff]
        %v391 = vld [vmem:[%s379 + $0x58] sm:$0x3f]
        %v392 = vld [vmem:[%s379 + $0x60] sm:$0xff]
        %v393 = vld [vmem:[%s379 + $0x68] sm:$0x3f]
        %v394 = vld [vmem:[%s379 + $0x70] sm:$0xff]
        %v395 = vld [vmem:[%s379 + $0x78] sm:$0x3f]
        %v396 = vld [vmem:[%s379 + $0x80] sm:$0xff]
        %v397 = vld [vmem:[%s379 + $0x88] sm:$0x3f]
        %v398 = vld [vmem:[%s379 + $0x90] sm:$0xff]
        %v399 = vld [vmem:[%s379 + $0x98] sm:$0x3f]
        %v400 = vld [vmem:[%s379 + $0xa0] sm:$0xff]
        %v401 = vld [vmem:[%s379 + $0xa8] sm:$0x3f]
        %v402 = vld [vmem:[%s379 + $0xb0] sm:$0xff]
        %v403 = vld [vmem:[%s379 + $0xb8] sm:$0x3f]
        %v404 = vld [vmem:[%s379 + $0xc0] sm:$0xff]
        %v405 = vld [vmem:[%s379 + $0xc8] sm:$0x3f]
        %v406 = vld [vmem:[%s379 + $0xd0] sm:$0xff]
        %v407 = vld [vmem:[%s379 + $0xd8] sm:$0x3f]
        %v408 = vld [vmem:[%s379 + $0x1] sm:$0xff]
        %v409 = vld [vmem:[%s379 + $0x9] sm:$0x3f]
        %v410 = vld [vmem:[%s379 + $0x11] sm:$0xff]
        %v411 = vld [vmem:[%s379 + $0x19] sm:$0x3f]
        %v412 = vld [vmem:[%s379 + $0x21] sm:$0xff]
        %v413 = vld [vmem:[%s379 + $0x29] sm:$0x3f]
        %v414 = vld [vmem:[%s379 + $0x31] sm:$0xff]
        %v415 = vld [vmem:[%s379 + $0x39] sm:$0x3f]
        %v416 = vld [vmem:[%s379 + $0x41] sm:$0xff]
        %v417 = vld [vmem:[%s379 + $0x49] sm:$0x3f]
        %v418 = vld [vmem:[%s379 + $0x51] sm:$0xff]
        %v419 = vld [vmem:[%s379 + $0x59] sm:$0x3f]
        %v420 = vld [vmem:[%s379 + $0x61] sm:$0xff]
        %v421 = vld [vmem:[%s379 + $0x69] sm:$0x3f]
        %v422 = vld [vmem:[%s379 + $0x71] sm:$0xff]
        %v423 = vld [vmem:[%s379 + $0x79] sm:$0x3f]
        %v424 = vld [vmem:[%s379 + $0x81] sm:$0xff]
        %v425 = vld [vmem:[%s379 + $0x89] sm:$0x3f]
        %v426 = vld [vmem:[%s379 + $0x91] sm:$0xff]
        %v427 = vld [vmem:[%s379 + $0x99] sm:$0x3f]
        %v428 = vld [vmem:[%s379 + $0xa1] sm:$0xff]
        %v429 = vld [vmem:[%s379 + $0xa9] sm:$0x3f]
        %v430 = vld [vmem:[%s379 + $0xb1] sm:$0xff]
        %v431 = vld [vmem:[%s379 + $0xb9] sm:$0x3f]
        %v432 = vld [vmem:[%s379 + $0xc1] sm:$0xff]
        %v433 = vld [vmem:[%s379 + $0xc9] sm:$0x3f]
        %v434 = vld [vmem:[%s379 + $0xd1] sm:$0xff]
        %v435 = vld [vmem:[%s379 + $0xd9] sm:$0x3f]
        %v436 = vld [vmem:[%s379 + $0x2] sm:$0xff]
        %v437 = vld [vmem:[%s379 + $0xa] sm:$0x3f]
        %v438 = vld [vmem:[%s379 + $0x12] sm:$0xff]
        %v439 = vld [vmem:[%s379 + $0x1a] sm:$0x3f]
        %v440 = vld [vmem:[%s379 + $0x22] sm:$0xff]
        %v441 = vld [vmem:[%s379 + $0x2a] sm:$0x3f]
        %v442 = vld [vmem:[%s379 + $0x32] sm:$0xff]
        %v443 = vld [vmem:[%s379 + $0x3a] sm:$0x3f]
        %v444 = vld [vmem:[%s379 + $0x42] sm:$0xff]
        %v445 = vld [vmem:[%s379 + $0x4a] sm:$0x3f]
        %v446 = vld [vmem:[%s379 + $0x52] sm:$0xff]
        %v447 = vld [vmem:[%s379 + $0x5a] sm:$0x3f]
        %v448 = vld [vmem:[%s379 + $0x62] sm:$0xff]
        %v449 = vld [vmem:[%s379 + $0x6a] sm:$0x3f]
        %v450 = vld [vmem:[%s379 + $0x72] sm:$0xff]
        %v451 = vld [vmem:[%s379 + $0x7a] sm:$0x3f]
        %v452 = vld [vmem:[%s379 + $0x82] sm:$0xff]
        %v453 = vld [vmem:[%s379 + $0x8a] sm:$0x3f]
        %v454 = vld [vmem:[%s379 + $0x92] sm:$0xff]
        %v455 = vld [vmem:[%s379 + $0x9a] sm:$0x3f]
        %v456 = vld [vmem:[%s379 + $0xa2] sm:$0xff]
        %v457 = vld [vmem:[%s379 + $0xaa] sm:$0x3f]
        %v458 = vld [vmem:[%s379 + $0xb2] sm:$0xff]
        %v459 = vld [vmem:[%s379 + $0xba] sm:$0x3f]
        %v460 = vld [vmem:[%s379 + $0xc2] sm:$0xff]
        %v461 = vld [vmem:[%s379 + $0xca] sm:$0x3f]
        %v462 = vld [vmem:[%s379 + $0xd2] sm:$0xff]
        %v463 = vld [vmem:[%s379 + $0xda] sm:$0x3f]
        %492 = vrot.lane.b32.xlu0 %v238, 4
        %v493 = vpop.permute.xlu0 %492
        %494 = vrot.lane.b32.xlu0 %v239, 4
        %v495 = vpop.permute.xlu0 %494
        %496 = vrot.lane.b32.xlu0 %v240, 4
        %v497 = vpop.permute.xlu0 %496
        %498 = vrot.lane.b32.xlu0 %v241, 4
        %v499 = vpop.permute.xlu0 %498
        %500 = vrot.lane.b32.xlu0 %v242, 4
        %v501 = vpop.permute.xlu0 %500
        %502 = vrot.lane.b32.xlu0 %v243, 4
        %v503 = vpop.permute.xlu0 %502
        %504 = vrot.lane.b32.xlu0 %v244, 4
        %v505 = vpop.permute.xlu0 %504
        %506 = vrot.lane.b32.xlu0 %v245, 4
        %v507 = vpop.permute.xlu0 %506
        %508 = vrot.lane.b32.xlu0 %v246, 4
        %v509 = vpop.permute.xlu0 %508
        %510 = vrot.lane.b32.xlu0 %v247, 4
        %v511 = vpop.permute.xlu0 %510
        %512 = vrot.lane.b32.xlu0 %v248, 4
        %v513 = vpop.permute.xlu0 %512
        %514 = vrot.lane.b32.xlu0 %v249, 4
        %v515 = vpop.permute.xlu0 %514
        %516 = vrot.lane.b32.xlu0 %v250, 4
        %v517 = vpop.permute.xlu0 %516
        %518 = vrot.lane.b32.xlu0 %v251, 4
        %v519 = vpop.permute.xlu0 %518
        %520 = vrot.lane.b32.xlu0 %v252, 4
        %v521 = vpop.permute.xlu0 %520
        %522 = vrot.lane.b32.xlu0 %v253, 4
        %v523 = vpop.permute.xlu0 %522
        %524 = vrot.lane.b32.xlu0 %v254, 4
        %v525 = vpop.permute.xlu0 %524
        %526 = vrot.lane.b32.xlu0 %v255, 4
        %v527 = vpop.permute.xlu0 %526
        %528 = vrot.lane.b32.xlu0 %v256, 4
        %v529 = vpop.permute.xlu0 %528
        %530 = vrot.lane.b32.xlu0 %v257, 4
        %v531 = vpop.permute.xlu0 %530
        %532 = vrot.lane.b32.xlu0 %v258, 4
        %v533 = vpop.permute.xlu0 %532
        %534 = vrot.lane.b32.xlu0 %v259, 4
        %v535 = vpop.permute.xlu0 %534
        %536 = vrot.lane.b32.xlu0 %v260, 4
        %v537 = vpop.permute.xlu0 %536
        %538 = vrot.lane.b32.xlu0 %v261, 4
        %v539 = vpop.permute.xlu0 %538
        %540 = vrot.lane.b32.xlu0 %v262, 4
        %v541 = vpop.permute.xlu0 %540
        %542 = vrot.lane.b32.xlu0 %v263, 4
        %v543 = vpop.permute.xlu0 %542
        %544 = vrot.lane.b32.xlu0 %v264, 4
        %v545 = vpop.permute.xlu0 %544
        %546 = vrot.lane.b32.xlu0 %v265, 4
        %v547 = vpop.permute.xlu0 %546
        %604 = vrot.lane.b32.xlu0 %v266, 8
        %v605 = vpop.permute.xlu0 %604
        %606 = vrot.lane.b32.xlu0 %v267, 8
        %v607 = vpop.permute.xlu0 %606
        %608 = vrot.lane.b32.xlu0 %v268, 8
        %v609 = vpop.permute.xlu0 %608
        %610 = vrot.lane.b32.xlu0 %v269, 8
        %v611 = vpop.permute.xlu0 %610
        %612 = vrot.lane.b32.xlu0 %v270, 8
        %v613 = vpop.permute.xlu0 %612
        %614 = vrot.lane.b32.xlu0 %v271, 8
        %v615 = vpop.permute.xlu0 %614
        %616 = vrot.lane.b32.xlu0 %v272, 8
        %v617 = vpop.permute.xlu0 %616
        %618 = vrot.lane.b32.xlu0 %v273, 8
        %v619 = vpop.permute.xlu0 %618
        %620 = vrot.lane.b32.xlu0 %v274, 8
        %v621 = vpop.permute.xlu0 %620
        %622 = vrot.lane.b32.xlu0 %v275, 8
        %v623 = vpop.permute.xlu0 %622
        %624 = vrot.lane.b32.xlu0 %v276, 8
        %v625 = vpop.permute.xlu0 %624
        %626 = vrot.lane.b32.xlu0 %v277, 8
        %v627 = vpop.permute.xlu0 %626
        %628 = vrot.lane.b32.xlu0 %v278, 8
        %v629 = vpop.permute.xlu0 %628
        %630 = vrot.lane.b32.xlu0 %v279, 8
        %v631 = vpop.permute.xlu0 %630
        %632 = vrot.lane.b32.xlu0 %v280, 8
        %v633 = vpop.permute.xlu0 %632
        %634 = vrot.lane.b32.xlu0 %v281, 8
        %v635 = vpop.permute.xlu0 %634
        %636 = vrot.lane.b32.xlu0 %v282, 8
        %v637 = vpop.permute.xlu0 %636
        %638 = vrot.lane.b32.xlu0 %v283, 8
        %v639 = vpop.permute.xlu0 %638
        %640 = vrot.lane.b32.xlu0 %v284, 8
        %v641 = vpop.permute.xlu0 %640
        %642 = vrot.lane.b32.xlu0 %v285, 8
        %v643 = vpop.permute.xlu0 %642
        %644 = vrot.lane.b32.xlu0 %v286, 8
        %v645 = vpop.permute.xlu0 %644
        %646 = vrot.lane.b32.xlu0 %v287, 8
        %v647 = vpop.permute.xlu0 %646
        %648 = vrot.lane.b32.xlu0 %v288, 8
        %v649 = vpop.permute.xlu0 %648
        %650 = vrot.lane.b32.xlu0 %v289, 8
        %v651 = vpop.permute.xlu0 %650
        %652 = vrot.lane.b32.xlu0 %v290, 8
        %v653 = vpop.permute.xlu0 %652
        %654 = vrot.lane.b32.xlu0 %v291, 8
        %v655 = vpop.permute.xlu0 %654
        %656 = vrot.lane.b32.xlu0 %v292, 8
        %v657 = vpop.permute.xlu0 %656
        %658 = vrot.lane.b32.xlu0 %v293, 8
        %v659 = vpop.permute.xlu0 %658
        %716 = vrot.lane.b32.xlu0 %v295, 12
        %v717 = vpop.permute.xlu0 %716
        %718 = vrot.lane.b32.xlu0 %v296, 12
        %v719 = vpop.permute.xlu0 %718
        %720 = vrot.lane.b32.xlu0 %v297, 12
        %v721 = vpop.permute.xlu0 %720
        %722 = vrot.lane.b32.xlu0 %v298, 12
        %v723 = vpop.permute.xlu0 %722
        %724 = vrot.lane.b32.xlu0 %v299, 12
        %v725 = vpop.permute.xlu0 %724
        %726 = vrot.lane.b32.xlu0 %v300, 12
        %v727 = vpop.permute.xlu0 %726
        %728 = vrot.lane.b32.xlu0 %v301, 12
        %v729 = vpop.permute.xlu0 %728
        %730 = vrot.lane.b32.xlu0 %v302, 12
        %v731 = vpop.permute.xlu0 %730
        %732 = vrot.lane.b32.xlu0 %v303, 12
        %v733 = vpop.permute.xlu0 %732
        %734 = vrot.lane.b32.xlu0 %v304, 12
        %v735 = vpop.permute.xlu0 %734
        %736 = vrot.lane.b32.xlu0 %v305, 12
        %v737 = vpop.permute.xlu0 %736
        %738 = vrot.lane.b32.xlu0 %v306, 12
        %v739 = vpop.permute.xlu0 %738
        %740 = vrot.lane.b32.xlu0 %v307, 12
        %v741 = vpop.permute.xlu0 %740
        %742 = vrot.lane.b32.xlu0 %v308, 12
        %v743 = vpop.permute.xlu0 %742
        %744 = vrot.lane.b32.xlu0 %v309, 12
        %v745 = vpop.permute.xlu0 %744
        %746 = vrot.lane.b32.xlu0 %v310, 12
        %v747 = vpop.permute.xlu0 %746
        %748 = vrot.lane.b32.xlu0 %v311, 12
        %v749 = vpop.permute.xlu0 %748
        %750 = vrot.lane.b32.xlu0 %v312, 12
        %v751 = vpop.permute.xlu0 %750
        %752 = vrot.lane.b32.xlu0 %v313, 12
        %v753 = vpop.permute.xlu0 %752
        %754 = vrot.lane.b32.xlu0 %v314, 12
        %v755 = vpop.permute.xlu0 %754
        %756 = vrot.lane.b32.xlu0 %v315, 12
        %v757 = vpop.permute.xlu0 %756
        %758 = vrot.lane.b32.xlu0 %v316, 12
        %v759 = vpop.permute.xlu0 %758
        %760 = vrot.lane.b32.xlu0 %v317, 12
        %v761 = vpop.permute.xlu0 %760
        %762 = vrot.lane.b32.xlu0 %v318, 12
        %v763 = vpop.permute.xlu0 %762
        %764 = vrot.lane.b32.xlu0 %v319, 12
        %v765 = vpop.permute.xlu0 %764
        %766 = vrot.lane.b32.xlu0 %v320, 12
        %v767 = vpop.permute.xlu0 %766
        %768 = vrot.lane.b32.xlu0 %v321, 12
        %v769 = vpop.permute.xlu0 %768
        %770 = vrot.lane.b32.xlu0 %v322, 12
        %v771 = vpop.permute.xlu0 %770
        %828 = vrot.lane.b32.xlu0 %v323, 16
        %v829 = vpop.permute.xlu0 %828
        %830 = vrot.lane.b32.xlu0 %v324, 16
        %v831 = vpop.permute.xlu0 %830
        %832 = vrot.lane.b32.xlu0 %v325, 16
        %v833 = vpop.permute.xlu0 %832
        %834 = vrot.lane.b32.xlu0 %v326, 16
        %v835 = vpop.permute.xlu0 %834
        %836 = vrot.lane.b32.xlu0 %v327, 16
        %v837 = vpop.permute.xlu0 %836
        %838 = vrot.lane.b32.xlu0 %v328, 16
        %v839 = vpop.permute.xlu0 %838
        %840 = vrot.lane.b32.xlu0 %v329, 16
        %v841 = vpop.permute.xlu0 %840
        %842 = vrot.lane.b32.xlu0 %v330, 16
        %v843 = vpop.permute.xlu0 %842
        %844 = vrot.lane.b32.xlu0 %v331, 16
        %v845 = vpop.permute.xlu0 %844
        %846 = vrot.lane.b32.xlu0 %v332, 16
        %v847 = vpop.permute.xlu0 %846
        %848 = vrot.lane.b32.xlu0 %v333, 16
        %v849 = vpop.permute.xlu0 %848
        %850 = vrot.lane.b32.xlu0 %v334, 16
        %v851 = vpop.permute.xlu0 %850
        %852 = vrot.lane.b32.xlu0 %v335, 16
        %v853 = vpop.permute.xlu0 %852
        %854 = vrot.lane.b32.xlu0 %v336, 16
        %v855 = vpop.permute.xlu0 %854
        %856 = vrot.lane.b32.xlu0 %v337, 16
        %v857 = vpop.permute.xlu0 %856
        %858 = vrot.lane.b32.xlu0 %v338, 16
        %v859 = vpop.permute.xlu0 %858
        %860 = vrot.lane.b32.xlu0 %v339, 16
        %v861 = vpop.permute.xlu0 %860
        %862 = vrot.lane.b32.xlu0 %v340, 16
        %v863 = vpop.permute.xlu0 %862
        %864 = vrot.lane.b32.xlu0 %v341, 16
        %v865 = vpop.permute.xlu0 %864
        %866 = vrot.lane.b32.xlu0 %v342, 16
        %v867 = vpop.permute.xlu0 %866
        %868 = vrot.lane.b32.xlu0 %v343, 16
        %v869 = vpop.permute.xlu0 %868
        %870 = vrot.lane.b32.xlu0 %v344, 16
        %v871 = vpop.permute.xlu0 %870
        %872 = vrot.lane.b32.xlu0 %v345, 16
        %v873 = vpop.permute.xlu0 %872
        %874 = vrot.lane.b32.xlu0 %v346, 16
        %v875 = vpop.permute.xlu0 %874
        %876 = vrot.lane.b32.xlu0 %v347, 16
        %v877 = vpop.permute.xlu0 %876
        %878 = vrot.lane.b32.xlu0 %v348, 16
        %v879 = vpop.permute.xlu0 %878
        %880 = vrot.lane.b32.xlu0 %v349, 16
        %v881 = vpop.permute.xlu0 %880
        %882 = vrot.lane.b32.xlu0 %v350, 16
        %v883 = vpop.permute.xlu0 %882
        %940 = vrot.lane.b32.xlu0 %v351, 20
        %v941 = vpop.permute.xlu0 %940
        %942 = vrot.lane.b32.xlu0 %v352, 20
        %v943 = vpop.permute.xlu0 %942
        %944 = vrot.lane.b32.xlu0 %v353, 20
        %v945 = vpop.permute.xlu0 %944
        %946 = vrot.lane.b32.xlu0 %v354, 20
        %v947 = vpop.permute.xlu0 %946
        %948 = vrot.lane.b32.xlu0 %v355, 20
        %v949 = vpop.permute.xlu0 %948
        %950 = vrot.lane.b32.xlu0 %v356, 20
        %v951 = vpop.permute.xlu0 %950
        %952 = vrot.lane.b32.xlu0 %v357, 20
        %v953 = vpop.permute.xlu0 %952
        %954 = vrot.lane.b32.xlu0 %v358, 20
        %v955 = vpop.permute.xlu0 %954
        %956 = vrot.lane.b32.xlu0 %v359, 20
        %v957 = vpop.permute.xlu0 %956
        %958 = vrot.lane.b32.xlu0 %v360, 20
        %v959 = vpop.permute.xlu0 %958
        %960 = vrot.lane.b32.xlu0 %v361, 20
        %v961 = vpop.permute.xlu0 %960
        %962 = vrot.lane.b32.xlu0 %v362, 20
        %v963 = vpop.permute.xlu0 %962
        %964 = vrot.lane.b32.xlu0 %v363, 20
        %v965 = vpop.permute.xlu0 %964
        %966 = vrot.lane.b32.xlu0 %v364, 20
        %v967 = vpop.permute.xlu0 %966
        %968 = vrot.lane.b32.xlu0 %v365, 20
        %v969 = vpop.permute.xlu0 %968
        %970 = vrot.lane.b32.xlu0 %v366, 20
        %v971 = vpop.permute.xlu0 %970
        %972 = vrot.lane.b32.xlu0 %v367, 20
        %v973 = vpop.permute.xlu0 %972
        %974 = vrot.lane.b32.xlu0 %v368, 20
        %v975 = vpop.permute.xlu0 %974
        %976 = vrot.lane.b32.xlu0 %v369, 20
        %v977 = vpop.permute.xlu0 %976
        %978 = vrot.lane.b32.xlu0 %v370, 20
        %v979 = vpop.permute.xlu0 %978
        %980 = vrot.lane.b32.xlu0 %v371, 20
        %v981 = vpop.permute.xlu0 %980
        %982 = vrot.lane.b32.xlu0 %v372, 20
        %v983 = vpop.permute.xlu0 %982
        %984 = vrot.lane.b32.xlu0 %v373, 20
        %v985 = vpop.permute.xlu0 %984
        %986 = vrot.lane.b32.xlu0 %v374, 20
        %v987 = vpop.permute.xlu0 %986
        %988 = vrot.lane.b32.xlu0 %v375, 20
        %v989 = vpop.permute.xlu0 %988
        %990 = vrot.lane.b32.xlu0 %v376, 20
        %v991 = vpop.permute.xlu0 %990
        %992 = vrot.lane.b32.xlu0 %v377, 20
        %v993 = vpop.permute.xlu0 %992
        %994 = vrot.lane.b32.xlu0 %v378, 20
        %v995 = vpop.permute.xlu0 %994
        %1052 = vrot.lane.b32.xlu0 %v380, 24
        %v1053 = vpop.permute.xlu0 %1052
        %1054 = vrot.lane.b32.xlu0 %v381, 24
        %v1055 = vpop.permute.xlu0 %1054
        %1056 = vrot.lane.b32.xlu0 %v382, 24
        %v1057 = vpop.permute.xlu0 %1056
        %1058 = vrot.lane.b32.xlu0 %v383, 24
        %v1059 = vpop.permute.xlu0 %1058
        %1060 = vrot.lane.b32.xlu0 %v384, 24
        %v1061 = vpop.permute.xlu0 %1060
        %1062 = vrot.lane.b32.xlu0 %v385, 24
        %v1063 = vpop.permute.xlu0 %1062
        %1064 = vrot.lane.b32.xlu0 %v386, 24
        %v1065 = vpop.permute.xlu0 %1064
        %1066 = vrot.lane.b32.xlu0 %v387, 24
        %v1067 = vpop.permute.xlu0 %1066
        %1068 = vrot.lane.b32.xlu0 %v388, 24
        %v1069 = vpop.permute.xlu0 %1068
        %1070 = vrot.lane.b32.xlu0 %v389, 24
        %v1071 = vpop.permute.xlu0 %1070
        %1072 = vrot.lane.b32.xlu0 %v390, 24
        %v1073 = vpop.permute.xlu0 %1072
        %1074 = vrot.lane.b32.xlu0 %v391, 24
        %v1075 = vpop.permute.xlu0 %1074
        %1076 = vrot.lane.b32.xlu0 %v392, 24
        %v1077 = vpop.permute.xlu0 %1076
        %1078 = vrot.lane.b32.xlu0 %v393, 24
        %v1079 = vpop.permute.xlu0 %1078
        %1080 = vrot.lane.b32.xlu0 %v394, 24
        %v1081 = vpop.permute.xlu0 %1080
        %1082 = vrot.lane.b32.xlu0 %v395, 24
        %v1083 = vpop.permute.xlu0 %1082
        %1084 = vrot.lane.b32.xlu0 %v396, 24
        %v1085 = vpop.permute.xlu0 %1084
        %1086 = vrot.lane.b32.xlu0 %v397, 24
        %v1087 = vpop.permute.xlu0 %1086
        %1088 = vrot.lane.b32.xlu0 %v398, 24
        %v1089 = vpop.permute.xlu0 %1088
        %1090 = vrot.lane.b32.xlu0 %v399, 24
        %v1091 = vpop.permute.xlu0 %1090
        %1092 = vrot.lane.b32.xlu0 %v400, 24
        %v1093 = vpop.permute.xlu0 %1092
        %1094 = vrot.lane.b32.xlu0 %v401, 24
        %v1095 = vpop.permute.xlu0 %1094
        %1096 = vrot.lane.b32.xlu0 %v402, 24
        %v1097 = vpop.permute.xlu0 %1096
        %1098 = vrot.lane.b32.xlu0 %v403, 24
        %v1099 = vpop.permute.xlu0 %1098
        %1100 = vrot.lane.b32.xlu0 %v404, 24
        %v1101 = vpop.permute.xlu0 %1100
        %1102 = vrot.lane.b32.xlu0 %v405, 24
        %v1103 = vpop.permute.xlu0 %1102
        %1104 = vrot.lane.b32.xlu0 %v406, 24
        %v1105 = vpop.permute.xlu0 %1104
        %1106 = vrot.lane.b32.xlu0 %v407, 24
        %v1107 = vpop.permute.xlu0 %1106
        %1164 = vrot.lane.b32.xlu0 %v408, 28
        %v1165 = vpop.permute.xlu0 %1164
        %1166 = vrot.lane.b32.xlu0 %v409, 28
        %v1167 = vpop.permute.xlu0 %1166
        %1168 = vrot.lane.b32.xlu0 %v410, 28
        %v1169 = vpop.permute.xlu0 %1168
        %1170 = vrot.lane.b32.xlu0 %v411, 28
        %v1171 = vpop.permute.xlu0 %1170
        %1172 = vrot.lane.b32.xlu0 %v412, 28
        %v1173 = vpop.permute.xlu0 %1172
        %1174 = vrot.lane.b32.xlu0 %v413, 28
        %v1175 = vpop.permute.xlu0 %1174
        %1176 = vrot.lane.b32.xlu0 %v414, 28
        %v1177 = vpop.permute.xlu0 %1176
        %1178 = vrot.lane.b32.xlu0 %v415, 28
        %v1179 = vpop.permute.xlu0 %1178
        %1180 = vrot.lane.b32.xlu0 %v416, 28
        %v1181 = vpop.permute.xlu0 %1180
        %1182 = vrot.lane.b32.xlu0 %v417, 28
        %v1183 = vpop.permute.xlu0 %1182
        %1184 = vrot.lane.b32.xlu0 %v418, 28
        %v1185 = vpop.permute.xlu0 %1184
        %1186 = vrot.lane.b32.xlu0 %v419, 28
        %v1187 = vpop.permute.xlu0 %1186
        %1188 = vrot.lane.b32.xlu0 %v420, 28
        %v1189 = vpop.permute.xlu0 %1188
        %1190 = vrot.lane.b32.xlu0 %v421, 28
        %v1191 = vpop.permute.xlu0 %1190
        %1192 = vrot.lane.b32.xlu0 %v422, 28
        %v1193 = vpop.permute.xlu0 %1192
        %1194 = vrot.lane.b32.xlu0 %v423, 28
        %v1195 = vpop.permute.xlu0 %1194
        %1196 = vrot.lane.b32.xlu0 %v424, 28
        %v1197 = vpop.permute.xlu0 %1196
        %1198 = vrot.lane.b32.xlu0 %v425, 28
        %v1199 = vpop.permute.xlu0 %1198
        %1200 = vrot.lane.b32.xlu0 %v426, 28
        %v1201 = vpop.permute.xlu0 %1200
        %1202 = vrot.lane.b32.xlu0 %v427, 28
        %v1203 = vpop.permute.xlu0 %1202
        %1204 = vrot.lane.b32.xlu0 %v428, 28
        %v1205 = vpop.permute.xlu0 %1204
        %1206 = vrot.lane.b32.xlu0 %v429, 28
        %v1207 = vpop.permute.xlu0 %1206
        %1208 = vrot.lane.b32.xlu0 %v430, 28
        %v1209 = vpop.permute.xlu0 %1208
        %1210 = vrot.lane.b32.xlu0 %v431, 28
        %v1211 = vpop.permute.xlu0 %1210
        %1212 = vrot.lane.b32.xlu0 %v432, 28
        %v1213 = vpop.permute.xlu0 %1212
        %1214 = vrot.lane.b32.xlu0 %v433, 28
        %v1215 = vpop.permute.xlu0 %1214
        %1216 = vrot.lane.b32.xlu0 %v434, 28
        %v1217 = vpop.permute.xlu0 %1216
        %1218 = vrot.lane.b32.xlu0 %v435, 28
        %v1219 = vpop.permute.xlu0 %1218
        %1276 = vrot.lane.b32.xlu0 %v436, 32
        %v1277 = vpop.permute.xlu0 %1276
        %1278 = vrot.lane.b32.xlu0 %v437, 32
        %v1279 = vpop.permute.xlu0 %1278
        %1280 = vrot.lane.b32.xlu0 %v438, 32
        %v1281 = vpop.permute.xlu0 %1280
        %1282 = vrot.lane.b32.xlu0 %v439, 32
        %v1283 = vpop.permute.xlu0 %1282
        %1284 = vrot.lane.b32.xlu0 %v440, 32
        %v1285 = vpop.permute.xlu0 %1284
        %1286 = vrot.lane.b32.xlu0 %v441, 32
        %v1287 = vpop.permute.xlu0 %1286
        %1288 = vrot.lane.b32.xlu0 %v442, 32
        %v1289 = vpop.permute.xlu0 %1288
        %1290 = vrot.lane.b32.xlu0 %v443, 32
        %v1291 = vpop.permute.xlu0 %1290
        %1292 = vrot.lane.b32.xlu0 %v444, 32
        %v1293 = vpop.permute.xlu0 %1292
        %1294 = vrot.lane.b32.xlu0 %v445, 32
        %v1295 = vpop.permute.xlu0 %1294
        %1296 = vrot.lane.b32.xlu0 %v446, 32
        %v1297 = vpop.permute.xlu0 %1296
        %1298 = vrot.lane.b32.xlu0 %v447, 32
        %v1299 = vpop.permute.xlu0 %1298
        %1300 = vrot.lane.b32.xlu0 %v448, 32
        %v1301 = vpop.permute.xlu0 %1300
        %1302 = vrot.lane.b32.xlu0 %v449, 32
        %v1303 = vpop.permute.xlu0 %1302
        %1304 = vrot.lane.b32.xlu0 %v450, 32
        %v1305 = vpop.permute.xlu0 %1304
        %1306 = vrot.lane.b32.xlu0 %v451, 32
        %v1307 = vpop.permute.xlu0 %1306
        %1308 = vrot.lane.b32.xlu0 %v452, 32
        %v1309 = vpop.permute.xlu0 %1308
        %1310 = vrot.lane.b32.xlu0 %v453, 32
        %v1311 = vpop.permute.xlu0 %1310
        %1312 = vrot.lane.b32.xlu0 %v454, 32
        %v1313 = vpop.permute.xlu0 %1312
        %1314 = vrot.lane.b32.xlu0 %v455, 32
        %v1315 = vpop.permute.xlu0 %1314
        %1316 = vrot.lane.b32.xlu0 %v456, 32
        %v1317 = vpop.permute.xlu0 %1316
        %1318 = vrot.lane.b32.xlu0 %v457, 32
        %v1319 = vpop.permute.xlu0 %1318
        %1320 = vrot.lane.b32.xlu0 %v458, 32
        %v1321 = vpop.permute.xlu0 %1320
        %1322 = vrot.lane.b32.xlu0 %v459, 32
        %v1323 = vpop.permute.xlu0 %1322
        %1324 = vrot.lane.b32.xlu0 %v460, 32
        %v1325 = vpop.permute.xlu0 %1324
        %1326 = vrot.lane.b32.xlu0 %v461, 32
        %v1327 = vpop.permute.xlu0 %1326
        %1328 = vrot.lane.b32.xlu0 %v462, 32
        %v1329 = vpop.permute.xlu0 %1328
        %1330 = vrot.lane.b32.xlu0 %v463, 32
        %v1331 = vpop.permute.xlu0 %1330
        %vm1360 = vcmask 31744
        %v1361 = vsel %vm1360, %v210, %v493
        %v1362 = vsel %vm1360, %v211, %v495
        %v1363 = vsel %vm1360, %v212, %v497
        %v1364 = vsel %vm1360, %v213, %v499
        %v1365 = vsel %vm1360, %v214, %v501
        %v1366 = vsel %vm1360, %v215, %v503
        %v1367 = vsel %vm1360, %v216, %v505
        %v1368 = vsel %vm1360, %v217, %v507
        %v1369 = vsel %vm1360, %v218, %v509
        %v1370 = vsel %vm1360, %v219, %v511
        %v1371 = vsel %vm1360, %v220, %v513
        %v1372 = vsel %vm1360, %v221, %v515
        %v1373 = vsel %vm1360, %v222, %v517
        %v1374 = vsel %vm1360, %v223, %v519
        %v1375 = vsel %vm1360, %v224, %v521
        %v1376 = vsel %vm1360, %v225, %v523
        %v1377 = vsel %vm1360, %v226, %v525
        %v1378 = vsel %vm1360, %v227, %v527
        %v1379 = vsel %vm1360, %v228, %v529
        %v1380 = vsel %vm1360, %v229, %v531
        %v1381 = vsel %vm1360, %v230, %v533
        %v1382 = vsel %vm1360, %v231, %v535
        %v1383 = vsel %vm1360, %v232, %v537
        %v1384 = vsel %vm1360, %v233, %v539
        %v1385 = vsel %vm1360, %v234, %v541
        %v1386 = vsel %vm1360, %v235, %v543
        %v1387 = vsel %vm1360, %v236, %v545
        %v1388 = vsel %vm1360, %v237, %v547
        %vm1389 = vcmask 64512
        %v1390 = vsel %vm1389, %v1361, %v605
        %v1391 = vsel %vm1389, %v1362, %v607
        %v1392 = vsel %vm1389, %v1363, %v609
        %v1393 = vsel %vm1389, %v1364, %v611
        %v1394 = vsel %vm1389, %v1365, %v613
        %v1395 = vsel %vm1389, %v1366, %v615
        %v1396 = vsel %vm1389, %v1367, %v617
        %v1397 = vsel %vm1389, %v1368, %v619
        %v1398 = vsel %vm1389, %v1369, %v621
        %v1399 = vsel %vm1389, %v1370, %v623
        %v1400 = vsel %vm1389, %v1371, %v625
        %v1401 = vsel %vm1389, %v1372, %v627
        %v1402 = vsel %vm1389, %v1373, %v629
        %v1403 = vsel %vm1389, %v1374, %v631
        %v1404 = vsel %vm1389, %v1375, %v633
        %v1405 = vsel %vm1389, %v1376, %v635
        %v1406 = vsel %vm1389, %v1377, %v637
        %v1407 = vsel %vm1389, %v1378, %v639
        %v1408 = vsel %vm1389, %v1379, %v641
        %v1409 = vsel %vm1389, %v1380, %v643
        %v1410 = vsel %vm1389, %v1381, %v645
        %v1411 = vsel %vm1389, %v1382, %v647
        %v1412 = vsel %vm1389, %v1383, %v649
        %v1413 = vsel %vm1389, %v1384, %v651
        %v1414 = vsel %vm1389, %v1385, %v653
        %v1415 = vsel %vm1389, %v1386, %v655
        %v1416 = vsel %vm1389, %v1387, %v657
        %v1417 = vsel %vm1389, %v1388, %v659
        %vm1418 = vcmask 97280
        %v1419 = vsel %vm1418, %v1390, %v717
        %v1420 = vsel %vm1418, %v1391, %v719
        %v1421 = vsel %vm1418, %v1392, %v721
        %v1422 = vsel %vm1418, %v1393, %v723
        %v1423 = vsel %vm1418, %v1394, %v725
        %v1424 = vsel %vm1418, %v1395, %v727
        %v1425 = vsel %vm1418, %v1396, %v729
        %v1426 = vsel %vm1418, %v1397, %v731
        %v1427 = vsel %vm1418, %v1398, %v733
        %v1428 = vsel %vm1418, %v1399, %v735
        %v1429 = vsel %vm1418, %v1400, %v737
        %v1430 = vsel %vm1418, %v1401, %v739
        %v1431 = vsel %vm1418, %v1402, %v741
        %v1432 = vsel %vm1418, %v1403, %v743
        %v1433 = vsel %vm1418, %v1404, %v745
        %v1434 = vsel %vm1418, %v1405, %v747
        %v1435 = vsel %vm1418, %v1406, %v749
        %v1436 = vsel %vm1418, %v1407, %v751
        %v1437 = vsel %vm1418, %v1408, %v753
        %v1438 = vsel %vm1418, %v1409, %v755
        %v1439 = vsel %vm1418, %v1410, %v757
        %v1440 = vsel %vm1418, %v1411, %v759
        %v1441 = vsel %vm1418, %v1412, %v761
        %v1442 = vsel %vm1418, %v1413, %v763
        %v1443 = vsel %vm1418, %v1414, %v765
        %v1444 = vsel %vm1418, %v1415, %v767
        %v1445 = vsel %vm1418, %v1416, %v769
        %v1446 = vsel %vm1418, %v1417, %v771
        %vm1447 = vcmask 130048
        %v1448 = vsel %vm1447, %v1419, %v829
        %v1449 = vsel %vm1447, %v1420, %v831
        %v1450 = vsel %vm1447, %v1421, %v833
        %v1451 = vsel %vm1447, %v1422, %v835
        %v1452 = vsel %vm1447, %v1423, %v837
        %v1453 = vsel %vm1447, %v1424, %v839
        %v1454 = vsel %vm1447, %v1425, %v841
        %v1455 = vsel %vm1447, %v1426, %v843
        %v1456 = vsel %vm1447, %v1427, %v845
        %v1457 = vsel %vm1447, %v1428, %v847
        %v1458 = vsel %vm1447, %v1429, %v849
        %v1459 = vsel %vm1447, %v1430, %v851
        %v1460 = vsel %vm1447, %v1431, %v853
        %v1461 = vsel %vm1447, %v1432, %v855
        %v1462 = vsel %vm1447, %v1433, %v857
        %v1463 = vsel %vm1447, %v1434, %v859
        %v1464 = vsel %vm1447, %v1435, %v861
        %v1465 = vsel %vm1447, %v1436, %v863
        %v1466 = vsel %vm1447, %v1437, %v865
        %v1467 = vsel %vm1447, %v1438, %v867
        %v1468 = vsel %vm1447, %v1439, %v869
        %v1469 = vsel %vm1447, %v1440, %v871
        %v1470 = vsel %vm1447, %v1441, %v873
        %v1471 = vsel %vm1447, %v1442, %v875
        %v1472 = vsel %vm1447, %v1443, %v877
        %v1473 = vsel %vm1447, %v1444, %v879
        %v1474 = vsel %vm1447, %v1445, %v881
        %v1475 = vsel %vm1447, %v1446, %v883
        %vm1476 = vcmask 162816
        %v1477 = vsel %vm1476, %v1448, %v941
        %v1478 = vsel %vm1476, %v1449, %v943
        %v1479 = vsel %vm1476, %v1450, %v945
        %v1480 = vsel %vm1476, %v1451, %v947
        %v1481 = vsel %vm1476, %v1452, %v949
        %v1482 = vsel %vm1476, %v1453, %v951
        %v1483 = vsel %vm1476, %v1454, %v953
        %v1484 = vsel %vm1476, %v1455, %v955
        %v1485 = vsel %vm1476, %v1456, %v957
        %v1486 = vsel %vm1476, %v1457, %v959
        %v1487 = vsel %vm1476, %v1458, %v961
        %v1488 = vsel %vm1476, %v1459, %v963
        %v1489 = vsel %vm1476, %v1460, %v965
        %v1490 = vsel %vm1476, %v1461, %v967
        %v1491 = vsel %vm1476, %v1462, %v969
        %v1492 = vsel %vm1476, %v1463, %v971
        %v1493 = vsel %vm1476, %v1464, %v973
        %v1494 = vsel %vm1476, %v1465, %v975
        %v1495 = vsel %vm1476, %v1466, %v977
        %v1496 = vsel %vm1476, %v1467, %v979
        %v1497 = vsel %vm1476, %v1468, %v981
        %v1498 = vsel %vm1476, %v1469, %v983
        %v1499 = vsel %vm1476, %v1470, %v985
        %v1500 = vsel %vm1476, %v1471, %v987
        %v1501 = vsel %vm1476, %v1472, %v989
        %v1502 = vsel %vm1476, %v1473, %v991
        %v1503 = vsel %vm1476, %v1474, %v993
        %v1504 = vsel %vm1476, %v1475, %v995
        %vm1505 = vcmask 195584
        %v1506 = vsel %vm1505, %v1477, %v1053
        %v1507 = vsel %vm1505, %v1478, %v1055
        %v1508 = vsel %vm1505, %v1479, %v1057
        %v1509 = vsel %vm1505, %v1480, %v1059
        %v1510 = vsel %vm1505, %v1481, %v1061
        %v1511 = vsel %vm1505, %v1482, %v1063
        %v1512 = vsel %vm1505, %v1483, %v1065
        %v1513 = vsel %vm1505, %v1484, %v1067
        %v1514 = vsel %vm1505, %v1485, %v1069
        %v1515 = vsel %vm1505, %v1486, %v1071
        %v1516 = vsel %vm1505, %v1487, %v1073
        %v1517 = vsel %vm1505, %v1488, %v1075
        %v1518 = vsel %vm1505, %v1489, %v1077
        %v1519 = vsel %vm1505, %v1490, %v1079
        %v1520 = vsel %vm1505, %v1491, %v1081
        %v1521 = vsel %vm1505, %v1492, %v1083
        %v1522 = vsel %vm1505, %v1493, %v1085
        %v1523 = vsel %vm1505, %v1494, %v1087
        %v1524 = vsel %vm1505, %v1495, %v1089
        %v1525 = vsel %vm1505, %v1496, %v1091
        %v1526 = vsel %vm1505, %v1497, %v1093
        %v1527 = vsel %vm1505, %v1498, %v1095
        %v1528 = vsel %vm1505, %v1499, %v1097
        %v1529 = vsel %vm1505, %v1500, %v1099
        %v1530 = vsel %vm1505, %v1501, %v1101
        %v1531 = vsel %vm1505, %v1502, %v1103
        %v1532 = vsel %vm1505, %v1503, %v1105
        %v1533 = vsel %vm1505, %v1504, %v1107
        %vm1534 = vcmask 228352
        %v1535 = vsel %vm1534, %v1506, %v1165
        %v1536 = vsel %vm1534, %v1507, %v1167
        %v1537 = vsel %vm1534, %v1508, %v1169
        %v1538 = vsel %vm1534, %v1509, %v1171
        %v1539 = vsel %vm1534, %v1510, %v1173
        %v1540 = vsel %vm1534, %v1511, %v1175
        %v1541 = vsel %vm1534, %v1512, %v1177
        %v1542 = vsel %vm1534, %v1513, %v1179
        %v1543 = vsel %vm1534, %v1514, %v1181
        %v1544 = vsel %vm1534, %v1515, %v1183
        %v1545 = vsel %vm1534, %v1516, %v1185
        %v1546 = vsel %vm1534, %v1517, %v1187
        %v1547 = vsel %vm1534, %v1518, %v1189
        %v1548 = vsel %vm1534, %v1519, %v1191
        %v1549 = vsel %vm1534, %v1520, %v1193
        %v1550 = vsel %vm1534, %v1521, %v1195
        %v1551 = vsel %vm1534, %v1522, %v1197
        %v1552 = vsel %vm1534, %v1523, %v1199
        %v1553 = vsel %vm1534, %v1524, %v1201
        %v1554 = vsel %vm1534, %v1525, %v1203
        %v1555 = vsel %vm1534, %v1526, %v1205
        %v1556 = vsel %vm1534, %v1527, %v1207
        %v1557 = vsel %vm1534, %v1528, %v1209
        %v1558 = vsel %vm1534, %v1529, %v1211
        %v1559 = vsel %vm1534, %v1530, %v1213
        %v1560 = vsel %vm1534, %v1531, %v1215
        %v1561 = vsel %vm1534, %v1532, %v1217
        %v1562 = vsel %vm1534, %v1533, %v1219
        %vm1563 = vcmask 261120
        %v1564 = vsel %vm1563, %v1535, %v1277
        %v1565 = vsel %vm1563, %v1536, %v1279
        %v1566 = vsel %vm1563, %v1537, %v1281
        %v1567 = vsel %vm1563, %v1538, %v1283
        %v1568 = vsel %vm1563, %v1539, %v1285
        %v1569 = vsel %vm1563, %v1540, %v1287
        %v1570 = vsel %vm1563, %v1541, %v1289
        %v1571 = vsel %vm1563, %v1542, %v1291
        %v1572 = vsel %vm1563, %v1543, %v1293
        %v1573 = vsel %vm1563, %v1544, %v1295
        %v1574 = vsel %vm1563, %v1545, %v1297
        %v1575 = vsel %vm1563, %v1546, %v1299
        %v1576 = vsel %vm1563, %v1547, %v1301
        %v1577 = vsel %vm1563, %v1548, %v1303
        %v1578 = vsel %vm1563, %v1549, %v1305
        %v1579 = vsel %vm1563, %v1550, %v1307
        %v1580 = vsel %vm1563, %v1551, %v1309
        %v1581 = vsel %vm1563, %v1552, %v1311
        %v1582 = vsel %vm1563, %v1553, %v1313
        %v1583 = vsel %vm1563, %v1554, %v1315
        %v1584 = vsel %vm1563, %v1555, %v1317
        %v1585 = vsel %vm1563, %v1556, %v1319
        %v1586 = vsel %vm1563, %v1557, %v1321
        %v1587 = vsel %vm1563, %v1558, %v1323
        %v1588 = vsel %vm1563, %v1559, %v1325
        %v1589 = vsel %vm1563, %v1560, %v1327
        %v1590 = vsel %vm1563, %v1561, %v1329
        %v1591 = vsel %vm1563, %v1562, %v1331
        %v1592 = vpack.c.bf16 %v1564, %v1564
        %v1593 = vpack.c.bf16 %v1565, %v1565
        %v1594 = vpack.c.bf16 %v1566, %v1566
        %v1595 = vpack.c.bf16 %v1567, %v1567
        %v1596 = vpack.c.bf16 %v1568, %v1568
        %v1597 = vpack.c.bf16 %v1569, %v1569
        %v1598 = vpack.c.bf16 %v1570, %v1570
        %v1599 = vpack.c.bf16 %v1571, %v1571
        %v1600 = vpack.c.bf16 %v1572, %v1572
        %v1601 = vpack.c.bf16 %v1573, %v1573
        %v1602 = vpack.c.bf16 %v1574, %v1574
        %v1603 = vpack.c.bf16 %v1575, %v1575
        %v1604 = vpack.c.bf16 %v1576, %v1576
        %v1605 = vpack.c.bf16 %v1577, %v1577
        %v1606 = vpack.c.bf16 %v1578, %v1578
        %v1607 = vpack.c.bf16 %v1579, %v1579
        %v1608 = vpack.c.bf16 %v1580, %v1580
        %v1609 = vpack.c.bf16 %v1581, %v1581
        %v1610 = vpack.c.bf16 %v1582, %v1582
        %v1611 = vpack.c.bf16 %v1583, %v1583
        %v1612 = vpack.c.bf16 %v1584, %v1584
        %v1613 = vpack.c.bf16 %v1585, %v1585
        %v1614 = vpack.c.bf16 %v1586, %v1586
        %v1615 = vpack.c.bf16 %v1587, %v1587
        %v1616 = vpack.c.bf16 %v1588, %v1588
        %v1617 = vpack.c.bf16 %v1589, %v1589
        %v1618 = vpack.c.bf16 %v1590, %v1590
        %v1619 = vpack.c.bf16 %v1591, %v1591
        %v1620 = vld [vmem:[%s1] sm:$0xf]
        %v1621 = vld [vmem:[%s1 + $0x4] sm:$0xf]
        %v1622 = vld [vmem:[%s1 + $0x8] sm:$0xf]
        %v1623 = vld [vmem:[%s1 + $0xc] sm:$0xf]
        %v1624 = vld [vmem:[%s1 + $0x10] sm:$0x3]
        %v1625 = vld [vmem:[%s2] sm:$0x1]
        %v1627 = vperm.slane %v1625, 0
        %v1656 = vrot.slane %v1592, 3
        %v1657 = vrot.slane %v1593, 3
        %v1658 = vrot.slane %v1594, 3
        %v1659 = vrot.slane %v1595, 3
        %v1660 = vrot.slane %v1596, 3
        %v1661 = vrot.slane %v1597, 3
        %v1662 = vrot.slane %v1598, 3
        %v1663 = vrot.slane %v1599, 3
        %v1664 = vrot.slane %v1600, 3
        %v1665 = vrot.slane %v1601, 3
        %v1666 = vrot.slane %v1602, 3
        %v1667 = vrot.slane %v1603, 3
        %v1668 = vrot.slane %v1604, 3
        %v1669 = vrot.slane %v1605, 3
        %v1670 = vrot.slane %v1606, 3
        %v1671 = vrot.slane %v1607, 3
        %v1672 = vrot.slane %v1608, 3
        %v1673 = vrot.slane %v1609, 3
        %v1674 = vrot.slane %v1610, 3
        %v1675 = vrot.slane %v1611, 3
        %v1676 = vrot.slane %v1612, 3
        %v1677 = vrot.slane %v1613, 3
        %v1678 = vrot.slane %v1614, 3
        %v1679 = vrot.slane %v1615, 3
        %v1680 = vrot.slane %v1616, 3
        %v1681 = vrot.slane %v1617, 3
        %v1682 = vrot.slane %v1618, 3
        %v1683 = vrot.slane %v1619, 3
        %vm1684 = vcmask 1040384
        %v1687 = vsel %vm1684, %v1592, %v1656
        %vm1688 = vcmask 1041409
        %v1689 = vsel %vm1688, %v1592, %v1656
        %v1691 = vrot.slane %v1689, 1
        %vm1692 = vcmask 1042434
        %v1693 = vsel %vm1692, %v1592, %v1656
        %v1695 = vrot.slane %v1693, 2
        %vm1696 = vcmask 1043459
        %v1697 = vsel %vm1696, %v1592, %v1656
        %v1699 = vrot.slane %v1697, 3
        %v1702 = vsel %vm1684, %v1593, %v1657
        %v1703 = vsel %vm1688, %v1593, %v1657
        %v1705 = vrot.slane %v1703, 1
        %v1706 = vsel %vm1692, %v1593, %v1657
        %v1708 = vrot.slane %v1706, 2
        %v1711 = vsel %vm1684, %v1594, %v1658
        %v1712 = vsel %vm1688, %v1594, %v1658
        %v1714 = vrot.slane %v1712, 1
        %v1715 = vsel %vm1692, %v1594, %v1658
        %v1717 = vrot.slane %v1715, 2
        %v1718 = vsel %vm1696, %v1594, %v1658
        %v1720 = vrot.slane %v1718, 3
        %v1723 = vsel %vm1684, %v1595, %v1659
        %v1724 = vsel %vm1688, %v1595, %v1659
        %v1726 = vrot.slane %v1724, 1
        %v1727 = vsel %vm1692, %v1595, %v1659
        %v1729 = vrot.slane %v1727, 2
        %v1732 = vsel %vm1684, %v1596, %v1660
        %v1733 = vsel %vm1688, %v1596, %v1660
        %v1735 = vrot.slane %v1733, 1
        %v1736 = vsel %vm1692, %v1596, %v1660
        %v1738 = vrot.slane %v1736, 2
        %v1739 = vsel %vm1696, %v1596, %v1660
        %v1741 = vrot.slane %v1739, 3
        %v1744 = vsel %vm1684, %v1597, %v1661
        %v1745 = vsel %vm1688, %v1597, %v1661
        %v1747 = vrot.slane %v1745, 1
        %v1748 = vsel %vm1692, %v1597, %v1661
        %v1750 = vrot.slane %v1748, 2
        %v1753 = vsel %vm1684, %v1598, %v1662
        %v1754 = vsel %vm1688, %v1598, %v1662
        %v1756 = vrot.slane %v1754, 1
        %v1757 = vsel %vm1692, %v1598, %v1662
        %v1759 = vrot.slane %v1757, 2
        %v1760 = vsel %vm1696, %v1598, %v1662
        %v1762 = vrot.slane %v1760, 3
        %v1765 = vsel %vm1684, %v1599, %v1663
        %v1766 = vsel %vm1688, %v1599, %v1663
        %v1768 = vrot.slane %v1766, 1
        %v1769 = vsel %vm1692, %v1599, %v1663
        %v1771 = vrot.slane %v1769, 2
        %v1774 = vsel %vm1684, %v1600, %v1664
        %v1775 = vsel %vm1688, %v1600, %v1664
        %v1777 = vrot.slane %v1775, 1
        %v1778 = vsel %vm1692, %v1600, %v1664
        %v1780 = vrot.slane %v1778, 2
        %v1781 = vsel %vm1696, %v1600, %v1664
        %v1783 = vrot.slane %v1781, 3
        %v1786 = vsel %vm1684, %v1601, %v1665
        %v1787 = vsel %vm1688, %v1601, %v1665
        %v1789 = vrot.slane %v1787, 1
        %v1790 = vsel %vm1692, %v1601, %v1665
        %v1792 = vrot.slane %v1790, 2
        %v1795 = vsel %vm1684, %v1602, %v1666
        %v1796 = vsel %vm1688, %v1602, %v1666
        %v1798 = vrot.slane %v1796, 1
        %v1799 = vsel %vm1692, %v1602, %v1666
        %v1801 = vrot.slane %v1799, 2
        %v1802 = vsel %vm1696, %v1602, %v1666
        %v1804 = vrot.slane %v1802, 3
        %v1807 = vsel %vm1684, %v1603, %v1667
        %v1808 = vsel %vm1688, %v1603, %v1667
        %v1810 = vrot.slane %v1808, 1
        %v1811 = vsel %vm1692, %v1603, %v1667
        %v1813 = vrot.slane %v1811, 2
        %v1816 = vsel %vm1684, %v1604, %v1668
        %v1817 = vsel %vm1688, %v1604, %v1668
        %v1819 = vrot.slane %v1817, 1
        %v1820 = vsel %vm1692, %v1604, %v1668
        %v1822 = vrot.slane %v1820, 2
        %v1823 = vsel %vm1696, %v1604, %v1668
        %v1825 = vrot.slane %v1823, 3
        %v1828 = vsel %vm1684, %v1605, %v1669
        %v1829 = vsel %vm1688, %v1605, %v1669
        %v1831 = vrot.slane %v1829, 1
        %v1832 = vsel %vm1692, %v1605, %v1669
        %v1834 = vrot.slane %v1832, 2
        %v1837 = vsel %vm1684, %v1606, %v1670
        %v1838 = vsel %vm1688, %v1606, %v1670
        %v1840 = vrot.slane %v1838, 1
        %v1841 = vsel %vm1692, %v1606, %v1670
        %v1843 = vrot.slane %v1841, 2
        %v1844 = vsel %vm1696, %v1606, %v1670
        %v1846 = vrot.slane %v1844, 3
        %v1849 = vsel %vm1684, %v1607, %v1671
        %v1850 = vsel %vm1688, %v1607, %v1671
        %v1852 = vrot.slane %v1850, 1
        %v1853 = vsel %vm1692, %v1607, %v1671
        %v1855 = vrot.slane %v1853, 2
        %v1858 = vsel %vm1684, %v1608, %v1672
        %v1859 = vsel %vm1688, %v1608, %v1672
        %v1861 = vrot.slane %v1859, 1
        %v1862 = vsel %vm1692, %v1608, %v1672
        %v1864 = vrot.slane %v1862, 2
        %v1865 = vsel %vm1696, %v1608, %v1672
        %v1867 = vrot.slane %v1865, 3
        %v1870 = vsel %vm1684, %v1609, %v1673
        %v1871 = vsel %vm1688, %v1609, %v1673
        %v1873 = vrot.slane %v1871, 1
        %v1874 = vsel %vm1692, %v1609, %v1673
        %v1876 = vrot.slane %v1874, 2
        %v1879 = vsel %vm1684, %v1610, %v1674
        %v1880 = vsel %vm1688, %v1610, %v1674
        %v1882 = vrot.slane %v1880, 1
        %v1883 = vsel %vm1692, %v1610, %v1674
        %v1885 = vrot.slane %v1883, 2
        %v1886 = vsel %vm1696, %v1610, %v1674
        %v1888 = vrot.slane %v1886, 3
        %v1891 = vsel %vm1684, %v1611, %v1675
        %v1892 = vsel %vm1688, %v1611, %v1675
        %v1894 = vrot.slane %v1892, 1
        %v1895 = vsel %vm1692, %v1611, %v1675
        %v1897 = vrot.slane %v1895, 2
        %v1900 = vsel %vm1684, %v1612, %v1676
        %v1901 = vsel %vm1688, %v1612, %v1676
        %v1903 = vrot.slane %v1901, 1
        %v1904 = vsel %vm1692, %v1612, %v1676
        %v1906 = vrot.slane %v1904, 2
        %v1907 = vsel %vm1696, %v1612, %v1676
        %v1909 = vrot.slane %v1907, 3
        %v1912 = vsel %vm1684, %v1613, %v1677
        %v1913 = vsel %vm1688, %v1613, %v1677
        %v1915 = vrot.slane %v1913, 1
        %v1916 = vsel %vm1692, %v1613, %v1677
        %v1918 = vrot.slane %v1916, 2
        %v1921 = vsel %vm1684, %v1614, %v1678
        %v1922 = vsel %vm1688, %v1614, %v1678
        %v1924 = vrot.slane %v1922, 1
        %v1925 = vsel %vm1692, %v1614, %v1678
        %v1927 = vrot.slane %v1925, 2
        %v1928 = vsel %vm1696, %v1614, %v1678
        %v1930 = vrot.slane %v1928, 3
        %v1933 = vsel %vm1684, %v1615, %v1679
        %v1934 = vsel %vm1688, %v1615, %v1679
        %v1936 = vrot.slane %v1934, 1
        %v1937 = vsel %vm1692, %v1615, %v1679
        %v1939 = vrot.slane %v1937, 2
        %v1942 = vsel %vm1684, %v1616, %v1680
        %v1943 = vsel %vm1688, %v1616, %v1680
        %v1945 = vrot.slane %v1943, 1
        %v1946 = vsel %vm1692, %v1616, %v1680
        %v1948 = vrot.slane %v1946, 2
        %v1949 = vsel %vm1696, %v1616, %v1680
        %v1951 = vrot.slane %v1949, 3
        %v1954 = vsel %vm1684, %v1617, %v1681
        %v1955 = vsel %vm1688, %v1617, %v1681
        %v1957 = vrot.slane %v1955, 1
        %v1958 = vsel %vm1692, %v1617, %v1681
        %v1960 = vrot.slane %v1958, 2
        %v1963 = vsel %vm1684, %v1618, %v1682
        %v1964 = vsel %vm1688, %v1618, %v1682
        %v1966 = vrot.slane %v1964, 1
        %v1967 = vsel %vm1692, %v1618, %v1682
        %v1969 = vrot.slane %v1967, 2
        %v1970 = vsel %vm1696, %v1618, %v1682
        %v1972 = vrot.slane %v1970, 3
        %v1975 = vsel %vm1684, %v1619, %v1683
        %v1976 = vsel %vm1688, %v1619, %v1683
        %v1978 = vrot.slane %v1976, 1
        %v1979 = vsel %vm1692, %v1619, %v1683
        %v1981 = vrot.slane %v1979, 2
        %v1982 = vrot.slane %v1627, 2
        %v1983 = vrot.slane %v1627, 4
        %v1984 = vrot.slane %v1627, 6
        %1985 = vst [vmem:[#allocation1] ss:$9 sm:$0xff] %v1687
        %s1987 = scalar_lea.vmem [#allocation1], 1
        %1988 = vst [vmem:[%s1987] ss:$9 sm:$0xff] %v1691
        %s1990 = scalar_lea.vmem [#allocation1], 2
        %1991 = vst [vmem:[%s1990] ss:$9 sm:$0xff] %v1695
        %s1993 = scalar_lea.vmem [#allocation1], 3
        %1994 = vst [vmem:[%s1993] ss:$9 sm:$0xff] %v1699
        %s1995 = scalar_lea.vmem [#allocation1], 4
        %1996 = vst [vmem:[%s1995] ss:$9 sm:$0xff] %v1702
        %s1998 = scalar_lea.vmem [#allocation1], 5
        %1999 = vst [vmem:[%s1998] ss:$9 sm:$0xff] %v1705
        %s2001 = scalar_lea.vmem [#allocation1], 6
        %2002 = vst [vmem:[%s2001] ss:$9 sm:$0xff] %v1708
        %s2003 = scalar_lea.vmem [#allocation1], 7
        %2004 = vst [vmem:[%s2003] ss:$9 sm:$0xff] %v1711
        %v2005 = vld [vmem:[#allocation1] sm:$0xff]
        %2007 = vst [vmem:[#allocation1] ss:$9 sm:$0xff] %v1714
        %2009 = vst [vmem:[%s1987] ss:$9 sm:$0xff] %v1717
        %2011 = vst [vmem:[%s1990] ss:$9 sm:$0xff] %v1720
        %2012 = vst [vmem:[%s1993] ss:$9 sm:$0xff] %v1723
        %2014 = vst [vmem:[%s1995] ss:$9 sm:$0xff] %v1726
        %2016 = vst [vmem:[%s1998] ss:$9 sm:$0xff] %v1729
        %2017 = vst [vmem:[%s2001] ss:$9 sm:$0xff] %v1732
        %2019 = vst [vmem:[%s2003] ss:$9 sm:$0xff] %v1735
        %v2020 = vld [vmem:[#allocation1] sm:$0xff]
        %2022 = vst [vmem:[#allocation1] ss:$9 sm:$0xff] %v1738
        %2024 = vst [vmem:[%s1987] ss:$9 sm:$0xff] %v1741
        %2025 = vst [vmem:[%s1990] ss:$9 sm:$0xff] %v1744
        %2027 = vst [vmem:[%s1993] ss:$9 sm:$0xff] %v1747
        %2029 = vst [vmem:[%s1995] ss:$9 sm:$0xff] %v1750
        %2030 = vst [vmem:[%s1998] ss:$9 sm:$0xff] %v1753
        %2032 = vst [vmem:[%s2001] ss:$9 sm:$0xff] %v1756
        %2034 = vst [vmem:[%s2003] ss:$9 sm:$0xff] %v1759
        %v2035 = vld [vmem:[#allocation1] sm:$0xff]
        %2037 = vst [vmem:[#allocation1] ss:$9 sm:$0xff] %v1762
        %2038 = vst [vmem:[%s1987] ss:$9 sm:$0xff] %v1765
        %2040 = vst [vmem:[%s1990] ss:$9 sm:$0xff] %v1768
        %2042 = vst [vmem:[%s1993] ss:$9 sm:$0xff] %v1771
        %2043 = vst [vmem:[%s1995] ss:$9 sm:$0xff] %v1774
        %2045 = vst [vmem:[%s1998] ss:$9 sm:$0xff] %v1777
        %2047 = vst [vmem:[%s2001] ss:$9 sm:$0xff] %v1780
        %2049 = vst [vmem:[%s2003] ss:$9 sm:$0xff] %v1783
        %v2050 = vld [vmem:[#allocation1] sm:$0xff]
        %2051 = vst [vmem:[#allocation1] ss:$9 sm:$0xff] %v1786
        %2053 = vst [vmem:[%s1987] ss:$9 sm:$0xff] %v1789
        %2055 = vst [vmem:[%s1990] ss:$9 sm:$0xff] %v1792
        %2056 = vst [vmem:[%s1993] ss:$9 sm:$0xff] %v1795
        %2058 = vst [vmem:[%s1995] ss:$9 sm:$0xff] %v1798
        %2060 = vst [vmem:[%s1998] ss:$9 sm:$0xff] %v1801
        %2062 = vst [vmem:[%s2001] ss:$9 sm:$0xff] %v1804
        %2063 = vst [vmem:[%s2003] ss:$9 sm:$0xff] %v1807
        %v2064 = vld [vmem:[#allocation1] sm:$0xff]
        %2066 = vst [vmem:[#allocation1] ss:$9 sm:$0xff] %v1810
        %2068 = vst [vmem:[%s1987] ss:$9 sm:$0xff] %v1813
        %2069 = vst [vmem:[%s1990] ss:$9 sm:$0xff] %v1816
        %2071 = vst [vmem:[%s1993] ss:$9 sm:$0xff] %v1819
        %2073 = vst [vmem:[%s1995] ss:$9 sm:$0xff] %v1822
        %2075 = vst [vmem:[%s1998] ss:$9 sm:$0xff] %v1825
        %2076 = vst [vmem:[%s2001] ss:$9 sm:$0xff] %v1828
        %2078 = vst [vmem:[%s2003] ss:$9 sm:$0xff] %v1831
        %v2079 = vld [vmem:[#allocation1] sm:$0xff]
        %2081 = vst [vmem:[#allocation1] ss:$9 sm:$0xff] %v1834
        %2082 = vst [vmem:[%s1987] ss:$9 sm:$0xff] %v1837
        %2084 = vst [vmem:[%s1990] ss:$9 sm:$0xff] %v1840
        %2086 = vst [vmem:[%s1993] ss:$9 sm:$0xff] %v1843
        %2088 = vst [vmem:[%s1995] ss:$9 sm:$0xff] %v1846
        %2089 = vst [vmem:[%s1998] ss:$9 sm:$0xff] %v1849
        %2091 = vst [vmem:[%s2001] ss:$9 sm:$0xff] %v1852
        %2093 = vst [vmem:[%s2003] ss:$9 sm:$0xff] %v1855
        %v2094 = vld [vmem:[#allocation1] sm:$0xff]
        %2095 = vst [vmem:[#allocation1] ss:$9 sm:$0xff] %v1858
        %2097 = vst [vmem:[%s1987] ss:$9 sm:$0xff] %v1861
        %2099 = vst [vmem:[%s1990] ss:$9 sm:$0xff] %v1864
        %2101 = vst [vmem:[%s1993] ss:$9 sm:$0xff] %v1867
        %2102 = vst [vmem:[%s1995] ss:$9 sm:$0xff] %v1870
        %2104 = vst [vmem:[%s1998] ss:$9 sm:$0xff] %v1873
        %2106 = vst [vmem:[%s2001] ss:$9 sm:$0xff] %v1876
        %2107 = vst [vmem:[%s2003] ss:$9 sm:$0xff] %v1879
        %v2108 = vld [vmem:[#allocation1] sm:$0xff]
        %2110 = vst [vmem:[#allocation1] ss:$9 sm:$0xff] %v1882
        %2112 = vst [vmem:[%s1987] ss:$9 sm:$0xff] %v1885
        %2114 = vst [vmem:[%s1990] ss:$9 sm:$0xff] %v1888
        %2115 = vst [vmem:[%s1993] ss:$9 sm:$0xff] %v1891
        %2117 = vst [vmem:[%s1995] ss:$9 sm:$0xff] %v1894
        %2119 = vst [vmem:[%s1998] ss:$9 sm:$0xff] %v1897
        %2120 = vst [vmem:[%s2001] ss:$9 sm:$0xff] %v1900
        %2122 = vst [vmem:[%s2003] ss:$9 sm:$0xff] %v1903
        %v2123 = vld [vmem:[#allocation1] sm:$0xff]
        %2125 = vst [vmem:[#allocation1] ss:$9 sm:$0xff] %v1906
        %2127 = vst [vmem:[%s1987] ss:$9 sm:$0xff] %v1909
        %2128 = vst [vmem:[%s1990] ss:$9 sm:$0xff] %v1912
        %2130 = vst [vmem:[%s1993] ss:$9 sm:$0xff] %v1915
        %2132 = vst [vmem:[%s1995] ss:$9 sm:$0xff] %v1918
        %2133 = vst [vmem:[%s1998] ss:$9 sm:$0xff] %v1921
        %2135 = vst [vmem:[%s2001] ss:$9 sm:$0xff] %v1924
        %2137 = vst [vmem:[%s2003] ss:$9 sm:$0xff] %v1927
        %v2138 = vld [vmem:[#allocation1] sm:$0xff]
        %2140 = vst [vmem:[#allocation1] ss:$9 sm:$0xff] %v1930
        %2141 = vst [vmem:[%s1987] ss:$9 sm:$0xff] %v1933
        %2143 = vst [vmem:[%s1990] ss:$9 sm:$0xff] %v1936
        %2145 = vst [vmem:[%s1993] ss:$9 sm:$0xff] %v1939
        %2146 = vst [vmem:[%s1995] ss:$9 sm:$0xff] %v1942
        %2148 = vst [vmem:[%s1998] ss:$9 sm:$0xff] %v1945
        %2150 = vst [vmem:[%s2001] ss:$9 sm:$0xff] %v1948
        %2152 = vst [vmem:[%s2003] ss:$9 sm:$0xff] %v1951
        %v2153 = vld [vmem:[#allocation1] sm:$0xff]
        %2154 = vst [vmem:[#allocation1] ss:$9 sm:$0xff] %v1954
        %2156 = vst [vmem:[%s1987] ss:$9 sm:$0xff] %v1957
        %2158 = vst [vmem:[%s1990] ss:$9 sm:$0xff] %v1960
        %2159 = vst [vmem:[%s1993] ss:$9 sm:$0xff] %v1963
        %2161 = vst [vmem:[%s1995] ss:$9 sm:$0xff] %v1966
        %2163 = vst [vmem:[%s1998] ss:$9 sm:$0xff] %v1969
        %2165 = vst [vmem:[%s2001] ss:$9 sm:$0xff] %v1972
        %2166 = vst [vmem:[%s2003] ss:$9 sm:$0xff] %v1975
        %v2167 = vld [vmem:[#allocation1] sm:$0xff]
        %2169 = vst [vmem:[#allocation1] ss:$9 sm:$0xff] %v1978
        %2171 = vst [vmem:[%s1987] ss:$9 sm:$0xff] %v1981
        %v2172 = vld [vmem:[#allocation1] sm:$0xff]
        %v2178 = vunpack.c.l.b16 %v1620
        %v2179 = vunpack.c.l.b16 %v1621
        %v2180 = vunpack.c.l.b16 %v1622
        %v2181 = vunpack.c.l.b16 %v1623
        %v2182 = vunpack.c.l.b16 %v1624
        %v2183 = vpack.c.b16 %v2179, %v2178
        %v2184 = vpack.c.b16 %v2181, %v2180
        %v2185 = vpack.c.b16 %v2182, %v2182
        %2188 = vst [vmem:[#allocation1] ss:$4 sm:$0xff] %v1627
        %s2189 = scalar_lea.vmem [#allocation1], 1
        %2190 = vst [vmem:[%s2189] ss:$4 sm:$0xff] %v1982
        %s2191 = scalar_lea.vmem [#allocation1], 2
        %2192 = vst [vmem:[%s2191] ss:$4 sm:$0xff] %v1983
        %s2193 = scalar_lea.vmem [#allocation1], 3
        %2194 = vst [vmem:[%s2193] ss:$4 sm:$0xff] %v1984
        %s2195 = scalar_lea.vmem [#allocation1], 32
        %2196 = vst [vmem:[%s2195] ss:$4 sm:$0xff] %v1627
        %s2197 = scalar_lea.vmem [#allocation1], 33
        %2198 = vst [vmem:[%s2197] ss:$4 sm:$0xff] %v1982
        %s2199 = scalar_lea.vmem [#allocation1], 34
        %2200 = vst [vmem:[%s2199] ss:$4 sm:$0xff] %v1983
        %s2201 = scalar_lea.vmem [#allocation1], 35
        %2202 = vst [vmem:[%s2201] ss:$4 sm:$0xff] %v1627
        %v2203 = vld.sshfl [vmem:[#allocation1] sm:$0xff pattern:$0x73625140]
        %v2204 = vld.sshfl [vmem:[#allocation1 + $0x20] sm:$0xff pattern:$0x73625140]
        %2205 = vst [vmem:[#allocation1] ss:$4 sm:$0xff] %v1982
        %2206 = vst [vmem:[%s2189] ss:$4 sm:$0xff] %v1983
        %2207 = vst [vmem:[%s2191] ss:$4 sm:$0xff] %v1984
        %2208 = vst [vmem:[%s2193] ss:$4 sm:$0xff] %v1627
        %2209 = vst [vmem:[%s2195] ss:$4 sm:$0xff] %v1982
        %2210 = vst [vmem:[%s2197] ss:$4 sm:$0xff] %v1983
        %2211 = vst [vmem:[%s2199] ss:$4 sm:$0xff] %v1627
        %2212 = vst [vmem:[%s2201] ss:$4 sm:$0xff] %v1982
        %v2213 = vld.sshfl [vmem:[#allocation1] sm:$0xff pattern:$0x73625140]
        %v2214 = vld.sshfl [vmem:[#allocation1 + $0x20] sm:$0xff pattern:$0x73625140]
        %2215 = vst [vmem:[#allocation1] ss:$4 sm:$0xff] %v1983
        %2216 = vst [vmem:[%s2189] ss:$4 sm:$0xff] %v1984
        %2217 = vst [vmem:[%s2191] ss:$4 sm:$0xff] %v1627
        %2218 = vst [vmem:[%s2193] ss:$4 sm:$0xff] %v1982
        %2219 = vst [vmem:[%s2195] ss:$4 sm:$0xff] %v1983
        %2220 = vst [vmem:[%s2197] ss:$4 sm:$0xff] %v1627
        %2221 = vst [vmem:[%s2199] ss:$4 sm:$0xff] %v1982
        %2222 = vst [vmem:[%s2201] ss:$4 sm:$0xff] %v1983
        %v2223 = vld.sshfl [vmem:[#allocation1] sm:$0xff pattern:$0x73625140]
        %v2224 = vld.sshfl [vmem:[#allocation1 + $0x20] sm:$0xff pattern:$0x73625140]
        %2225 = vst [vmem:[#allocation1] ss:$4 sm:$0xff] %v1984
        %2226 = vst [vmem:[%s2189] ss:$4 sm:$0xff] %v1627
        %2227 = vst [vmem:[%s2191] ss:$4 sm:$0xff] %v1982
        %2228 = vst [vmem:[%s2193] ss:$4 sm:$0xff] %v1983
        %2229 = vst [vmem:[%s2195] ss:$4 sm:$0xff] %v1627
        %2230 = vst [vmem:[%s2197] ss:$4 sm:$0xff] %v1982
        %2231 = vst [vmem:[%s2199] ss:$4 sm:$0xff] %v1983
        %2232 = vst [vmem:[%s2201] ss:$4 sm:$0xff] %v1984
        %v2233 = vld.sshfl [vmem:[#allocation1] sm:$0xff pattern:$0x73625140]
        %v2234 = vld.sshfl [vmem:[#allocation1 + $0x20] sm:$0xff pattern:$0x73625140]
        %2235 = vst [vmem:[#allocation1] ss:$4 sm:$0xff] %v1627
        %2236 = vst [vmem:[%s2189] ss:$4 sm:$0xff] %v1982
        %2237 = vst [vmem:[%s2191] ss:$4 sm:$0xff] %v1983
        %2238 = vst [vmem:[%s2193] ss:$4 sm:$0xff] %v1627
        %2239 = vst [vmem:[%s2195] ss:$4 sm:$0xff] %v1982
        %2240 = vst [vmem:[%s2197] ss:$4 sm:$0xff] %v1983
        %2241 = vst [vmem:[%s2199] ss:$4 sm:$0xff] %v1984
        %2242 = vst [vmem:[%s2201] ss:$4 sm:$0xff] %v1627
        %v2243 = vld.sshfl [vmem:[#allocation1] sm:$0xff pattern:$0x73625140]
        %v2244 = vld.sshfl [vmem:[#allocation1 + $0x20] sm:$0xff pattern:$0x73625140]
        %2245 = vst [vmem:[#allocation1] ss:$4 sm:$0xff] %v1982
        %2246 = vst [vmem:[%s2189] ss:$4 sm:$0xff] %v1983
        %2247 = vst [vmem:[%s2191] ss:$4 sm:$0xff] %v1627
        %2248 = vst [vmem:[%s2193] ss:$4 sm:$0xff] %v1982
        %2249 = vst [vmem:[%s2195] ss:$4 sm:$0xff] %v1983
        %2250 = vst [vmem:[%s2197] ss:$4 sm:$0xff] %v1984
        %2251 = vst [vmem:[%s2199] ss:$4 sm:$0xff] %v1627
        %2252 = vst [vmem:[%s2201] ss:$4 sm:$0xff] %v1982
        %v2253 = vld.sshfl [vmem:[#allocation1] sm:$0xff pattern:$0x73625140]
        %v2254 = vld.sshfl [vmem:[#allocation1 + $0x20] sm:$0xff pattern:$0x73625140]
        %2255 = vst [vmem:[#allocation1] ss:$4 sm:$0xff] %v1983
        %2256 = vst [vmem:[%s2189] ss:$4 sm:$0xff] %v1627
        %2257 = vst [vmem:[%s2191] ss:$4 sm:$0xff] %v1982
        %2258 = vst [vmem:[%s2193] ss:$4 sm:$0xff] %v1983
        %2259 = vst [vmem:[%s2195] ss:$4 sm:$0xff] %v1984
        %2260 = vst [vmem:[%s2197] ss:$4 sm:$0xff] %v1627
        %2261 = vst [vmem:[%s2199] ss:$4 sm:$0xff] %v1982
        %2262 = vst [vmem:[%s2201] ss:$4 sm:$0xff] %v1983
        %v2263 = vld.sshfl [vmem:[#allocation1] sm:$0xff pattern:$0x73625140]
        %v2264 = vld.sshfl [vmem:[#allocation1 + $0x20] sm:$0xff pattern:$0x73625140]
        %2265 = vst [vmem:[#allocation1] ss:$4 sm:$0xff] %v1627
        %2266 = vst [vmem:[%s2189] ss:$4 sm:$0xff] %v1982
        %2267 = vst [vmem:[%s2191] ss:$4 sm:$0xff] %v1983
        %2268 = vst [vmem:[%s2193] ss:$4 sm:$0xff] %v1984
        %2269 = vst [vmem:[%s2195] ss:$4 sm:$0xff] %v1627
        %2270 = vst [vmem:[%s2197] ss:$4 sm:$0xff] %v1982
        %2271 = vst [vmem:[%s2199] ss:$4 sm:$0xff] %v1983
        %2272 = vst [vmem:[%s2201] ss:$4 sm:$0xff] %v1627
        %v2273 = vld.sshfl [vmem:[#allocation1] sm:$0xff pattern:$0x73625140]
        %v2274 = vld.sshfl [vmem:[#allocation1 + $0x20] sm:$0xff pattern:$0x73625140]
        %2275 = vst [vmem:[#allocation1] ss:$4 sm:$0xff] %v1982
        %2276 = vst [vmem:[%s2189] ss:$4 sm:$0xff] %v1983
        %2277 = vst [vmem:[%s2191] ss:$4 sm:$0xff] %v1984
        %2278 = vst [vmem:[%s2193] ss:$4 sm:$0xff] %v1627
        %2279 = vst [vmem:[%s2195] ss:$4 sm:$0xff] %v1982
        %2280 = vst [vmem:[%s2197] ss:$4 sm:$0xff] %v1983
        %2281 = vst [vmem:[%s2199] ss:$4 sm:$0xff] %v1627
        %2282 = vst [vmem:[%s2201] ss:$4 sm:$0xff] %v1982
        %v2283 = vld.sshfl [vmem:[#allocation1] sm:$0xff pattern:$0x73625140]
        %v2284 = vld.sshfl [vmem:[#allocation1 + $0x20] sm:$0xff pattern:$0x73625140]
        %2285 = vst [vmem:[#allocation1] ss:$4 sm:$0xff] %v1983
        %2286 = vst [vmem:[%s2189] ss:$4 sm:$0xff] %v1984
        %2287 = vst [vmem:[%s2191] ss:$4 sm:$0xff] %v1627
        %2288 = vst [vmem:[%s2193] ss:$4 sm:$0xff] %v1982
        %2289 = vst [vmem:[%s2195] ss:$4 sm:$0xff] %v1983
        %2290 = vst [vmem:[%s2197] ss:$4 sm:$0xff] %v1627
        %2291 = vst [vmem:[%s2199] ss:$4 sm:$0xff] %v1982
        %2292 = vst [vmem:[%s2201] ss:$4 sm:$0xff] %v1983
        %v2293 = vld.sshfl [vmem:[#allocation1] sm:$0xff pattern:$0x73625140]
        %v2294 = vld.sshfl [vmem:[#allocation1 + $0x20] sm:$0xff pattern:$0x73625140]
        %2295 = vst [vmem:[#allocation1] ss:$4 sm:$0xff] %v1984
        %2296 = vst [vmem:[%s2189] ss:$4 sm:$0xff] %v1627
        %2297 = vst [vmem:[%s2191] ss:$4 sm:$0xff] %v1982
        %2298 = vst [vmem:[%s2193] ss:$4 sm:$0xff] %v1983
        %2299 = vst [vmem:[%s2195] ss:$4 sm:$0xff] %v1627
        %2300 = vst [vmem:[%s2197] ss:$4 sm:$0xff] %v1982
        %2301 = vst [vmem:[%s2199] ss:$4 sm:$0xff] %v1983
        %2302 = vst [vmem:[%s2201] ss:$4 sm:$0xff] %v1984
        %v2303 = vld.sshfl [vmem:[#allocation1] sm:$0xff pattern:$0x73625140]
        %v2304 = vld.sshfl [vmem:[#allocation1 + $0x20] sm:$0xff pattern:$0x73625140]
        %2305 = vst [vmem:[#allocation1] ss:$4 sm:$0xff] %v1627
        %2306 = vst [vmem:[%s2189] ss:$4 sm:$0xff] %v1982
        %2307 = vst [vmem:[%s2191] ss:$4 sm:$0xff] %v1983
        %2308 = vst [vmem:[%s2193] ss:$4 sm:$0xff] %v1627
        %2309 = vst [vmem:[%s2195] ss:$4 sm:$0xff] %v1982
        %2310 = vst [vmem:[%s2197] ss:$4 sm:$0xff] %v1983
        %2311 = vst [vmem:[%s2199] ss:$4 sm:$0xff] %v1984
        %2312 = vst [vmem:[%s2201] ss:$4 sm:$0xff] %v1627
        %v2313 = vld.sshfl [vmem:[#allocation1] sm:$0xff pattern:$0x73625140]
        %v2314 = vld.sshfl [vmem:[#allocation1 + $0x20] sm:$0xff pattern:$0x73625140]
        %2315 = vst [vmem:[#allocation1] ss:$4 sm:$0xff] %v1982
        %2316 = vst [vmem:[%s2189] ss:$4 sm:$0xff] %v1983
        %v2317 = vld.sshfl [vmem:[#allocation1] sm:$0xff pattern:$0x73625140]
        %vm2343 = vcmask 293888
        %v2344 = vsel %vm2343, %v2005, 0
        %v2346 = vsel %vm2343, %v2020, 0
        %v2348 = vsel %vm2343, %v2035, 0
        %v2350 = vsel %vm2343, %v2050, 0
        %v2352 = vsel %vm2343, %v2064, 0
        %v2354 = vsel %vm2343, %v2079, 0
        %v2356 = vsel %vm2343, %v2094, 0
        %v2358 = vsel %vm2343, %v2108, 0
        %v2360 = vsel %vm2343, %v2123, 0
        %v2362 = vsel %vm2343, %v2138, 0
        %v2364 = vsel %vm2343, %v2153, 0
        %v2366 = vsel %vm2343, %v2167, 0
        %v2368 = vsel %vm2343, %v2172, 0
        %vm2370 = vcmask 1041408
        %v2372 = vsel %vm2370, %v2185, 0
        %2374 = vmatpush.bf16.msra.mxu0 0
        %2375 = vmatpush.bf16.msra.mxu0 0
        %2376 = vmatpush.bf16.msra.mxu0 0
        %2377 = vmatpush.bf16.msra.mxu0 0
        %2378 = vmatpush.bf16.msra.mxu0 0
        %2379 = vmatpush.bf16.msra.mxu0 %v2372
        %2380 = vmatpush.bf16.msra.mxu0 %v2184
        %2381 = vmatpush.bf16.msra.mxu0 %v2183
        %2382 = vmatmul.bf16.gmra.mxu0 %v2344
        %v2383 = vpop.f32.mrf.mxu0
        %v2384 = vadd.f32 %v2203, %v2383
        %v2385 = vpop.f32.mrf.mxu0
        %v2386 = vadd.f32 %v2204, %v2385
        %2387 = vmatmul.bf16.gmra.mxu0 %v2346
        %v2388 = vpop.f32.mrf.mxu0
        %v2389 = vadd.f32 %v2213, %v2388
        %v2390 = vpop.f32.mrf.mxu0
        %v2391 = vadd.f32 %v2214, %v2390
        %2392 = vmatmul.bf16.gmra.mxu0 %v2348
        %v2393 = vpop.f32.mrf.mxu0
        %v2394 = vadd.f32 %v2223, %v2393
        %v2395 = vpop.f32.mrf.mxu0
        %v2396 = vadd.f32 %v2224, %v2395
        %2397 = vmatmul.bf16.gmra.mxu0 %v2350
        %v2398 = vpop.f32.mrf.mxu0
        %v2399 = vadd.f32 %v2233, %v2398
        %v2400 = vpop.f32.mrf.mxu0
        %v2401 = vadd.f32 %v2234, %v2400
        %2402 = vmatmul.bf16.gmra.mxu0 %v2352
        %v2403 = vpop.f32.mrf.mxu0
        %v2404 = vadd.f32 %v2243, %v2403
        %v2405 = vpop.f32.mrf.mxu0
        %v2406 = vadd.f32 %v2244, %v2405
        %2407 = vmatmul.bf16.gmra.mxu0 %v2354
        %v2408 = vpop.f32.mrf.mxu0
        %v2409 = vadd.f32 %v2253, %v2408
        %v2410 = vpop.f32.mrf.mxu0
        %v2411 = vadd.f32 %v2254, %v2410
        %2412 = vmatmul.bf16.gmra.mxu0 %v2356
        %v2413 = vpop.f32.mrf.mxu0
        %v2414 = vadd.f32 %v2263, %v2413
        %v2415 = vpop.f32.mrf.mxu0
        %v2416 = vadd.f32 %v2264, %v2415
        %2417 = vmatmul.bf16.gmra.mxu0 %v2358
        %v2418 = vpop.f32.mrf.mxu0
        %v2419 = vadd.f32 %v2273, %v2418
        %v2420 = vpop.f32.mrf.mxu0
        %v2421 = vadd.f32 %v2274, %v2420
        %2422 = vmatmul.bf16.gmra.mxu0 %v2360
        %v2423 = vpop.f32.mrf.mxu0
        %v2424 = vadd.f32 %v2283, %v2423
        %v2425 = vpop.f32.mrf.mxu0
        %v2426 = vadd.f32 %v2284, %v2425
        %2427 = vmatmul.bf16.gmra.mxu0 %v2362
        %v2428 = vpop.f32.mrf.mxu0
        %v2429 = vadd.f32 %v2293, %v2428
        %v2430 = vpop.f32.mrf.mxu0
        %v2431 = vadd.f32 %v2294, %v2430
        %2432 = vmatmul.bf16.gmra.mxu0 %v2364
        %v2433 = vpop.f32.mrf.mxu0
        %v2434 = vadd.f32 %v2303, %v2433
        %v2435 = vpop.f32.mrf.mxu0
        %v2436 = vadd.f32 %v2304, %v2435
        %2437 = vmatmul.bf16.gmra.mxu0 %v2366
        %v2438 = vpop.f32.mrf.mxu0
        %v2439 = vadd.f32 %v2313, %v2438
        %v2440 = vpop.f32.mrf.mxu0
        %v2441 = vadd.f32 %v2314, %v2440
        %2442 = vmatmul.bf16.gmra.mxu0 %v2368
        %v2443 = vpop.f32.mrf.mxu0
        %v2444 = vadd.f32 %v2317, %v2443
        %v2445 = vpop.f32.mrf.mxu0
        %2446 = vdwg.mxu0
        %v2472 = vrot.slane %v2384, 2
        %v2473 = vrot.slane %v2384, 4
        %v2474 = vrot.slane %v2384, 6
        %v2475 = vrot.slane %v2386, 2
        %v2476 = vrot.slane %v2386, 4
        %v2477 = vrot.slane %v2386, 6
        %v2478 = vrot.slane %v2389, 2
        %v2479 = vrot.slane %v2389, 4
        %v2480 = vrot.slane %v2389, 6
        %v2481 = vrot.slane %v2391, 2
        %v2482 = vrot.slane %v2391, 4
        %v2483 = vrot.slane %v2391, 6
        %v2484 = vrot.slane %v2394, 2
        %v2485 = vrot.slane %v2394, 4
        %v2486 = vrot.slane %v2394, 6
        %v2487 = vrot.slane %v2396, 2
        %v2488 = vrot.slane %v2396, 4
        %v2489 = vrot.slane %v2396, 6
        %v2490 = vrot.slane %v2399, 2
        %v2491 = vrot.slane %v2399, 4
        %v2492 = vrot.slane %v2399, 6
        %v2493 = vrot.slane %v2401, 2
        %v2494 = vrot.slane %v2401, 4
        %v2495 = vrot.slane %v2401, 6
        %v2496 = vrot.slane %v2404, 2
        %v2497 = vrot.slane %v2404, 4
        %v2498 = vrot.slane %v2404, 6
        %v2499 = vrot.slane %v2406, 2
        %v2500 = vrot.slane %v2406, 4
        %v2501 = vrot.slane %v2406, 6
        %v2502 = vrot.slane %v2409, 2
        %v2503 = vrot.slane %v2409, 4
        %v2504 = vrot.slane %v2409, 6
        %v2505 = vrot.slane %v2411, 2
        %v2506 = vrot.slane %v2411, 4
        %v2507 = vrot.slane %v2411, 6
        %v2508 = vrot.slane %v2414, 2
        %v2509 = vrot.slane %v2414, 4
        %v2510 = vrot.slane %v2414, 6
        %v2511 = vrot.slane %v2416, 2
        %v2512 = vrot.slane %v2416, 4
        %v2513 = vrot.slane %v2416, 6
        %v2514 = vrot.slane %v2419, 2
        %v2515 = vrot.slane %v2419, 4
        %v2516 = vrot.slane %v2419, 6
        %v2517 = vrot.slane %v2421, 2
        %v2518 = vrot.slane %v2421, 4
        %v2519 = vrot.slane %v2421, 6
        %v2520 = vrot.slane %v2424, 2
        %v2521 = vrot.slane %v2424, 4
        %v2522 = vrot.slane %v2424, 6
        %v2523 = vrot.slane %v2426, 2
        %v2524 = vrot.slane %v2426, 4
        %v2525 = vrot.slane %v2426, 6
        %v2526 = vrot.slane %v2429, 2
        %v2527 = vrot.slane %v2429, 4
        %v2528 = vrot.slane %v2429, 6
        %v2529 = vrot.slane %v2431, 2
        %v2530 = vrot.slane %v2431, 4
        %v2531 = vrot.slane %v2431, 6
        %v2532 = vrot.slane %v2434, 2
        %v2533 = vrot.slane %v2434, 4
        %v2534 = vrot.slane %v2434, 6
        %v2535 = vrot.slane %v2436, 2
        %v2536 = vrot.slane %v2436, 4
        %v2537 = vrot.slane %v2436, 6
        %v2538 = vrot.slane %v2439, 2
        %v2539 = vrot.slane %v2439, 4
        %v2540 = vrot.slane %v2439, 6
        %v2541 = vrot.slane %v2441, 2
        %v2542 = vrot.slane %v2441, 4
        %v2543 = vrot.slane %v2441, 6
        %v2544 = vrot.slane %v2444, 2
        %v2618 = vmax.f32 %v2384, 0.0
        %v2619 = vmax.f32 %v2472, 0.0
        %v2620 = vmax.f32 %v2473, 0.0
        %v2621 = vmax.f32 %v2474, 0.0
        %v2622 = vmax.f32 %v2386, 0.0
        %v2623 = vmax.f32 %v2475, 0.0
        %v2624 = vmax.f32 %v2476, 0.0
        %v2625 = vmax.f32 %v2477, 0.0
        %v2626 = vmax.f32 %v2389, 0.0
        %v2627 = vmax.f32 %v2478, 0.0
        %v2628 = vmax.f32 %v2479, 0.0
        %v2629 = vmax.f32 %v2480, 0.0
        %v2630 = vmax.f32 %v2391, 0.0
        %v2631 = vmax.f32 %v2481, 0.0
        %v2632 = vmax.f32 %v2482, 0.0
        %v2633 = vmax.f32 %v2483, 0.0
        %v2634 = vmax.f32 %v2394, 0.0
        %v2635 = vmax.f32 %v2484, 0.0
        %v2636 = vmax.f32 %v2485, 0.0
        %v2637 = vmax.f32 %v2486, 0.0
        %v2638 = vmax.f32 %v2396, 0.0
        %v2639 = vmax.f32 %v2487, 0.0
        %v2640 = vmax.f32 %v2488, 0.0
        %v2641 = vmax.f32 %v2489, 0.0
        %v2642 = vmax.f32 %v2399, 0.0
        %v2643 = vmax.f32 %v2490, 0.0
        %v2644 = vmax.f32 %v2491, 0.0
        %v2645 = vmax.f32 %v2492, 0.0
        %v2646 = vmax.f32 %v2401, 0.0
        %v2647 = vmax.f32 %v2493, 0.0
        %v2648 = vmax.f32 %v2494, 0.0
        %v2649 = vmax.f32 %v2495, 0.0
        %v2650 = vmax.f32 %v2404, 0.0
        %v2651 = vmax.f32 %v2496, 0.0
        %v2652 = vmax.f32 %v2497, 0.0
        %v2653 = vmax.f32 %v2498, 0.0
        %v2654 = vmax.f32 %v2406, 0.0
        %v2655 = vmax.f32 %v2499, 0.0
        %v2656 = vmax.f32 %v2500, 0.0
        %v2657 = vmax.f32 %v2501, 0.0
        %v2658 = vmax.f32 %v2409, 0.0
        %v2659 = vmax.f32 %v2502, 0.0
        %v2660 = vmax.f32 %v2503, 0.0
        %v2661 = vmax.f32 %v2504, 0.0
        %v2662 = vmax.f32 %v2411, 0.0
        %v2663 = vmax.f32 %v2505, 0.0
        %v2664 = vmax.f32 %v2506, 0.0
        %v2665 = vmax.f32 %v2507, 0.0
        %v2666 = vmax.f32 %v2414, 0.0
        %v2667 = vmax.f32 %v2508, 0.0
        %v2668 = vmax.f32 %v2509, 0.0
        %v2669 = vmax.f32 %v2510, 0.0
        %v2670 = vmax.f32 %v2416, 0.0
        %v2671 = vmax.f32 %v2511, 0.0
        %v2672 = vmax.f32 %v2512, 0.0
        %v2673 = vmax.f32 %v2513, 0.0
        %v2674 = vmax.f32 %v2419, 0.0
        %v2675 = vmax.f32 %v2514, 0.0
        %v2676 = vmax.f32 %v2515, 0.0
        %v2677 = vmax.f32 %v2516, 0.0
        %v2678 = vmax.f32 %v2421, 0.0
        %v2679 = vmax.f32 %v2517, 0.0
        %v2680 = vmax.f32 %v2518, 0.0
        %v2681 = vmax.f32 %v2519, 0.0
        %v2682 = vmax.f32 %v2424, 0.0
        %v2683 = vmax.f32 %v2520, 0.0
        %v2684 = vmax.f32 %v2521, 0.0
        %v2685 = vmax.f32 %v2522, 0.0
        %v2686 = vmax.f32 %v2426, 0.0
        %v2687 = vmax.f32 %v2523, 0.0
        %v2688 = vmax.f32 %v2524, 0.0
        %v2689 = vmax.f32 %v2525, 0.0
        %v2690 = vmax.f32 %v2429, 0.0
        %v2691 = vmax.f32 %v2526, 0.0
        %v2692 = vmax.f32 %v2527, 0.0
        %v2693 = vmax.f32 %v2528, 0.0
        %v2694 = vmax.f32 %v2431, 0.0
        %v2695 = vmax.f32 %v2529, 0.0
        %v2696 = vmax.f32 %v2530, 0.0
        %v2697 = vmax.f32 %v2531, 0.0
        %v2698 = vmax.f32 %v2434, 0.0
        %v2699 = vmax.f32 %v2532, 0.0
        %v2700 = vmax.f32 %v2533, 0.0
        %v2701 = vmax.f32 %v2534, 0.0
        %v2702 = vmax.f32 %v2436, 0.0
        %v2703 = vmax.f32 %v2535, 0.0
        %v2704 = vmax.f32 %v2536, 0.0
        %v2705 = vmax.f32 %v2537, 0.0
        %v2706 = vmax.f32 %v2439, 0.0
        %v2707 = vmax.f32 %v2538, 0.0
        %v2708 = vmax.f32 %v2539, 0.0
        %v2709 = vmax.f32 %v2540, 0.0
        %v2710 = vmax.f32 %v2441, 0.0
        %v2711 = vmax.f32 %v2541, 0.0
        %v2712 = vmax.f32 %v2542, 0.0
        %v2713 = vmax.f32 %v2543, 0.0
        %v2714 = vmax.f32 %v2444, 0.0
        %v2715 = vmax.f32 %v2544, 0.0
        %2814 = vst [vmem:[#allocation1] ss:$4 sm:$0xff] %v2618
        %s2815 = scalar_lea.vmem [#allocation1], 1
        %2816 = vst [vmem:[%s2815] ss:$4 sm:$0xff] %v2619
        %s2817 = scalar_lea.vmem [#allocation1], 2
        %2818 = vst [vmem:[%s2817] ss:$4 sm:$0xff] %v2620
        %s2819 = scalar_lea.vmem [#allocation1], 3
        %2820 = vst [vmem:[%s2819] ss:$4 sm:$0xff] %v2621
        %s2821 = scalar_lea.vmem [#allocation1], 32
        %2822 = vst [vmem:[%s2821] ss:$4 sm:$0xff] %v2622
        %s2823 = scalar_lea.vmem [#allocation1], 33
        %2824 = vst [vmem:[%s2823] ss:$4 sm:$0xff] %v2623
        %s2825 = scalar_lea.vmem [#allocation1], 34
        %2826 = vst [vmem:[%s2825] ss:$4 sm:$0xff] %v2624
        %v2827 = vld.sshfl [vmem:[#allocation1] sm:$0xff pattern:$0x73625140]
        %v2828 = vld.sshfl [vmem:[#allocation1 + $0x20] sm:$0xff pattern:$0x73625140]
        %2829 = vst [vmem:[#allocation1] ss:$4 sm:$0xff] %v2625
        %2830 = vst [vmem:[%s2815] ss:$4 sm:$0xff] %v2626
        %2831 = vst [vmem:[%s2817] ss:$4 sm:$0xff] %v2627
        %2832 = vst [vmem:[%s2819] ss:$4 sm:$0xff] %v2628
        %2833 = vst [vmem:[%s2821] ss:$4 sm:$0xff] %v2629
        %2834 = vst [vmem:[%s2823] ss:$4 sm:$0xff] %v2630
        %2835 = vst [vmem:[%s2825] ss:$4 sm:$0xff] %v2631
        %v2836 = vld.sshfl [vmem:[#allocation1] sm:$0xff pattern:$0x73625140]
        %v2837 = vld.sshfl [vmem:[#allocation1 + $0x20] sm:$0xff pattern:$0x73625140]
        %2838 = vst [vmem:[#allocation1] ss:$4 sm:$0xff] %v2632
        %2839 = vst [vmem:[%s2815] ss:$4 sm:$0xff] %v2633
        %2840 = vst [vmem:[%s2817] ss:$4 sm:$0xff] %v2634
        %2841 = vst [vmem:[%s2819] ss:$4 sm:$0xff] %v2635
        %2842 = vst [vmem:[%s2821] ss:$4 sm:$0xff] %v2636
        %2843 = vst [vmem:[%s2823] ss:$4 sm:$0xff] %v2637
        %2844 = vst [vmem:[%s2825] ss:$4 sm:$0xff] %v2638
        %v2845 = vld.sshfl [vmem:[#allocation1] sm:$0xff pattern:$0x73625140]
        %v2846 = vld.sshfl [vmem:[#allocation1 + $0x20] sm:$0xff pattern:$0x73625140]
        %2847 = vst [vmem:[#allocation1] ss:$4 sm:$0xff] %v2639
        %2848 = vst [vmem:[%s2815] ss:$4 sm:$0xff] %v2640
        %2849 = vst [vmem:[%s2817] ss:$4 sm:$0xff] %v2641
        %2850 = vst [vmem:[%s2819] ss:$4 sm:$0xff] %v2642
        %2851 = vst [vmem:[%s2821] ss:$4 sm:$0xff] %v2643
        %2852 = vst [vmem:[%s2823] ss:$4 sm:$0xff] %v2644
        %2853 = vst [vmem:[%s2825] ss:$4 sm:$0xff] %v2645
        %v2854 = vld.sshfl [vmem:[#allocation1] sm:$0xff pattern:$0x73625140]
        %v2855 = vld.sshfl [vmem:[#allocation1 + $0x20] sm:$0xff pattern:$0x73625140]
        %2856 = vst [vmem:[#allocation1] ss:$4 sm:$0xff] %v2646
        %2857 = vst [vmem:[%s2815] ss:$4 sm:$0xff] %v2647
        %2858 = vst [vmem:[%s2817] ss:$4 sm:$0xff] %v2648
        %2859 = vst [vmem:[%s2819] ss:$4 sm:$0xff] %v2649
        %2860 = vst [vmem:[%s2821] ss:$4 sm:$0xff] %v2650
        %2861 = vst [vmem:[%s2823] ss:$4 sm:$0xff] %v2651
        %2862 = vst [vmem:[%s2825] ss:$4 sm:$0xff] %v2652
        %v2863 = vld.sshfl [vmem:[#allocation1] sm:$0xff pattern:$0x73625140]
        %v2864 = vld.sshfl [vmem:[#allocation1 + $0x20] sm:$0xff pattern:$0x73625140]
        %2865 = vst [vmem:[#allocation1] ss:$4 sm:$0xff] %v2653
        %2866 = vst [vmem:[%s2815] ss:$4 sm:$0xff] %v2654
        %2867 = vst [vmem:[%s2817] ss:$4 sm:$0xff] %v2655
        %2868 = vst [vmem:[%s2819] ss:$4 sm:$0xff] %v2656
        %2869 = vst [vmem:[%s2821] ss:$4 sm:$0xff] %v2657
        %2870 = vst [vmem:[%s2823] ss:$4 sm:$0xff] %v2658
        %2871 = vst [vmem:[%s2825] ss:$4 sm:$0xff] %v2659
        %v2872 = vld.sshfl [vmem:[#allocation1] sm:$0xff pattern:$0x73625140]
        %v2873 = vld.sshfl [vmem:[#allocation1 + $0x20] sm:$0xff pattern:$0x73625140]
        %2874 = vst [vmem:[#allocation1] ss:$4 sm:$0xff] %v2660
        %2875 = vst [vmem:[%s2815] ss:$4 sm:$0xff] %v2661
        %2876 = vst [vmem:[%s2817] ss:$4 sm:$0xff] %v2662
        %2877 = vst [vmem:[%s2819] ss:$4 sm:$0xff] %v2663
        %2878 = vst [vmem:[%s2821] ss:$4 sm:$0xff] %v2664
        %2879 = vst [vmem:[%s2823] ss:$4 sm:$0xff] %v2665
        %2880 = vst [vmem:[%s2825] ss:$4 sm:$0xff] %v2666
        %v2881 = vld.sshfl [vmem:[#allocation1] sm:$0xff pattern:$0x73625140]
        %v2882 = vld.sshfl [vmem:[#allocation1 + $0x20] sm:$0xff pattern:$0x73625140]
        %2883 = vst [vmem:[#allocation1] ss:$4 sm:$0xff] %v2667
        %2884 = vst [vmem:[%s2815] ss:$4 sm:$0xff] %v2668
        %2885 = vst [vmem:[%s2817] ss:$4 sm:$0xff] %v2669
        %2886 = vst [vmem:[%s2819] ss:$4 sm:$0xff] %v2670
        %2887 = vst [vmem:[%s2821] ss:$4 sm:$0xff] %v2671
        %2888 = vst [vmem:[%s2823] ss:$4 sm:$0xff] %v2672
        %2889 = vst [vmem:[%s2825] ss:$4 sm:$0xff] %v2673
        %v2890 = vld.sshfl [vmem:[#allocation1] sm:$0xff pattern:$0x73625140]
        %v2891 = vld.sshfl [vmem:[#allocation1 + $0x20] sm:$0xff pattern:$0x73625140]
        %2892 = vst [vmem:[#allocation1] ss:$4 sm:$0xff] %v2674
        %2893 = vst [vmem:[%s2815] ss:$4 sm:$0xff] %v2675
        %2894 = vst [vmem:[%s2817] ss:$4 sm:$0xff] %v2676
        %2895 = vst [vmem:[%s2819] ss:$4 sm:$0xff] %v2677
        %2896 = vst [vmem:[%s2821] ss:$4 sm:$0xff] %v2678
        %2897 = vst [vmem:[%s2823] ss:$4 sm:$0xff] %v2679
        %2898 = vst [vmem:[%s2825] ss:$4 sm:$0xff] %v2680
        %v2899 = vld.sshfl [vmem:[#allocation1] sm:$0xff pattern:$0x73625140]
        %v2900 = vld.sshfl [vmem:[#allocation1 + $0x20] sm:$0xff pattern:$0x73625140]
        %2901 = vst [vmem:[#allocation1] ss:$4 sm:$0xff] %v2681
        %2902 = vst [vmem:[%s2815] ss:$4 sm:$0xff] %v2682
        %2903 = vst [vmem:[%s2817] ss:$4 sm:$0xff] %v2683
        %2904 = vst [vmem:[%s2819] ss:$4 sm:$0xff] %v2684
        %2905 = vst [vmem:[%s2821] ss:$4 sm:$0xff] %v2685
        %2906 = vst [vmem:[%s2823] ss:$4 sm:$0xff] %v2686
        %2907 = vst [vmem:[%s2825] ss:$4 sm:$0xff] %v2687
        %v2908 = vld.sshfl [vmem:[#allocation1] sm:$0xff pattern:$0x73625140]
        %v2909 = vld.sshfl [vmem:[#allocation1 + $0x20] sm:$0xff pattern:$0x73625140]
        %2910 = vst [vmem:[#allocation1] ss:$4 sm:$0xff] %v2688
        %2911 = vst [vmem:[%s2815] ss:$4 sm:$0xff] %v2689
        %2912 = vst [vmem:[%s2817] ss:$4 sm:$0xff] %v2690
        %2913 = vst [vmem:[%s2819] ss:$4 sm:$0xff] %v2691
        %2914 = vst [vmem:[%s2821] ss:$4 sm:$0xff] %v2692
        %2915 = vst [vmem:[%s2823] ss:$4 sm:$0xff] %v2693
        %2916 = vst [vmem:[%s2825] ss:$4 sm:$0xff] %v2694
        %v2917 = vld.sshfl [vmem:[#allocation1] sm:$0xff pattern:$0x73625140]
        %v2918 = vld.sshfl [vmem:[#allocation1 + $0x20] sm:$0xff pattern:$0x73625140]
        %2919 = vst [vmem:[#allocation1] ss:$4 sm:$0xff] %v2695
        %2920 = vst [vmem:[%s2815] ss:$4 sm:$0xff] %v2696
        %2921 = vst [vmem:[%s2817] ss:$4 sm:$0xff] %v2697
        %2922 = vst [vmem:[%s2819] ss:$4 sm:$0xff] %v2698
        %2923 = vst [vmem:[%s2821] ss:$4 sm:$0xff] %v2699
        %2924 = vst [vmem:[%s2823] ss:$4 sm:$0xff] %v2700
        %2925 = vst [vmem:[%s2825] ss:$4 sm:$0xff] %v2701
        %v2926 = vld.sshfl [vmem:[#allocation1] sm:$0xff pattern:$0x73625140]
        %v2927 = vld.sshfl [vmem:[#allocation1 + $0x20] sm:$0xff pattern:$0x73625140]
        %2928 = vst [vmem:[#allocation1] ss:$4 sm:$0xff] %v2702
        %2929 = vst [vmem:[%s2815] ss:$4 sm:$0xff] %v2703
        %2930 = vst [vmem:[%s2817] ss:$4 sm:$0xff] %v2704
        %2931 = vst [vmem:[%s2819] ss:$4 sm:$0xff] %v2705
        %2932 = vst [vmem:[%s2821] ss:$4 sm:$0xff] %v2706
        %2933 = vst [vmem:[%s2823] ss:$4 sm:$0xff] %v2707
        %2934 = vst [vmem:[%s2825] ss:$4 sm:$0xff] %v2708
        %v2935 = vld.sshfl [vmem:[#allocation1] sm:$0xff pattern:$0x73625140]
        %v2936 = vld.sshfl [vmem:[#allocation1 + $0x20] sm:$0xff pattern:$0x73625140]
        %2937 = vst [vmem:[#allocation1] ss:$4 sm:$0xff] %v2709
        %2938 = vst [vmem:[%s2815] ss:$4 sm:$0xff] %v2710
        %2939 = vst [vmem:[%s2817] ss:$4 sm:$0xff] %v2711
        %2940 = vst [vmem:[%s2819] ss:$4 sm:$0xff] %v2712
        %2941 = vst [vmem:[%s2821] ss:$4 sm:$0xff] %v2713
        %2942 = vst [vmem:[%s2823] ss:$4 sm:$0xff] %v2714
        %2943 = vst [vmem:[%s2825] ss:$4 sm:$0xff] %v2715
        %v2944 = vld.sshfl [vmem:[#allocation1] sm:$0xff pattern:$0x73625140]
        %v2945 = vld.sshfl [vmem:[#allocation1 + $0x20] sm:$0xff pattern:$0x73625140]
        %v2974 = vpack.c.bf16 %v2827, %v2827
        %v2975 = vpack.c.bf16 %v2828, %v2828
        %v2976 = vpack.c.bf16 %v2836, %v2836
        %v2977 = vpack.c.bf16 %v2837, %v2837
        %v2978 = vpack.c.bf16 %v2845, %v2845
        %v2979 = vpack.c.bf16 %v2846, %v2846
        %v2980 = vpack.c.bf16 %v2854, %v2854
        %v2981 = vpack.c.bf16 %v2855, %v2855
        %v2982 = vpack.c.bf16 %v2863, %v2863
        %v2983 = vpack.c.bf16 %v2864, %v2864
        %v2984 = vpack.c.bf16 %v2872, %v2872
        %v2985 = vpack.c.bf16 %v2873, %v2873
        %v2986 = vpack.c.bf16 %v2881, %v2881
        %v2987 = vpack.c.bf16 %v2882, %v2882
        %v2988 = vpack.c.bf16 %v2890, %v2890
        %v2989 = vpack.c.bf16 %v2891, %v2891
        %v2990 = vpack.c.bf16 %v2899, %v2899
        %v2991 = vpack.c.bf16 %v2900, %v2900
        %v2992 = vpack.c.bf16 %v2908, %v2908
        %v2993 = vpack.c.bf16 %v2909, %v2909
        %v2994 = vpack.c.bf16 %v2917, %v2917
        %v2995 = vpack.c.bf16 %v2918, %v2918
        %v2996 = vpack.c.bf16 %v2926, %v2926
        %v2997 = vpack.c.bf16 %v2927, %v2927
        %v2998 = vpack.c.bf16 %v2935, %v2935
        %v2999 = vpack.c.bf16 %v2936, %v2936
        %v3000 = vpack.c.bf16 %v2944, %v2944
        %v3001 = vpack.c.bf16 %v2945, %v2945
        %vm3002 = vcmask 60416
        %3003 = vst.msk [vmem:[%s208] sm:$0xf] %vm3002, %v2974
        %vm3004 = vcmask 59392
        %3005 = vst.msk [vmem:[%s208 + $0x4] sm:$0x7] %vm3004, %v2975
        %3006 = vst.msk [vmem:[%s208 + $0x8] sm:$0xf] %vm3002, %v2976
        %3007 = vst.msk [vmem:[%s208 + $0xc] sm:$0x7] %vm3004, %v2977
        %3008 = vst.msk [vmem:[%s208 + $0x10] sm:$0xf] %vm3002, %v2978
        %3009 = vst.msk [vmem:[%s208 + $0x14] sm:$0x7] %vm3004, %v2979
        %3010 = vst.msk [vmem:[%s208 + $0x18] sm:$0xf] %vm3002, %v2980
        %3011 = vst.msk [vmem:[%s208 + $0x1c] sm:$0x7] %vm3004, %v2981
        %3012 = vst.msk [vmem:[%s208 + $0x20] sm:$0xf] %vm3002, %v2982
        %3013 = vst.msk [vmem:[%s208 + $0x24] sm:$0x7] %vm3004, %v2983
        %3014 = vst.msk [vmem:[%s208 + $0x28] sm:$0xf] %vm3002, %v2984
        %3015 = vst.msk [vmem:[%s208 + $0x2c] sm:$0x7] %vm3004, %v2985
        %3016 = vst.msk [vmem:[%s208 + $0x30] sm:$0xf] %vm3002, %v2986
        %3017 = vst.msk [vmem:[%s208 + $0x34] sm:$0x7] %vm3004, %v2987
        %3018 = vst.msk [vmem:[%s208 + $0x38] sm:$0xf] %vm3002, %v2988
        %3019 = vst.msk [vmem:[%s208 + $0x3c] sm:$0x7] %vm3004, %v2989
        %3020 = vst.msk [vmem:[%s208 + $0x40] sm:$0xf] %vm3002, %v2990
        %3021 = vst.msk [vmem:[%s208 + $0x44] sm:$0x7] %vm3004, %v2991
        %3022 = vst.msk [vmem:[%s208 + $0x48] sm:$0xf] %vm3002, %v2992
        %3023 = vst.msk [vmem:[%s208 + $0x4c] sm:$0x7] %vm3004, %v2993
        %3024 = vst.msk [vmem:[%s208 + $0x50] sm:$0xf] %vm3002, %v2994
        %3025 = vst.msk [vmem:[%s208 + $0x54] sm:$0x7] %vm3004, %v2995
        %3026 = vst.msk [vmem:[%s208 + $0x58] sm:$0xf] %vm3002, %v2996
        %3027 = vst.msk [vmem:[%s208 + $0x5c] sm:$0x7] %vm3004, %v2997
        %3028 = vst.msk [vmem:[%s208 + $0x60] sm:$0xf] %vm3002, %v2998
        %3029 = vst.msk [vmem:[%s208 + $0x64] sm:$0x7] %vm3004, %v2999
        %3030 = vst.msk [vmem:[%s208 + $0x68] sm:$0xf] %vm3002, %v3000
        %3031 = vst.msk [vmem:[%s208 + $0x6c] sm:$0x7] %vm3004, %v3001
        %3032 = vst [vmem:[#allocation1] ss:$4 sm:$0xff] %v2618
        %s3033 = scalar_lea.vmem [#allocation1], 1
        %3034 = vst [vmem:[%s3033] ss:$4 sm:$0xff] %v2619
        %s3035 = scalar_lea.vmem [#allocation1], 2
        %3036 = vst [vmem:[%s3035] ss:$4 sm:$0xff] %v2620
        %s3037 = scalar_lea.vmem [#allocation1], 3
        %3038 = vst [vmem:[%s3037] ss:$4 sm:$0xff] %v2621
        %s3039 = scalar_lea.vmem [#allocation1], 32
        %3040 = vst [vmem:[%s3039] ss:$4 sm:$0xff] %v2622
        %s3041 = scalar_lea.vmem [#allocation1], 33
        %3042 = vst [vmem:[%s3041] ss:$4 sm:$0xff] %v2623
        %s3043 = scalar_lea.vmem [#allocation1], 34
        %3044 = vst [vmem:[%s3043] ss:$4 sm:$0xff] %v2624
        %v3045 = vld.sshfl [vmem:[#allocation1] sm:$0xff pattern:$0x73625140]
        %v3046 = vld.sshfl [vmem:[#allocation1 + $0x20] sm:$0xff pattern:$0x73625140]
        %3047 = vst [vmem:[#allocation1] ss:$4 sm:$0xff] %v2625
        %3048 = vst [vmem:[%s3033] ss:$4 sm:$0xff] %v2626
        %3049 = vst [vmem:[%s3035] ss:$4 sm:$0xff] %v2627
        %3050 = vst [vmem:[%s3037] ss:$4 sm:$0xff] %v2628
        %3051 = vst [vmem:[%s3039] ss:$4 sm:$0xff] %v2629
        %3052 = vst [vmem:[%s3041] ss:$4 sm:$0xff] %v2630
        %3053 = vst [vmem:[%s3043] ss:$4 sm:$0xff] %v2631
        %v3054 = vld.sshfl [vmem:[#allocation1] sm:$0xff pattern:$0x73625140]
        %v3055 = vld.sshfl [vmem:[#allocation1 + $0x20] sm:$0xff pattern:$0x73625140]
        %3056 = vst [vmem:[#allocation1] ss:$4 sm:$0xff] %v2632
        %3057 = vst [vmem:[%s3033] ss:$4 sm:$0xff] %v2633
        %3058 = vst [vmem:[%s3035] ss:$4 sm:$0xff] %v2634
        %3059 = vst [vmem:[%s3037] ss:$4 sm:$0xff] %v2635
        %3060 = vst [vmem:[%s3039] ss:$4 sm:$0xff] %v2636
        %3061 = vst [vmem:[%s3041] ss:$4 sm:$0xff] %v2637
        %3062 = vst [vmem:[%s3043] ss:$4 sm:$0xff] %v2638
        %v3063 = vld.sshfl [vmem:[#allocation1] sm:$0xff pattern:$0x73625140]
        %v3064 = vld.sshfl [vmem:[#allocation1 + $0x20] sm:$0xff pattern:$0x73625140]
        %3065 = vst [vmem:[#allocation1] ss:$4 sm:$0xff] %v2639
        %3066 = vst [vmem:[%s3033] ss:$4 sm:$0xff] %v2640
        %3067 = vst [vmem:[%s3035] ss:$4 sm:$0xff] %v2641
        %3068 = vst [vmem:[%s3037] ss:$4 sm:$0xff] %v2642
        %3069 = vst [vmem:[%s3039] ss:$4 sm:$0xff] %v2643
        %3070 = vst [vmem:[%s3041] ss:$4 sm:$0xff] %v2644
        %3071 = vst [vmem:[%s3043] ss:$4 sm:$0xff] %v2645
        %v3072 = vld.sshfl [vmem:[#allocation1] sm:$0xff pattern:$0x73625140]
        %v3073 = vld.sshfl [vmem:[#allocation1 + $0x20] sm:$0xff pattern:$0x73625140]
        %3074 = vst [vmem:[#allocation1] ss:$4 sm:$0xff] %v2646
        %3075 = vst [vmem:[%s3033] ss:$4 sm:$0xff] %v2647
        %3076 = vst [vmem:[%s3035] ss:$4 sm:$0xff] %v2648
        %3077 = vst [vmem:[%s3037] ss:$4 sm:$0xff] %v2649
        %3078 = vst [vmem:[%s3039] ss:$4 sm:$0xff] %v2650
        %3079 = vst [vmem:[%s3041] ss:$4 sm:$0xff] %v2651
        %3080 = vst [vmem:[%s3043] ss:$4 sm:$0xff] %v2652
        %v3081 = vld.sshfl [vmem:[#allocation1] sm:$0xff pattern:$0x73625140]
        %v3082 = vld.sshfl [vmem:[#allocation1 + $0x20] sm:$0xff pattern:$0x73625140]
        %3083 = vst [vmem:[#allocation1] ss:$4 sm:$0xff] %v2653
        %3084 = vst [vmem:[%s3033] ss:$4 sm:$0xff] %v2654
        %3085 = vst [vmem:[%s3035] ss:$4 sm:$0xff] %v2655
        %3086 = vst [vmem:[%s3037] ss:$4 sm:$0xff] %v2656
        %3087 = vst [vmem:[%s3039] ss:$4 sm:$0xff] %v2657
        %3088 = vst [vmem:[%s3041] ss:$4 sm:$0xff] %v2658
        %3089 = vst [vmem:[%s3043] ss:$4 sm:$0xff] %v2659
        %v3090 = vld.sshfl [vmem:[#allocation1] sm:$0xff pattern:$0x73625140]
        %v3091 = vld.sshfl [vmem:[#allocation1 + $0x20] sm:$0xff pattern:$0x73625140]
        %3092 = vst [vmem:[#allocation1] ss:$4 sm:$0xff] %v2660
        %3093 = vst [vmem:[%s3033] ss:$4 sm:$0xff] %v2661
        %3094 = vst [vmem:[%s3035] ss:$4 sm:$0xff] %v2662
        %3095 = vst [vmem:[%s3037] ss:$4 sm:$0xff] %v2663
        %3096 = vst [vmem:[%s3039] ss:$4 sm:$0xff] %v2664
        %3097 = vst [vmem:[%s3041] ss:$4 sm:$0xff] %v2665
        %3098 = vst [vmem:[%s3043] ss:$4 sm:$0xff] %v2666
        %v3099 = vld.sshfl [vmem:[#allocation1] sm:$0xff pattern:$0x73625140]
        %v3100 = vld.sshfl [vmem:[#allocation1 + $0x20] sm:$0xff pattern:$0x73625140]
        %3101 = vst [vmem:[#allocation1] ss:$4 sm:$0xff] %v2667
        %3102 = vst [vmem:[%s3033] ss:$4 sm:$0xff] %v2668
        %3103 = vst [vmem:[%s3035] ss:$4 sm:$0xff] %v2669
        %3104 = vst [vmem:[%s3037] ss:$4 sm:$0xff] %v2670
        %3105 = vst [vmem:[%s3039] ss:$4 sm:$0xff] %v2671
        %3106 = vst [vmem:[%s3041] ss:$4 sm:$0xff] %v2672
        %3107 = vst [vmem:[%s3043] ss:$4 sm:$0xff] %v2673
        %v3108 = vld.sshfl [vmem:[#allocation1] sm:$0xff pattern:$0x73625140]
        %v3109 = vld.sshfl [vmem:[#allocation1 + $0x20] sm:$0xff pattern:$0x73625140]
        %3110 = vst [vmem:[#allocation1] ss:$4 sm:$0xff] %v2674
        %3111 = vst [vmem:[%s3033] ss:$4 sm:$0xff] %v2675
        %3112 = vst [vmem:[%s3035] ss:$4 sm:$0xff] %v2676
        %3113 = vst [vmem:[%s3037] ss:$4 sm:$0xff] %v2677
        %3114 = vst [vmem:[%s3039] ss:$4 sm:$0xff] %v2678
        %3115 = vst [vmem:[%s3041] ss:$4 sm:$0xff] %v2679
        %3116 = vst [vmem:[%s3043] ss:$4 sm:$0xff] %v2680
        %v3117 = vld.sshfl [vmem:[#allocation1] sm:$0xff pattern:$0x73625140]
        %v3118 = vld.sshfl [vmem:[#allocation1 + $0x20] sm:$0xff pattern:$0x73625140]
        %3119 = vst [vmem:[#allocation1] ss:$4 sm:$0xff] %v2681
        %3120 = vst [vmem:[%s3033] ss:$4 sm:$0xff] %v2682
        %3121 = vst [vmem:[%s3035] ss:$4 sm:$0xff] %v2683
        %3122 = vst [vmem:[%s3037] ss:$4 sm:$0xff] %v2684
        %3123 = vst [vmem:[%s3039] ss:$4 sm:$0xff] %v2685
        %3124 = vst [vmem:[%s3041] ss:$4 sm:$0xff] %v2686
        %3125 = vst [vmem:[%s3043] ss:$4 sm:$0xff] %v2687
        %v3126 = vld.sshfl [vmem:[#allocation1] sm:$0xff pattern:$0x73625140]
        %v3127 = vld.sshfl [vmem:[#allocation1 + $0x20] sm:$0xff pattern:$0x73625140]
        %3128 = vst [vmem:[#allocation1] ss:$4 sm:$0xff] %v2688
        %3129 = vst [vmem:[%s3033] ss:$4 sm:$0xff] %v2689
        %3130 = vst [vmem:[%s3035] ss:$4 sm:$0xff] %v2690
        %3131 = vst [vmem:[%s3037] ss:$4 sm:$0xff] %v2691
        %3132 = vst [vmem:[%s3039] ss:$4 sm:$0xff] %v2692
        %3133 = vst [vmem:[%s3041] ss:$4 sm:$0xff] %v2693
        %3134 = vst [vmem:[%s3043] ss:$4 sm:$0xff] %v2694
        %v3135 = vld.sshfl [vmem:[#allocation1] sm:$0xff pattern:$0x73625140]
        %v3136 = vld.sshfl [vmem:[#allocation1 + $0x20] sm:$0xff pattern:$0x73625140]
        %3137 = vst [vmem:[#allocation1] ss:$4 sm:$0xff] %v2695
        %3138 = vst [vmem:[%s3033] ss:$4 sm:$0xff] %v2696
        %3139 = vst [vmem:[%s3035] ss:$4 sm:$0xff] %v2697
        %3140 = vst [vmem:[%s3037] ss:$4 sm:$0xff] %v2698
        %3141 = vst [vmem:[%s3039] ss:$4 sm:$0xff] %v2699
        %3142 = vst [vmem:[%s3041] ss:$4 sm:$0xff] %v2700
        %3143 = vst [vmem:[%s3043] ss:$4 sm:$0xff] %v2701
        %v3144 = vld.sshfl [vmem:[#allocation1] sm:$0xff pattern:$0x73625140]
        %v3145 = vld.sshfl [vmem:[#allocation1 + $0x20] sm:$0xff pattern:$0x73625140]
        %3146 = vst [vmem:[#allocation1] ss:$4 sm:$0xff] %v2702
        %3147 = vst [vmem:[%s3033] ss:$4 sm:$0xff] %v2703
        %3148 = vst [vmem:[%s3035] ss:$4 sm:$0xff] %v2704
        %3149 = vst [vmem:[%s3037] ss:$4 sm:$0xff] %v2705
        %3150 = vst [vmem:[%s3039] ss:$4 sm:$0xff] %v2706
        %3151 = vst [vmem:[%s3041] ss:$4 sm:$0xff] %v2707
        %3152 = vst [vmem:[%s3043] ss:$4 sm:$0xff] %v2708
        %v3153 = vld.sshfl [vmem:[#allocation1] sm:$0xff pattern:$0x73625140]
        %v3154 = vld.sshfl [vmem:[#allocation1 + $0x20] sm:$0xff pattern:$0x73625140]
        %3155 = vst [vmem:[#allocation1] ss:$4 sm:$0xff] %v2709
        %3156 = vst [vmem:[%s3033] ss:$4 sm:$0xff] %v2710
        %3157 = vst [vmem:[%s3035] ss:$4 sm:$0xff] %v2711
        %3158 = vst [vmem:[%s3037] ss:$4 sm:$0xff] %v2712
        %3159 = vst [vmem:[%s3039] ss:$4 sm:$0xff] %v2713
        %3160 = vst [vmem:[%s3041] ss:$4 sm:$0xff] %v2714
        %3161 = vst [vmem:[%s3043] ss:$4 sm:$0xff] %v2715
        %v3162 = vld.sshfl [vmem:[#allocation1] sm:$0xff pattern:$0x73625140]
        %v3163 = vld.sshfl [vmem:[#allocation1 + $0x20] sm:$0xff pattern:$0x73625140]
        %v3192 = vsel %vm1389, %v3045, 0.0
        %vm3193 = vcmask 62464
        %v3194 = vsel %vm3193, %v3046, 0.0
        %v3195 = vadd.f32 %v3192, %v3194
        %v3196 = vsel %vm1389, %v3054, 0.0
        %v3197 = vadd.f32 %v3195, %v3196
        %v3198 = vsel %vm3193, %v3055, 0.0
        %v3199 = vadd.f32 %v3197, %v3198
        %v3200 = vsel %vm1389, %v3063, 0.0
        %v3201 = vadd.f32 %v3199, %v3200
        %v3202 = vsel %vm3193, %v3064, 0.0
        %v3203 = vadd.f32 %v3201, %v3202
        %v3204 = vsel %vm1389, %v3072, 0.0
        %v3205 = vadd.f32 %v3203, %v3204
        %v3206 = vsel %vm3193, %v3073, 0.0
        %v3207 = vadd.f32 %v3205, %v3206
        %v3208 = vsel %vm1389, %v3081, 0.0
        %v3209 = vadd.f32 %v3207, %v3208
        %v3210 = vsel %vm3193, %v3082, 0.0
        %v3211 = vadd.f32 %v3209, %v3210
        %v3212 = vsel %vm1389, %v3090, 0.0
        %v3213 = vadd.f32 %v3211, %v3212
        %v3214 = vsel %vm3193, %v3091, 0.0
        %v3215 = vadd.f32 %v3213, %v3214
        %v3216 = vsel %vm1389, %v3099, 0.0
        %v3217 = vadd.f32 %v3215, %v3216
        %v3218 = vsel %vm3193, %v3100, 0.0
        %v3219 = vadd.f32 %v3217, %v3218
        %v3220 = vsel %vm1389, %v3108, 0.0
        %v3221 = vadd.f32 %v3219, %v3220
        %v3222 = vsel %vm3193, %v3109, 0.0
        %v3223 = vadd.f32 %v3221, %v3222
        %v3224 = vsel %vm1389, %v3117, 0.0
        %v3225 = vadd.f32 %v3223, %v3224
        %v3226 = vsel %vm3193, %v3118, 0.0
        %v3227 = vadd.f32 %v3225, %v3226
        %v3228 = vsel %vm1389, %v3126, 0.0
        %v3229 = vadd.f32 %v3227, %v3228
        %v3230 = vsel %vm3193, %v3127, 0.0
        %v3231 = vadd.f32 %v3229, %v3230
        %v3232 = vsel %vm1389, %v3135, 0.0
        %v3233 = vadd.f32 %v3231, %v3232
        %v3234 = vsel %vm3193, %v3136, 0.0
        %v3235 = vadd.f32 %v3233, %v3234
        %v3236 = vsel %vm1389, %v3144, 0.0
        %v3237 = vadd.f32 %v3235, %v3236
        %v3238 = vsel %vm3193, %v3145, 0.0
        %v3239 = vadd.f32 %v3237, %v3238
        %v3240 = vsel %vm1389, %v3153, 0.0
        %v3241 = vadd.f32 %v3239, %v3240
        %v3242 = vsel %vm3193, %v3154, 0.0
        %v3243 = vadd.f32 %v3241, %v3242
        %v3244 = vsel %vm1389, %v3162, 0.0
        %v3245 = vadd.f32 %v3243, %v3244
        %v3246 = vsel %vm3193, %v3163, 0.0
        %v3247 = vadd.f32 %v3245, %v3246
        %v3248 = vrot.slane %v3247, 4
        %v3249 = vadd.f32 %v3247, %v3248
        %v3250 = vrot.slane %v3249, 2
        %v3251 = vadd.f32 %v3249, %v3250
        %v3252 = vrot.slane %v3251, 1
        %v3253 = vadd.f32 %v3251, %v3252
        %vm3254 = vcmask 57344
        %3255 = vst.msk [vmem:[%s198] sm:$0x1] %vm3254, %v3253
        %v3256 = vmul.f32 %v2618, %v2618
        %v3257 = vmul.f32 %v2619, %v2619
        %v3258 = vmul.f32 %v2620, %v2620
        %v3259 = vmul.f32 %v2621, %v2621
        %v3260 = vmul.f32 %v2622, %v2622
        %v3261 = vmul.f32 %v2623, %v2623
        %v3262 = vmul.f32 %v2624, %v2624
        %v3263 = vmul.f32 %v2625, %v2625
        %v3264 = vmul.f32 %v2626, %v2626
        %v3265 = vmul.f32 %v2627, %v2627
        %v3266 = vmul.f32 %v2628, %v2628
        %v3267 = vmul.f32 %v2629, %v2629
        %v3268 = vmul.f32 %v2630, %v2630
        %v3269 = vmul.f32 %v2631, %v2631
        %v3270 = vmul.f32 %v2632, %v2632
        %v3271 = vmul.f32 %v2633, %v2633
        %v3272 = vmul.f32 %v2634, %v2634
        %v3273 = vmul.f32 %v2635, %v2635
        %v3274 = vmul.f32 %v2636, %v2636
        %v3275 = vmul.f32 %v2637, %v2637
        %v3276 = vmul.f32 %v2638, %v2638
        %v3277 = vmul.f32 %v2639, %v2639
        %v3278 = vmul.f32 %v2640, %v2640
        %v3279 = vmul.f32 %v2641, %v2641
        %v3280 = vmul.f32 %v2642, %v2642
        %v3281 = vmul.f32 %v2643, %v2643
        %v3282 = vmul.f32 %v2644, %v2644
        %v3283 = vmul.f32 %v2645, %v2645
        %v3284 = vmul.f32 %v2646, %v2646
        %v3285 = vmul.f32 %v2647, %v2647
        %v3286 = vmul.f32 %v2648, %v2648
        %v3287 = vmul.f32 %v2649, %v2649
        %v3288 = vmul.f32 %v2650, %v2650
        %v3289 = vmul.f32 %v2651, %v2651
        %v3290 = vmul.f32 %v2652, %v2652
        %v3291 = vmul.f32 %v2653, %v2653
        %v3292 = vmul.f32 %v2654, %v2654
        %v3293 = vmul.f32 %v2655, %v2655
        %v3294 = vmul.f32 %v2656, %v2656
        %v3295 = vmul.f32 %v2657, %v2657
        %v3296 = vmul.f32 %v2658, %v2658
        %v3297 = vmul.f32 %v2659, %v2659
        %v3298 = vmul.f32 %v2660, %v2660
        %v3299 = vmul.f32 %v2661, %v2661
        %v3300 = vmul.f32 %v2662, %v2662
        %v3301 = vmul.f32 %v2663, %v2663
        %v3302 = vmul.f32 %v2664, %v2664
        %v3303 = vmul.f32 %v2665, %v2665
        %v3304 = vmul.f32 %v2666, %v2666
        %v3305 = vmul.f32 %v2667, %v2667
        %v3306 = vmul.f32 %v2668, %v2668
        %v3307 = vmul.f32 %v2669, %v2669
        %v3308 = vmul.f32 %v2670, %v2670
        %v3309 = vmul.f32 %v2671, %v2671
        %v3310 = vmul.f32 %v2672, %v2672
        %v3311 = vmul.f32 %v2673, %v2673
        %v3312 = vmul.f32 %v2674, %v2674
        %v3313 = vmul.f32 %v2675, %v2675
        %v3314 = vmul.f32 %v2676, %v2676
        %v3315 = vmul.f32 %v2677, %v2677
        %v3316 = vmul.f32 %v2678, %v2678
        %v3317 = vmul.f32 %v2679, %v2679
        %v3318 = vmul.f32 %v2680, %v2680
        %v3319 = vmul.f32 %v2681, %v2681
        %v3320 = vmul.f32 %v2682, %v2682
        %v3321 = vmul.f32 %v2683, %v2683
        %v3322 = vmul.f32 %v2684, %v2684
        %v3323 = vmul.f32 %v2685, %v2685
        %v3324 = vmul.f32 %v2686, %v2686
        %v3325 = vmul.f32 %v2687, %v2687
        %v3326 = vmul.f32 %v2688, %v2688
        %v3327 = vmul.f32 %v2689, %v2689
        %v3328 = vmul.f32 %v2690, %v2690
        %v3329 = vmul.f32 %v2691, %v2691
        %v3330 = vmul.f32 %v2692, %v2692
        %v3331 = vmul.f32 %v2693, %v2693
        %v3332 = vmul.f32 %v2694, %v2694
        %v3333 = vmul.f32 %v2695, %v2695
        %v3334 = vmul.f32 %v2696, %v2696
        %v3335 = vmul.f32 %v2697, %v2697
        %v3336 = vmul.f32 %v2698, %v2698
        %v3337 = vmul.f32 %v2699, %v2699
        %v3338 = vmul.f32 %v2700, %v2700
        %v3339 = vmul.f32 %v2701, %v2701
        %v3340 = vmul.f32 %v2702, %v2702
        %v3341 = vmul.f32 %v2703, %v2703
        %v3342 = vmul.f32 %v2704, %v2704
        %v3343 = vmul.f32 %v2705, %v2705
        %v3344 = vmul.f32 %v2706, %v2706
        %v3345 = vmul.f32 %v2707, %v2707
        %v3346 = vmul.f32 %v2708, %v2708
        %v3347 = vmul.f32 %v2709, %v2709
        %v3348 = vmul.f32 %v2710, %v2710
        %v3349 = vmul.f32 %v2711, %v2711
        %v3350 = vmul.f32 %v2712, %v2712
        %v3351 = vmul.f32 %v2713, %v2713
        %v3352 = vmul.f32 %v2714, %v2714
        %v3353 = vmul.f32 %v2715, %v2715
        %3452 = vst [vmem:[#allocation1] ss:$4 sm:$0xff] %v3256
        %s3453 = scalar_lea.vmem [#allocation1], 1
        %3454 = vst [vmem:[%s3453] ss:$4 sm:$0xff] %v3257
        %s3455 = scalar_lea.vmem [#allocation1], 2
        %3456 = vst [vmem:[%s3455] ss:$4 sm:$0xff] %v3258
        %s3457 = scalar_lea.vmem [#allocation1], 3
        %3458 = vst [vmem:[%s3457] ss:$4 sm:$0xff] %v3259
        %s3459 = scalar_lea.vmem [#allocation1], 32
        %3460 = vst [vmem:[%s3459] ss:$4 sm:$0xff] %v3260
        %s3461 = scalar_lea.vmem [#allocation1], 33
        %3462 = vst [vmem:[%s3461] ss:$4 sm:$0xff] %v3261
        %s3463 = scalar_lea.vmem [#allocation1], 34
        %3464 = vst [vmem:[%s3463] ss:$4 sm:$0xff] %v3262
        %v3465 = vld.sshfl [vmem:[#allocation1] sm:$0xff pattern:$0x73625140]
        %v3466 = vld.sshfl [vmem:[#allocation1 + $0x20] sm:$0xff pattern:$0x73625140]
        %3467 = vst [vmem:[#allocation1] ss:$4 sm:$0xff] %v3263
        %3468 = vst [vmem:[%s3453] ss:$4 sm:$0xff] %v3264
        %3469 = vst [vmem:[%s3455] ss:$4 sm:$0xff] %v3265
        %3470 = vst [vmem:[%s3457] ss:$4 sm:$0xff] %v3266
        %3471 = vst [vmem:[%s3459] ss:$4 sm:$0xff] %v3267
        %3472 = vst [vmem:[%s3461] ss:$4 sm:$0xff] %v3268
        %3473 = vst [vmem:[%s3463] ss:$4 sm:$0xff] %v3269
        %v3474 = vld.sshfl [vmem:[#allocation1] sm:$0xff pattern:$0x73625140]
        %v3475 = vld.sshfl [vmem:[#allocation1 + $0x20] sm:$0xff pattern:$0x73625140]
        %3476 = vst [vmem:[#allocation1] ss:$4 sm:$0xff] %v3270
        %3477 = vst [vmem:[%s3453] ss:$4 sm:$0xff] %v3271
        %3478 = vst [vmem:[%s3455] ss:$4 sm:$0xff] %v3272
        %3479 = vst [vmem:[%s3457] ss:$4 sm:$0xff] %v3273
        %3480 = vst [vmem:[%s3459] ss:$4 sm:$0xff] %v3274
        %3481 = vst [vmem:[%s3461] ss:$4 sm:$0xff] %v3275
        %3482 = vst [vmem:[%s3463] ss:$4 sm:$0xff] %v3276
        %v3483 = vld.sshfl [vmem:[#allocation1] sm:$0xff pattern:$0x73625140]
        %v3484 = vld.sshfl [vmem:[#allocation1 + $0x20] sm:$0xff pattern:$0x73625140]
        %3485 = vst [vmem:[#allocation1] ss:$4 sm:$0xff] %v3277
        %3486 = vst [vmem:[%s3453] ss:$4 sm:$0xff] %v3278
        %3487 = vst [vmem:[%s3455] ss:$4 sm:$0xff] %v3279
        %3488 = vst [vmem:[%s3457] ss:$4 sm:$0xff] %v3280
        %3489 = vst [vmem:[%s3459] ss:$4 sm:$0xff] %v3281
        %3490 = vst [vmem:[%s3461] ss:$4 sm:$0xff] %v3282
        %3491 = vst [vmem:[%s3463] ss:$4 sm:$0xff] %v3283
        %v3492 = vld.sshfl [vmem:[#allocation1] sm:$0xff pattern:$0x73625140]
        %v3493 = vld.sshfl [vmem:[#allocation1 + $0x20] sm:$0xff pattern:$0x73625140]
        %3494 = vst [vmem:[#allocation1] ss:$4 sm:$0xff] %v3284
        %3495 = vst [vmem:[%s3453] ss:$4 sm:$0xff] %v3285
        %3496 = vst [vmem:[%s3455] ss:$4 sm:$0xff] %v3286
        %3497 = vst [vmem:[%s3457] ss:$4 sm:$0xff] %v3287
        %3498 = vst [vmem:[%s3459] ss:$4 sm:$0xff] %v3288
        %3499 = vst [vmem:[%s3461] ss:$4 sm:$0xff] %v3289
        %3500 = vst [vmem:[%s3463] ss:$4 sm:$0xff] %v3290
        %v3501 = vld.sshfl [vmem:[#allocation1] sm:$0xff pattern:$0x73625140]
        %v3502 = vld.sshfl [vmem:[#allocation1 + $0x20] sm:$0xff pattern:$0x73625140]
        %3503 = vst [vmem:[#allocation1] ss:$4 sm:$0xff] %v3291
        %3504 = vst [vmem:[%s3453] ss:$4 sm:$0xff] %v3292
        %3505 = vst [vmem:[%s3455] ss:$4 sm:$0xff] %v3293
        %3506 = vst [vmem:[%s3457] ss:$4 sm:$0xff] %v3294
        %3507 = vst [vmem:[%s3459] ss:$4 sm:$0xff] %v3295
        %3508 = vst [vmem:[%s3461] ss:$4 sm:$0xff] %v3296
        %3509 = vst [vmem:[%s3463] ss:$4 sm:$0xff] %v3297
        %v3510 = vld.sshfl [vmem:[#allocation1] sm:$0xff pattern:$0x73625140]
        %v3511 = vld.sshfl [vmem:[#allocation1 + $0x20] sm:$0xff pattern:$0x73625140]
        %3512 = vst [vmem:[#allocation1] ss:$4 sm:$0xff] %v3298
        %3513 = vst [vmem:[%s3453] ss:$4 sm:$0xff] %v3299
        %3514 = vst [vmem:[%s3455] ss:$4 sm:$0xff] %v3300
        %3515 = vst [vmem:[%s3457] ss:$4 sm:$0xff] %v3301
        %3516 = vst [vmem:[%s3459] ss:$4 sm:$0xff] %v3302
        %3517 = vst [vmem:[%s3461] ss:$4 sm:$0xff] %v3303
        %3518 = vst [vmem:[%s3463] ss:$4 sm:$0xff] %v3304
        %v3519 = vld.sshfl [vmem:[#allocation1] sm:$0xff pattern:$0x73625140]
        %v3520 = vld.sshfl [vmem:[#allocation1 + $0x20] sm:$0xff pattern:$0x73625140]
        %3521 = vst [vmem:[#allocation1] ss:$4 sm:$0xff] %v3305
        %3522 = vst [vmem:[%s3453] ss:$4 sm:$0xff] %v3306
        %3523 = vst [vmem:[%s3455] ss:$4 sm:$0xff] %v3307
        %3524 = vst [vmem:[%s3457] ss:$4 sm:$0xff] %v3308
        %3525 = vst [vmem:[%s3459] ss:$4 sm:$0xff] %v3309
        %3526 = vst [vmem:[%s3461] ss:$4 sm:$0xff] %v3310
        %3527 = vst [vmem:[%s3463] ss:$4 sm:$0xff] %v3311
        %v3528 = vld.sshfl [vmem:[#allocation1] sm:$0xff pattern:$0x73625140]
        %v3529 = vld.sshfl [vmem:[#allocation1 + $0x20] sm:$0xff pattern:$0x73625140]
        %3530 = vst [vmem:[#allocation1] ss:$4 sm:$0xff] %v3312
        %3531 = vst [vmem:[%s3453] ss:$4 sm:$0xff] %v3313
        %3532 = vst [vmem:[%s3455] ss:$4 sm:$0xff] %v3314
        %3533 = vst [vmem:[%s3457] ss:$4 sm:$0xff] %v3315
        %3534 = vst [vmem:[%s3459] ss:$4 sm:$0xff] %v3316
        %3535 = vst [vmem:[%s3461] ss:$4 sm:$0xff] %v3317
        %3536 = vst [vmem:[%s3463] ss:$4 sm:$0xff] %v3318
        %v3537 = vld.sshfl [vmem:[#allocation1] sm:$0xff pattern:$0x73625140]
        %v3538 = vld.sshfl [vmem:[#allocation1 + $0x20] sm:$0xff pattern:$0x73625140]
        %3539 = vst [vmem:[#allocation1] ss:$4 sm:$0xff] %v3319
        %3540 = vst [vmem:[%s3453] ss:$4 sm:$0xff] %v3320
        %3541 = vst [vmem:[%s3455] ss:$4 sm:$0xff] %v3321
        %3542 = vst [vmem:[%s3457] ss:$4 sm:$0xff] %v3322
        %3543 = vst [vmem:[%s3459] ss:$4 sm:$0xff] %v3323
        %3544 = vst [vmem:[%s3461] ss:$4 sm:$0xff] %v3324
        %3545 = vst [vmem:[%s3463] ss:$4 sm:$0xff] %v3325
        %v3546 = vld.sshfl [vmem:[#allocation1] sm:$0xff pattern:$0x73625140]
        %v3547 = vld.sshfl [vmem:[#allocation1 + $0x20] sm:$0xff pattern:$0x73625140]
        %3548 = vst [vmem:[#allocation1] ss:$4 sm:$0xff] %v3326
        %3549 = vst [vmem:[%s3453] ss:$4 sm:$0xff] %v3327
        %3550 = vst [vmem:[%s3455] ss:$4 sm:$0xff] %v3328
        %3551 = vst [vmem:[%s3457] ss:$4 sm:$0xff] %v3329
        %3552 = vst [vmem:[%s3459] ss:$4 sm:$0xff] %v3330
        %3553 = vst [vmem:[%s3461] ss:$4 sm:$0xff] %v3331
        %3554 = vst [vmem:[%s3463] ss:$4 sm:$0xff] %v3332
        %v3555 = vld.sshfl [vmem:[#allocation1] sm:$0xff pattern:$0x73625140]
        %v3556 = vld.sshfl [vmem:[#allocation1 + $0x20] sm:$0xff pattern:$0x73625140]
        %3557 = vst [vmem:[#allocation1] ss:$4 sm:$0xff] %v3333
        %3558 = vst [vmem:[%s3453] ss:$4 sm:$0xff] %v3334
        %3559 = vst [vmem:[%s3455] ss:$4 sm:$0xff] %v3335
        %3560 = vst [vmem:[%s3457] ss:$4 sm:$0xff] %v3336
        %3561 = vst [vmem:[%s3459] ss:$4 sm:$0xff] %v3337
        %3562 = vst [vmem:[%s3461] ss:$4 sm:$0xff] %v3338
        %3563 = vst [vmem:[%s3463] ss:$4 sm:$0xff] %v3339
        %v3564 = vld.sshfl [vmem:[#allocation1] sm:$0xff pattern:$0x73625140]
        %v3565 = vld.sshfl [vmem:[#allocation1 + $0x20] sm:$0xff pattern:$0x73625140]
        %3566 = vst [vmem:[#allocation1] ss:$4 sm:$0xff] %v3340
        %3567 = vst [vmem:[%s3453] ss:$4 sm:$0xff] %v3341
        %3568 = vst [vmem:[%s3455] ss:$4 sm:$0xff] %v3342
        %3569 = vst [vmem:[%s3457] ss:$4 sm:$0xff] %v3343
        %3570 = vst [vmem:[%s3459] ss:$4 sm:$0xff] %v3344
        %3571 = vst [vmem:[%s3461] ss:$4 sm:$0xff] %v3345
        %3572 = vst [vmem:[%s3463] ss:$4 sm:$0xff] %v3346
        %v3573 = vld.sshfl [vmem:[#allocation1] sm:$0xff pattern:$0x73625140]
        %v3574 = vld.sshfl [vmem:[#allocation1 + $0x20] sm:$0xff pattern:$0x73625140]
        %3575 = vst [vmem:[#allocation1] ss:$4 sm:$0xff] %v3347
        %3576 = vst [vmem:[%s3453] ss:$4 sm:$0xff] %v3348
        %3577 = vst [vmem:[%s3455] ss:$4 sm:$0xff] %v3349
        %3578 = vst [vmem:[%s3457] ss:$4 sm:$0xff] %v3350
        %3579 = vst [vmem:[%s3459] ss:$4 sm:$0xff] %v3351
        %3580 = vst [vmem:[%s3461] ss:$4 sm:$0xff] %v3352
        %3581 = vst [vmem:[%s3463] ss:$4 sm:$0xff] %v3353
        %v3582 = vld.sshfl [vmem:[#allocation1] sm:$0xff pattern:$0x73625140]
        %v3583 = vld.sshfl [vmem:[#allocation1 + $0x20] sm:$0xff pattern:$0x73625140]
        %v3612 = vsel %vm1389, %v3465, 0.0
        %v3613 = vsel %vm3193, %v3466, 0.0
        %v3614 = vadd.f32 %v3612, %v3613
        %v3615 = vsel %vm1389, %v3474, 0.0
        %v3616 = vadd.f32 %v3614, %v3615
        %v3617 = vsel %vm3193, %v3475, 0.0
        %v3618 = vadd.f32 %v3616, %v3617
        %v3619 = vsel %vm1389, %v3483, 0.0
        %v3620 = vadd.f32 %v3618, %v3619
        %v3621 = vsel %vm3193, %v3484, 0.0
        %v3622 = vadd.f32 %v3620, %v3621
        %v3623 = vsel %vm1389, %v3492, 0.0
        %v3624 = vadd.f32 %v3622, %v3623
        %v3625 = vsel %vm3193, %v3493, 0.0
        %v3626 = vadd.f32 %v3624, %v3625
        %v3627 = vsel %vm1389, %v3501, 0.0
        %v3628 = vadd.f32 %v3626, %v3627
        %v3629 = vsel %vm3193, %v3502, 0.0
        %v3630 = vadd.f32 %v3628, %v3629
        %v3631 = vsel %vm1389, %v3510, 0.0
        %v3632 = vadd.f32 %v3630, %v3631
        %v3633 = vsel %vm3193, %v3511, 0.0
        %v3634 = vadd.f32 %v3632, %v3633
        %v3635 = vsel %vm1389, %v3519, 0.0
        %v3636 = vadd.f32 %v3634, %v3635
        %v3637 = vsel %vm3193, %v3520, 0.0
        %v3638 = vadd.f32 %v3636, %v3637
        %v3639 = vsel %vm1389, %v3528, 0.0
        %v3640 = vadd.f32 %v3638, %v3639
        %v3641 = vsel %vm3193, %v3529, 0.0
        %v3642 = vadd.f32 %v3640, %v3641
        %v3643 = vsel %vm1389, %v3537, 0.0
        %v3644 = vadd.f32 %v3642, %v3643
        %v3645 = vsel %vm3193, %v3538, 0.0
        %v3646 = vadd.f32 %v3644, %v3645
        %v3647 = vsel %vm1389, %v3546, 0.0
        %v3648 = vadd.f32 %v3646, %v3647
        %v3649 = vsel %vm3193, %v3547, 0.0
        %v3650 = vadd.f32 %v3648, %v3649
        %v3651 = vsel %vm1389, %v3555, 0.0
        %v3652 = vadd.f32 %v3650, %v3651
        %v3653 = vsel %vm3193, %v3556, 0.0
        %v3654 = vadd.f32 %v3652, %v3653
        %v3655 = vsel %vm1389, %v3564, 0.0
        %v3656 = vadd.f32 %v3654, %v3655
        %v3657 = vsel %vm3193, %v3565, 0.0
        %v3658 = vadd.f32 %v3656, %v3657
        %v3659 = vsel %vm1389, %v3573, 0.0
        %v3660 = vadd.f32 %v3658, %v3659
        %v3661 = vsel %vm3193, %v3574, 0.0
        %v3662 = vadd.f32 %v3660, %v3661
        %v3663 = vsel %vm1389, %v3582, 0.0
        %v3664 = vadd.f32 %v3662, %v3663
        %v3665 = vsel %vm3193, %v3583, 0.0
        %v3666 = vadd.f32 %v3664, %v3665
        %v3667 = vrot.slane %v3666, 4
        %v3668 = vadd.f32 %v3666, %v3667
        %v3669 = vrot.slane %v3668, 2
        %v3670 = vadd.f32 %v3668, %v3669
        %v3671 = vrot.slane %v3670, 1
        %v3672 = vadd.f32 %v3670, %v3671
        %3673 = vst.msk [vmem:[%s198 + $0x1] sm:$0x1] %vm3254, %v3672
        %p3674 = scmp.lt.s32.totalorder %s19, 1
        %s3675 = scalar_select %p3674, %s19, 1
        %s3676 = smul.addr %s3675, 28
        %s3677 = smul.addr %s3676, 4
        %s3678 = scalar_lea.vmem %s3, %s3677
        %s3679 = sand.u32 %s121, 1
        %s3680 = scalar_lea.sflag [#allocation3], %s3679
        %s3681 = sand.u32 %s121, 1
        %s3682 = smul.addr %s3681, 2
        %s3683 = scalar_lea.vmem [#allocation2], %s3682
        // Predicated region
        $region33: #{tpu_custom_call.1} parent=31 // pred_check
          %p3684 = pneg %p105
        $region34: #{tpu_custom_call.1} parent=31 // pred_check_branch
          %3686 = sbr.rel (%p3684) target = $region36
        $region35: #{tpu_custom_call.1} parent=31 // pred_region
          _
        $region36: #{tpu_custom_call.1} parent=31 // pred_fallthru
          _
        // Predicated region
        $region37: #{tpu_custom_call.1} parent=31 // pred_check
          %p3687 = pneg %p131
        $region38: #{tpu_custom_call.1} parent=31 // pred_check_branch
          %3689 = sbr.rel (%p3687) target = $region40
        $region39: #{tpu_custom_call.1} parent=31 // pred_region
          %3691 = vsyncadd %s3680, 0
          %s3692 = smul.addr %s19, 2
          %s3693 = scalar_lea.hbm %s4, %s3692
          %s3695 = sshll.u32 %s3683, 4
          %s3696 = int_to_ptr.vmem [resolvable:$true] %s3695
          %s3697 = sshll.u32 %s3693, 4
          %s3698 = int_to_ptr.hbm [resolvable:$true] %s3697
          %3700 = dma.vmem_to_hbm [thread:$0]  %s3696, 32, %s3698, %s3680
        $region40: #{tpu_custom_call.1} parent=31 // pred_fallthru
          _
      $region32: #{tpu_custom_call.1} parent=5 // pred_fallthru
        _
      %p3701 = scmp.le.s32.totalorder 2, %s14
      // Predicated region
      $region41: #{tpu_custom_call.1} parent=5 // pred_check
        %p3702 = pneg %p3701
      $region42: #{tpu_custom_call.1} parent=5 // pred_check_branch
        %3704 = sbr.rel (%p3702) target = $region44
      $region43: #{tpu_custom_call.1} parent=5 // pred_region
        %s3705 = ssub.s32 %s14, 2
        // Predicated region
        $region45: #{tpu_custom_call.1} parent=43 // pred_check
          %p3706 = pneg %p111
        $region46: #{tpu_custom_call.1} parent=43 // pred_check_branch
          %3708 = sbr.rel (%p3706) target = $region48
        $region47: #{tpu_custom_call.1} parent=43 // pred_region
          %p3709 = scmp.lt.s32.totalorder %s20, 1
          %s3710 = scalar_select %p3709, %s20, 1
          %s3711 = smul.addr %s3710, 28
          %s3712 = smul.addr %s3711, 4
          %s3713 = scalar_lea.vmem %s3, %s3712
        $region48: #{tpu_custom_call.1} parent=43 // pred_fallthru
          _
        // Predicated region
        $region49: #{tpu_custom_call.1} parent=43 // pred_check
          %p3714 = pneg %p137
        $region50: #{tpu_custom_call.1} parent=43 // pred_check_branch
          %3716 = sbr.rel (%p3714) target = $region52
        $region51: #{tpu_custom_call.1} parent=43 // pred_region
          %s3717 = sand.u32 %s122, 1
          %s3718 = scalar_lea.sflag [#allocation3], %s3717
          %s3719 = sand.u32 %s122, 1
          %s3720 = smul.addr %s3719, 2
          %s3721 = scalar_lea.vmem [#allocation2], %s3720
          %3723 = dma.done %s3718, 32
        $region52: #{tpu_custom_call.1} parent=43 // pred_fallthru
          _
      $region44: #{tpu_custom_call.1} parent=5 // pred_fallthru
        _
    $region6: #{tpu_custom_call.1} parent=1 // loop_footer
      %s18 = sadd.s32 1, %s14
    $region7: #{tpu_custom_call.1} parent=1 // loop_footer_branch
      %13 = sbr.rel target = $region3
    $region8: #{tpu_custom_call.1} parent=1 // loop_exit
      _
    %3724 = vsyncpa [#allocation3], 1
    %s3725 = scalar_lea.sflag [#allocation3], 1
    %3726 = vsyncpa %s3725, 1

</llo_original>
